<compile_context>
chip_gen: v7x
topology: tpu7x:2x2x1
jax: 0.10.0
libtpu: 0.0.40
codegen_flags: <defaults>
</compile_context>

<pallas_src>
import math
import numpy as np
import jax
import jax.numpy as jnp
from jax.experimental import pallas as pl
from jax.experimental.pallas import tpu as pltpu

D_MODEL = 32
NUM_HEADS = 2
D_HEAD = D_MODEL // NUM_HEADS
D_FF = 64
_LN_EPS = 1e-5
_N_PARAMS = 9  # packed arrays per encoder stack


# ----------------------------- in-kernel helpers ------------------------------

def _layer_norm(x, g, b):
    mu = jnp.mean(x, axis=-1, keepdims=True)
    var = jnp.mean(jnp.square(x - mu), axis=-1, keepdims=True)
    return (x - mu) * jax.lax.rsqrt(var + _LN_EPS) * g + b


def _softmax_lastdim(s):
    s = s - jnp.max(s, axis=-1, keepdims=True)
    e = jnp.exp(s)
    return e * pl.reciprocal(jnp.sum(e, axis=-1, keepdims=True), approx=True)


def _encoder_layer_flat(x3, wqkv, bqkv, wo, bo, w1, b1, w2, b2, ln):
    """(N, L, D) -> (N, L, D), L % 8 == 0: all row-wise ops run on one flattened MXU slab."""
    N, L, D = x3.shape
    R = N * L
    xr = x3.reshape(R, D)
    qkv = jnp.dot(xr, wqkv, preferred_element_type=jnp.float32) + bqkv      # (R, 3D), fused QKV
    attn = None
    for h in range(NUM_HEADS):
        lo, hi = h * D_HEAD, (h + 1) * D_HEAD
        q = qkv[:, lo:hi].reshape(N, L, D_HEAD)           # scale already folded into Wq / bq
        k = qkv[:, D + lo:D + hi].reshape(N, L, D_HEAD)
        v = qkv[:, 2 * D + lo:2 * D + hi].reshape(N, L, D_HEAD)
        s = jnp.einsum('nid,njd->nij', q, k, preferred_element_type=jnp.float32)
        probs = _softmax_lastdim(s)
        o = jnp.einsum('nij,njd->nid', probs, v, preferred_element_type=jnp.float32)
        c = jnp.dot(o.reshape(R, D_HEAD), wo[lo:hi, :],    # per-head Wo slab: no lane concat
                    preferred_element_type=jnp.float32)
        attn = c if attn is None else attn + c
    attn = attn + bo
    h1 = _layer_norm(xr + attn, ln[0:1, :], ln[1:2, :])
    f = jnp.maximum(jnp.dot(h1, w1, preferred_element_type=jnp.float32) + b1, 0.0)
    f = jnp.dot(f, w2, preferred_element_type=jnp.float32) + b2
    y = _layer_norm(h1 + f, ln[2:3, :], ln[3:4, :])
    return y.reshape(N, L, D)


def _encoder_layer_bcast(x3, wqkv, bqkv, wo, bo, w1, b1, w2, b2, ln):
    """(N, L, D) -> (N, L, D) keeping 3D layout (used when L is not sublane-aligned, e.g. L=4)."""
    N, L, D = x3.shape

    def bmm(a, w):
        wb = jnp.broadcast_to(w[None], (N,) + w.shape)
        return jnp.einsum('nld,nde->nle', a, wb, preferred_element_type=jnp.float32)

    qkv = bmm(x3, wqkv) + bqkv
    attn = None
    for h in range(NUM_HEADS):
        lo, hi = h * D_HEAD, (h + 1) * D_HEAD
        q = qkv[:, :, lo:hi]
        k = qkv[:, :, D + lo:D + hi]
        v = qkv[:, :, 2 * D + lo:2 * D + hi]
        s = jnp.einsum('nid,njd->nij', q, k, preferred_element_type=jnp.float32)
        probs = _softmax_lastdim(s)
        o = jnp.einsum('nij,njd->nid', probs, v, preferred_element_type=jnp.float32)
        c = bmm(o, wo[lo:hi, :])
        attn = c if attn is None else attn + c
    attn = attn + bo
    h1 = _layer_norm(x3 + attn, ln[0:1, :], ln[1:2, :])
    f = jnp.maximum(bmm(h1, w1) + b1, 0.0)
    f = bmm(f, w2) + b2
    return _layer_norm(h1 + f, ln[2:3, :], ln[3:4, :])


def _encoder_stack(x3, refs, n_layers):
    wqkv_r, bqkv_r, wo_r, bo_r, w1_r, b1_r, w2_r, b2_r, ln_r = refs
    layer_fn = _encoder_layer_flat if x3.shape[1] % 8 == 0 else _encoder_layer_bcast
    for li in range(n_layers):
        x3 = layer_fn(x3, wqkv_r[li], bqkv_r[li], wo_r[li], bo_r[li],
                      w1_r[li], b1_r[li], w2_r[li], b2_r[li], ln_r[li])
    return x3


def _build_tree_kernel(levels, n_rec, n_out, block_size, pool_size):
    """One fused kernel: for each level do shuffle -> rec stack -> unshuffle+pool, then out stack."""
    n_lvl = len(levels)

    def kernel(*refs):
        x_ref = refs[0]
        lvl_refs = refs[1:1 + 2 * n_lvl]
        rec_refs = refs[1 + 2 * n_lvl:1 + 2 * n_lvl + _N_PARAMS]
        out_refs = refs[1 + 2 * n_lvl + _N_PARAMS:1 + 2 * n_lvl + 2 * _N_PARAMS]
        o_ref = refs[-1]

        x = x_ref[...]                                   # (TB, S, D)
        TB, _, D = x.shape
        for l, (S_in, S_pad, nb) in enumerate(levels):
            pre = lvl_refs[2 * l][...]                   # (S_pad, S_in): zero-pad + block shuffle
            post = lvl_refs[2 * l + 1][...]              # (pool, S_pad): un-shuffle + avg pool
            pre_b = jnp.broadcast_to(pre[None], (TB, S_pad, S_in))
            xs = jnp.einsum('bps,bsd->bpd', pre_b, x, preferred_element_type=jnp.float32)
            # TODO(synk): the reshape below assumes block_size % 8 == 0 (tile-aligned rechunk).
            xb = xs.reshape(TB * nb, block_size, D)
            xb = _encoder_stack(xb, rec_refs, n_rec)
            xo = xb.reshape(TB, S_pad, D)
            post_b = jnp.broadcast_to(post[None], (TB, pool_size, S_pad))
            x = jnp.einsum('bps,bsd->bpd', post_b, xo, preferred_element_type=jnp.float32)
        x = _encoder_stack(x, out_refs, n_out)
        o_ref[...] = x

    return kernel


# ------------------------------ wrappers / prep --------------------------------

def _full_spec(shape):
    nd = len(shape)
    return pl.BlockSpec(tuple(shape), lambda i, _nd=nd: (0,) * _nd)


def _pick_batch_tile(B, cap=64):
    """Largest batch tile <= cap that divides B while keeping >=2 grid steps (2-TC chips)."""
    divs = [t for t in range(1, min(B, cap) + 1) if B % t == 0]
    multi = [t for t in divs if B // t >= 2]
    return max(multi) if multi else max(divs)


def _level_matrices(S_in, block, pool):
    """Constant matrices replicating torch pad/view/permute/view and adaptive_avg_pool1d."""
    S_pad = -(-S_in // block) * block
    nb = S_pad // block
    pre = np.zeros((S_pad, S_in), np.float32)        # row u of shuffled seqs <- source position
    for u in range(S_pad):
        bl, nbi = u // nb, u % nb
        src = nbi * block + bl
        if src < S_in:
            pre[u, src] = 1.0
    sig = np.zeros((S_pad, S_pad), np.float32)       # inverse view/permute/view of the reference
    for bl in range(block):
        for j in range(nb):
            sig[bl * nb + j, j * block + bl] = 1.0
    pm = np.zeros((pool, S_pad), np.float32)         # F.adaptive_avg_pool1d bins
    for i in range(pool):
        s0 = (i * S_pad) // pool
        e0 = -((-(i + 1) * S_pad) // pool)
        pm[i, s0:e0] = 1.0 / (e0 - s0)
    return jnp.asarray(pre), jnp.asarray(pm @ sig), S_pad, nb


def tree_transformer_forward(x, rec_params, out_params, block_size, pool_size):
    B, S, D = x.shape
    assert D == D_MODEL

    # Static recursion schedule (shapes are static at trace time).
    # TODO(synk): create_padded_tree / self.last_seq_tree is bookkeeping only (never affects
    # the returned tensor) and is not reproduced; the reference's undefined `self.d` is
    # interpreted as block_size, with a break guarding the pool_size >= block_size config
    # that would loop forever in the reference.
    levels, mats = [], []
    seq_len = S
    while seq_len >= block_size:
        pre, post, S_pad, nb = _level_matrices(seq_len, block_size, pool_size)
        levels.append((seq_len, S_pad, nb))
        mats += [pre, post]
        seq_len = pool_size
        if pool_size >= block_size:
            break
    L_final = seq_len

    order = ("wqkv", "bqkv", "wo", "bo", "w1", "b1", "w2", "b2", "ln")
    rec_arrs = [rec_params[k] for k in order]
    out_arrs = [out_params[k] for k in order]
    n_rec = rec_params["wqkv"].shape[0]
    n_out = out_params["wqkv"].shape[0]

    TB = _pick_batch_tile(B)
    kernel = _build_tree_kernel(levels, n_rec, n_out, block_size, pool_size)

    in_specs = [pl.BlockSpec((TB, S, D), lambda i: (i, 0, 0))]
    in_specs += [_full_spec(m.shape) for m in mats]
    in_specs += [_full_spec(a.shape) for a in rec_arrs]
    in_specs += [_full_spec(a.shape) for a in out_arrs]

    return pl.pallas_call(
        kernel,
        out_shape=jax.ShapeDtypeStruct((B, L_final, D), jnp.float32),
        grid=(B // TB,),
        in_specs=in_specs,
        out_specs=pl.BlockSpec((TB, L_final, D), lambda i: (i, 0, 0)),
        compiler_params=pltpu.CompilerParams(dimension_semantics=("parallel",)),
    )(x, *mats, *rec_arrs, *out_arrs)


def init_layer_params(key):
    ks = jax.random.split(key, 9)
    s = 0.02
    return dict(
        wqkvo=jax.random.normal(ks[0], (4, D_MODEL, D_MODEL), jnp.float32) * s,
        bqkvo=jax.random.normal(ks[1], (4, D_MODEL), jnp.float32) * s,
        w1=jax.random.normal(ks[2], (D_MODEL, D_FF), jnp.float32) * s,
        b1=jax.random.normal(ks[3], (1, D_FF), jnp.float32) * s,
        w2=jax.random.normal(ks[4], (D_FF, D_MODEL), jnp.float32) * s,
        b2=jax.random.normal(ks[5], (1, D_MODEL), jnp.float32) * s,
        ln=jnp.stack([1.0 + 0.1 * jax.random.normal(ks[6], (D_MODEL,)),
                      0.1 * jax.random.normal(ks[7], (D_MODEL,)),
                      1.0 + 0.1 * jax.random.normal(ks[8], (D_MODEL,)),
                      0.1 * jax.random.normal(ks[7], (D_MODEL,)) * 0.5],
                     axis=0).astype(jnp.float32),
    )


def prepare_stack_params(layer_params):
    """Pack per-layer params: fused (pre-scaled) QKV weight, per-head Wo, zero-padded FFN."""
    scale = 1.0 / math.sqrt(D_HEAD)
    dff_pad = -(-D_FF // 128) * 128            # zero-pad FFN width to a full lane tile
    packed = {k: [] for k in ("wqkv", "bqkv", "wo", "bo", "w1", "b1", "w2", "b2", "ln")}
    for p in layer_params:
        wq, wk, wv, wo = (p["wqkvo"][i] for i in range(4))
        bq, bk, bv, bo = (p["bqkvo"][i] for i in range(4))
        packed["wqkv"].append(jnp.concatenate([wq * scale, wk, wv], axis=1))
        packed["bqkv"].append(jnp.concatenate([bq * scale, bk, bv])[None, :])
        packed["wo"].append(wo)
        packed["bo"].append(bo[None, :])
        packed["w1"].append(jnp.pad(p["w1"], ((0, 0), (0, dff_pad - D_FF))))
        packed["b1"].append(jnp.pad(p["b1"].reshape(1, -1), ((0, 0), (0, dff_pad - D_FF))))
        packed["w2"].append(jnp.pad(p["w2"], ((0, dff_pad - D_FF), (0, 0))))
        packed["b2"].append(p["b2"].reshape(1, -1))
        packed["ln"].append(p["ln"])
    return {k: jnp.stack(v, axis=0) for k, v in packed.items()}


# --------------------------- plain-JAX reference (check only) ---------------------------

def _reference_forward(x, rec_raw, out_raw, block_size, pool_size):
    def ln(z, g, b):
        mu = z.mean(-1, keepdims=True)
        var = ((z - mu) ** 2).mean(-1, keepdims=True)
        return (z - mu) / jnp.sqrt(var + _LN_EPS) * g + b

    def layer(z, p):
        wq, wk, wv, wo = (p["wqkvo"][i] for i in range(4))
        bq, bk, bv, bo = (p["bqkvo"][i] for i in range(4))
        q, k, v = z @ wq + bq, z @ wk + bk, z @ wv + bv
        heads = []
        for h in range(NUM_HEADS):
            sl = slice(h * D_HEAD, (h + 1) * D_HEAD)
            s = jnp.einsum('nid,njd->nij', q[..., sl], k[..., sl]) / math.sqrt(D_HEAD)
            heads.append(jnp.einsum('nij,njd->nid', jax.nn.softmax(s, axis=-1), v[..., sl]))
        a = jnp.concatenate(heads, axis=-1) @ wo + bo
        h1 = ln(z + a, p["ln"][0], p["ln"][1])
        f = jax.nn.relu(h1 @ p["w1"] + p["b1"]) @ p["w2"] + p["b2"]
        return ln(h1 + f, p["ln"][2], p["ln"][3])

    def stack(z, ps):
        for p in ps:
            z = layer(z, p)
        return z

    def blocks(z):
        b, s, d = z.shape
        if s % block_size:
            z = jnp.pad(z, ((0, 0), (0, block_size - s % block_size), (0, 0)))
            s = z.shape[1]
        nb = s // block_size
        z = z.reshape(b, nb, block_size, d).transpose(0, 2, 1, 3).reshape(-1, block_size, d)
        z = stack(z, rec_raw)
        z = z.reshape(b, -1, block_size, d).transpose(0, 2, 1, 3).reshape(b, -1, d)
        return z

    def pool(z):
        b, s, d = z.shape
        pm = np.zeros((pool_size, s), np.float32)
        for i in range(pool_size):
            s0 = (i * s) // pool_size
            e0 = -((-(i + 1) * s) // pool_size)
            pm[i, s0:e0] = 1.0 / (e0 - s0)
        return jnp.einsum('ps,bsd->bpd', jnp.asarray(pm), z)

    seq = x.shape[1]
    while seq >= block_size:
        x = pool(blocks(x))
        seq = x.shape[1]
        if pool_size >= block_size:
            break
    return stack(x, out_raw)


if __name__ == "__main__":
    key = jax.random.PRNGKey(0)
    k_x, k_rec, k_out = jax.random.split(key, 3)

    B, S = 2, 16
    block_size, pool_size = 8, 4

    x = jax.random.normal(k_x, (B, S, D_MODEL), dtype=jnp.float32)
    rec_raw = [init_layer_params(k_rec)]      # recurrent_encoder: 1-layer EncoderStack
    out_raw = [init_layer_params(k_out)]      # output_encoder:    1-layer EncoderStack

    rec_params = prepare_stack_params(rec_raw)
    out_params = prepare_stack_params(out_raw)

    y = tree_transformer_forward(x, rec_params, out_params, block_size, pool_size)
    y = jax.block_until_ready(y)

    assert y.shape == (B, pool_size, D_MODEL), y.shape
    assert bool(jnp.all(jnp.isfinite(y)))

    y_ref = _reference_forward(x, rec_raw, out_raw, block_size, pool_size)
    assert float(jnp.max(jnp.abs(y - y_ref))) < 2e-2

    print("KERNEL_OK")
</pallas_src>

<mosaic_0001>
module attributes {stable_mosaic.version = 11 : i64} {
  func.func @kernel(%arg0: i32, %arg1: memref<1x16x32xf32, #tpu.memory_space<vmem>>, %arg2: memref<16x16xf32, #tpu.memory_space<vmem>>, %arg3: memref<4x16xf32, #tpu.memory_space<vmem>>, %arg4: memref<1x32x96xf32, #tpu.memory_space<vmem>>, %arg5: memref<1x1x96xf32, #tpu.memory_space<vmem>>, %arg6: memref<1x32x32xf32, #tpu.memory_space<vmem>>, %arg7: memref<1x1x32xf32, #tpu.memory_space<vmem>>, %arg8: memref<1x32x128xf32, #tpu.memory_space<vmem>>, %arg9: memref<1x1x128xf32, #tpu.memory_space<vmem>>, %arg10: memref<1x128x32xf32, #tpu.memory_space<vmem>>, %arg11: memref<1x1x32xf32, #tpu.memory_space<vmem>>, %arg12: memref<1x4x32xf32, #tpu.memory_space<vmem>>, %arg13: memref<1x32x96xf32, #tpu.memory_space<vmem>>, %arg14: memref<1x1x96xf32, #tpu.memory_space<vmem>>, %arg15: memref<1x32x32xf32, #tpu.memory_space<vmem>>, %arg16: memref<1x1x32xf32, #tpu.memory_space<vmem>>, %arg17: memref<1x32x128xf32, #tpu.memory_space<vmem>>, %arg18: memref<1x1x128xf32, #tpu.memory_space<vmem>>, %arg19: memref<1x128x32xf32, #tpu.memory_space<vmem>>, %arg20: memref<1x1x32xf32, #tpu.memory_space<vmem>>, %arg21: memref<1x4x32xf32, #tpu.memory_space<vmem>>, %arg22: memref<1x4x32xf32, #tpu.memory_space<vmem>>) attributes {dimension_semantics = [#tpu.dimension_semantics<parallel>], iteration_bounds = array<i64: 2>, scalar_prefetch = 0 : i64, scratch_operands = 0 : i64, tpu.core_type = #tpu.core_type<tc>, window_params = [{transform_indices = @transform_0, window_bounds = array<i64: 1, 16, 32>}, {pipeline_mode = #tpu.pipeline_mode<synchronous>, transform_indices = @transform_1, window_bounds = array<i64: 16, 16>}, {pipeline_mode = #tpu.pipeline_mode<synchronous>, transform_indices = @transform_2, window_bounds = array<i64: 4, 16>}, {pipeline_mode = #tpu.pipeline_mode<synchronous>, transform_indices = @transform_3, window_bounds = array<i64: 1, 32, 96>}, {pipeline_mode = #tpu.pipeline_mode<synchronous>, transform_indices = @transform_4, window_bounds = array<i64: 1, 1, 96>}, {pipeline_mode = #tpu.pipeline_mode<synchronous>, transform_indices = @transform_5, window_bounds = array<i64: 1, 32, 32>}, {pipeline_mode = #tpu.pipeline_mode<synchronous>, transform_indices = @transform_6, window_bounds = array<i64: 1, 1, 32>}, {pipeline_mode = #tpu.pipeline_mode<synchronous>, transform_indices = @transform_7, window_bounds = array<i64: 1, 32, 128>}, {pipeline_mode = #tpu.pipeline_mode<synchronous>, transform_indices = @transform_8, window_bounds = array<i64: 1, 1, 128>}, {pipeline_mode = #tpu.pipeline_mode<synchronous>, transform_indices = @transform_9, window_bounds = array<i64: 1, 128, 32>}, {pipeline_mode = #tpu.pipeline_mode<synchronous>, transform_indices = @transform_10, window_bounds = array<i64: 1, 1, 32>}, {pipeline_mode = #tpu.pipeline_mode<synchronous>, transform_indices = @transform_11, window_bounds = array<i64: 1, 4, 32>}, {pipeline_mode = #tpu.pipeline_mode<synchronous>, transform_indices = @transform_12, window_bounds = array<i64: 1, 32, 96>}, {pipeline_mode = #tpu.pipeline_mode<synchronous>, transform_indices = @transform_13, window_bounds = array<i64: 1, 1, 96>}, {pipeline_mode = #tpu.pipeline_mode<synchronous>, transform_indices = @transform_14, window_bounds = array<i64: 1, 32, 32>}, {pipeline_mode = #tpu.pipeline_mode<synchronous>, transform_indices = @transform_15, window_bounds = array<i64: 1, 1, 32>}, {pipeline_mode = #tpu.pipeline_mode<synchronous>, transform_indices = @transform_16, window_bounds = array<i64: 1, 32, 128>}, {pipeline_mode = #tpu.pipeline_mode<synchronous>, transform_indices = @transform_17, window_bounds = array<i64: 1, 1, 128>}, {pipeline_mode = #tpu.pipeline_mode<synchronous>, transform_indices = @transform_18, window_bounds = array<i64: 1, 128, 32>}, {pipeline_mode = #tpu.pipeline_mode<synchronous>, transform_indices = @transform_19, window_bounds = array<i64: 1, 1, 32>}, {pipeline_mode = #tpu.pipeline_mode<synchronous>, transform_indices = @transform_20, window_bounds = array<i64: 1, 4, 32>}, {transform_indices = @transform_21, window_bounds = array<i64: 1, 4, 32>}]} {
    %c0 = arith.constant 0 : index
    %c0_0 = arith.constant 0 : index
    %c0_1 = arith.constant 0 : index
    %0 = vector.load %arg1[%c0, %c0_0, %c0_1] : memref<1x16x32xf32, #tpu.memory_space<vmem>>, vector<1x16x32xf32>
    %c0_2 = arith.constant 0 : index
    %c0_3 = arith.constant 0 : index
    %1 = vector.load %arg2[%c0_2, %c0_3] : memref<16x16xf32, #tpu.memory_space<vmem>>, vector<16x16xf32>
    %c0_4 = arith.constant 0 : index
    %c0_5 = arith.constant 0 : index
    %2 = vector.load %arg3[%c0_4, %c0_5] : memref<4x16xf32, #tpu.memory_space<vmem>>, vector<4x16xf32>
    %3 = vector.shape_cast %1 : vector<16x16xf32> to vector<1x16x16xf32>
    "tpu.trace_start"() <{level = 10 : i32, message = "bps,bsd->bpd"}> : () -> ()
    %cst = arith.constant dense<0.000000e+00> : vector<1x16x32xf32>
    %4 = tpu.matmul %3, %0, %cst {dimension_numbers = #tpu.dot_dimension_numbers<[2], [1], [1], [2], [0, 0, 0, 1, 1, 2], [0], [0]>} : vector<1x16x16xf32>, vector<1x16x32xf32>, vector<1x16x32xf32> -> vector<1x16x32xf32>
    "tpu.trace_stop"() : () -> ()
    %5 = vector.shape_cast %4 : vector<1x16x32xf32> to vector<2x8x32xf32>
    %c0_6 = arith.constant 0 : index
    %c0_7 = arith.constant 0 : index
    %c0_8 = arith.constant 0 : index
    %6 = vector.load %arg4[%c0_6, %c0_7, %c0_8] : memref<1x32x96xf32, #tpu.memory_space<vmem>>, vector<1x32x96xf32>
    %7 = vector.shape_cast %6 : vector<1x32x96xf32> to vector<32x96xf32>
    %c0_9 = arith.constant 0 : index
    %c0_10 = arith.constant 0 : index
    %c0_11 = arith.constant 0 : index
    %8 = vector.load %arg5[%c0_9, %c0_10, %c0_11] : memref<1x1x96xf32, #tpu.memory_space<vmem>>, vector<1x1x96xf32>
    %9 = vector.shape_cast %8 : vector<1x1x96xf32> to vector<1x96xf32>
    %c0_12 = arith.constant 0 : index
    %c0_13 = arith.constant 0 : index
    %c0_14 = arith.constant 0 : index
    %10 = vector.load %arg6[%c0_12, %c0_13, %c0_14] : memref<1x32x32xf32, #tpu.memory_space<vmem>>, vector<1x32x32xf32>
    %11 = vector.shape_cast %10 : vector<1x32x32xf32> to vector<32x32xf32>
    %c0_15 = arith.constant 0 : index
    %c0_16 = arith.constant 0 : index
    %c0_17 = arith.constant 0 : index
    %12 = vector.load %arg7[%c0_15, %c0_16, %c0_17] : memref<1x1x32xf32, #tpu.memory_space<vmem>>, vector<1x1x32xf32>
    %13 = vector.shape_cast %12 : vector<1x1x32xf32> to vector<1x32xf32>
    %c0_18 = arith.constant 0 : index
    %c0_19 = arith.constant 0 : index
    %c0_20 = arith.constant 0 : index
    %14 = vector.load %arg8[%c0_18, %c0_19, %c0_20] : memref<1x32x128xf32, #tpu.memory_space<vmem>>, vector<1x32x128xf32>
    %15 = vector.shape_cast %14 : vector<1x32x128xf32> to vector<32x128xf32>
    %c0_21 = arith.constant 0 : index
    %c0_22 = arith.constant 0 : index
    %c0_23 = arith.constant 0 : index
    %16 = vector.load %arg9[%c0_21, %c0_22, %c0_23] : memref<1x1x128xf32, #tpu.memory_space<vmem>>, vector<1x1x128xf32>
    %17 = vector.shape_cast %16 : vector<1x1x128xf32> to vector<1x128xf32>
    %c0_24 = arith.constant 0 : index
    %c0_25 = arith.constant 0 : index
    %c0_26 = arith.constant 0 : index
    %18 = vector.load %arg10[%c0_24, %c0_25, %c0_26] : memref<1x128x32xf32, #tpu.memory_space<vmem>>, vector<1x128x32xf32>
    %19 = vector.shape_cast %18 : vector<1x128x32xf32> to vector<128x32xf32>
    %c0_27 = arith.constant 0 : index
    %c0_28 = arith.constant 0 : index
    %c0_29 = arith.constant 0 : index
    %20 = vector.load %arg11[%c0_27, %c0_28, %c0_29] : memref<1x1x32xf32, #tpu.memory_space<vmem>>, vector<1x1x32xf32>
    %21 = vector.shape_cast %20 : vector<1x1x32xf32> to vector<1x32xf32>
    %c0_30 = arith.constant 0 : index
    %c0_31 = arith.constant 0 : index
    %c0_32 = arith.constant 0 : index
    %22 = vector.load %arg12[%c0_30, %c0_31, %c0_32] : memref<1x4x32xf32, #tpu.memory_space<vmem>>, vector<1x4x32xf32>
    %23 = vector.shape_cast %22 : vector<1x4x32xf32> to vector<4x32xf32>
    %24 = vector.shape_cast %5 : vector<2x8x32xf32> to vector<16x32xf32>
    %cst_33 = arith.constant dense<0.000000e+00> : vector<16x96xf32>
    %25 = tpu.matmul %24, %7, %cst_33 {dimension_numbers = #tpu.dot_dimension_numbers<[1], [0], [0], [1], [0, 0, 1, 1], [], []>} : vector<16x32xf32>, vector<32x96xf32>, vector<16x96xf32> -> vector<16x96xf32>
    %26 = vector.broadcast %9 : vector<1x96xf32> to vector<16x96xf32>
    %27 = arith.addf %25, %26 : vector<16x96xf32>
    %28 = vector.extract_strided_slice %27 {offsets = [0, 0], sizes = [16, 16], strides = [1, 1]} : vector<16x96xf32> to vector<16x16xf32>
    %29 = vector.shape_cast %28 : vector<16x16xf32> to vector<2x8x16xf32>
    %30 = vector.extract_strided_slice %27 {offsets = [0, 32], sizes = [16, 16], strides = [1, 1]} : vector<16x96xf32> to vector<16x16xf32>
    %31 = vector.shape_cast %30 : vector<16x16xf32> to vector<2x8x16xf32>
    %32 = vector.extract_strided_slice %27 {offsets = [0, 64], sizes = [16, 16], strides = [1, 1]} : vector<16x96xf32> to vector<16x16xf32>
    %33 = vector.shape_cast %32 : vector<16x16xf32> to vector<2x8x16xf32>
    "tpu.trace_start"() <{level = 10 : i32, message = "nid,njd->nij"}> : () -> ()
    %cst_34 = arith.constant dense<0.000000e+00> : vector<2x8x8xf32>
    %34 = tpu.matmul %29, %31, %cst_34 {dimension_numbers = #tpu.dot_dimension_numbers<[2], [2], [1], [1], [0, 0, 0, 1, 1, 1], [0], [0]>} : vector<2x8x16xf32>, vector<2x8x16xf32>, vector<2x8x8xf32> -> vector<2x8x8xf32>
    "tpu.trace_stop"() : () -> ()
    %cst_35 = arith.constant dense<0xFF800000> : vector<2x8xf32>
    %35 = vector.multi_reduction <maximumf>, %34, %cst_35 [2] : vector<2x8x8xf32> to vector<2x8xf32>
    %36 = vector.shape_cast %35 : vector<2x8xf32> to vector<2x8x1xf32>
    %37 = vector.broadcast %36 : vector<2x8x1xf32> to vector<2x8x8xf32>
    %38 = arith.subf %34, %37 : vector<2x8x8xf32>
    %39 = math.exp %38 : vector<2x8x8xf32>
    %cst_36 = arith.constant dense<0.000000e+00> : vector<2x8xf32>
    %40 = vector.multi_reduction <add>, %39, %cst_36 [2] : vector<2x8x8xf32> to vector<2x8xf32>
    %41 = vector.shape_cast %40 : vector<2x8xf32> to vector<2x8x1xf32>
    %42 = tpu.reciprocal %41 {approx = true} : vector<2x8x1xf32> -> vector<2x8x1xf32>
    %43 = vector.broadcast %42 : vector<2x8x1xf32> to vector<2x8x8xf32>
    %44 = arith.mulf %39, %43 : vector<2x8x8xf32>
    "tpu.trace_start"() <{level = 10 : i32, message = "nij,njd->nid"}> : () -> ()
    %cst_37 = arith.constant dense<0.000000e+00> : vector<2x8x16xf32>
    %45 = tpu.matmul %44, %33, %cst_37 {dimension_numbers = #tpu.dot_dimension_numbers<[2], [1], [1], [2], [0, 0, 0, 1, 1, 2], [0], [0]>} : vector<2x8x8xf32>, vector<2x8x16xf32>, vector<2x8x16xf32> -> vector<2x8x16xf32>
    "tpu.trace_stop"() : () -> ()
    %46 = vector.shape_cast %45 : vector<2x8x16xf32> to vector<16x16xf32>
    %47 = vector.extract_strided_slice %11 {offsets = [0, 0], sizes = [16, 32], strides = [1, 1]} : vector<32x32xf32> to vector<16x32xf32>
    %cst_38 = arith.constant dense<0.000000e+00> : vector<16x32xf32>
    %48 = tpu.matmul %46, %47, %cst_38 {dimension_numbers = #tpu.dot_dimension_numbers<[1], [0], [0], [1], [0, 0, 1, 1], [], []>} : vector<16x16xf32>, vector<16x32xf32>, vector<16x32xf32> -> vector<16x32xf32>
    %49 = vector.extract_strided_slice %27 {offsets = [0, 16], sizes = [16, 16], strides = [1, 1]} : vector<16x96xf32> to vector<16x16xf32>
    %50 = vector.shape_cast %49 : vector<16x16xf32> to vector<2x8x16xf32>
    %51 = vector.extract_strided_slice %27 {offsets = [0, 48], sizes = [16, 16], strides = [1, 1]} : vector<16x96xf32> to vector<16x16xf32>
    %52 = vector.shape_cast %51 : vector<16x16xf32> to vector<2x8x16xf32>
    %53 = vector.extract_strided_slice %27 {offsets = [0, 80], sizes = [16, 16], strides = [1, 1]} : vector<16x96xf32> to vector<16x16xf32>
    %54 = vector.shape_cast %53 : vector<16x16xf32> to vector<2x8x16xf32>
    "tpu.trace_start"() <{level = 10 : i32, message = "nid,njd->nij"}> : () -> ()
    %cst_39 = arith.constant dense<0.000000e+00> : vector<2x8x8xf32>
    %55 = tpu.matmul %50, %52, %cst_39 {dimension_numbers = #tpu.dot_dimension_numbers<[2], [2], [1], [1], [0, 0, 0, 1, 1, 1], [0], [0]>} : vector<2x8x16xf32>, vector<2x8x16xf32>, vector<2x8x8xf32> -> vector<2x8x8xf32>
    "tpu.trace_stop"() : () -> ()
    %cst_40 = arith.constant dense<0xFF800000> : vector<2x8xf32>
    %56 = vector.multi_reduction <maximumf>, %55, %cst_40 [2] : vector<2x8x8xf32> to vector<2x8xf32>
    %57 = vector.shape_cast %56 : vector<2x8xf32> to vector<2x8x1xf32>
    %58 = vector.broadcast %57 : vector<2x8x1xf32> to vector<2x8x8xf32>
    %59 = arith.subf %55, %58 : vector<2x8x8xf32>
    %60 = math.exp %59 : vector<2x8x8xf32>
    %cst_41 = arith.constant dense<0.000000e+00> : vector<2x8xf32>
    %61 = vector.multi_reduction <add>, %60, %cst_41 [2] : vector<2x8x8xf32> to vector<2x8xf32>
    %62 = vector.shape_cast %61 : vector<2x8xf32> to vector<2x8x1xf32>
    %63 = tpu.reciprocal %62 {approx = true} : vector<2x8x1xf32> -> vector<2x8x1xf32>
    %64 = vector.broadcast %63 : vector<2x8x1xf32> to vector<2x8x8xf32>
    %65 = arith.mulf %60, %64 : vector<2x8x8xf32>
    "tpu.trace_start"() <{level = 10 : i32, message = "nij,njd->nid"}> : () -> ()
    %cst_42 = arith.constant dense<0.000000e+00> : vector<2x8x16xf32>
    %66 = tpu.matmul %65, %54, %cst_42 {dimension_numbers = #tpu.dot_dimension_numbers<[2], [1], [1], [2], [0, 0, 0, 1, 1, 2], [0], [0]>} : vector<2x8x8xf32>, vector<2x8x16xf32>, vector<2x8x16xf32> -> vector<2x8x16xf32>
    "tpu.trace_stop"() : () -> ()
    %67 = vector.shape_cast %66 : vector<2x8x16xf32> to vector<16x16xf32>
    %68 = vector.extract_strided_slice %11 {offsets = [16, 0], sizes = [16, 32], strides = [1, 1]} : vector<32x32xf32> to vector<16x32xf32>
    %cst_43 = arith.constant dense<0.000000e+00> : vector<16x32xf32>
    %69 = tpu.matmul %67, %68, %cst_43 {dimension_numbers = #tpu.dot_dimension_numbers<[1], [0], [0], [1], [0, 0, 1, 1], [], []>} : vector<16x16xf32>, vector<16x32xf32>, vector<16x32xf32> -> vector<16x32xf32>
    %70 = arith.addf %48, %69 : vector<16x32xf32>
    %71 = vector.broadcast %13 : vector<1x32xf32> to vector<16x32xf32>
    %72 = arith.addf %70, %71 : vector<16x32xf32>
    %73 = arith.addf %24, %72 : vector<16x32xf32>
    %74 = vector.extract_strided_slice %23 {offsets = [0, 0], sizes = [1, 32], strides = [1, 1]} : vector<4x32xf32> to vector<1x32xf32>
    %75 = vector.extract_strided_slice %23 {offsets = [1, 0], sizes = [1, 32], strides = [1, 1]} : vector<4x32xf32> to vector<1x32xf32>
    %cst_44 = arith.constant dense<0.000000e+00> : vector<16xf32>
    %76 = vector.multi_reduction <add>, %73, %cst_44 [1] : vector<16x32xf32> to vector<16xf32>
    %77 = vector.shape_cast %76 : vector<16xf32> to vector<16x1xf32>
    %cst_45 = arith.constant 3.200000e+01 : f32
    %78 = vector.broadcast %cst_45 : f32 to vector<16x1xf32>
    %79 = arith.divf %77, %78 : vector<16x1xf32>
    %80 = vector.broadcast %79 : vector<16x1xf32> to vector<16x32xf32>
    %81 = arith.subf %73, %80 : vector<16x32xf32>
    %82 = arith.mulf %81, %81 : vector<16x32xf32>
    %cst_46 = arith.constant dense<0.000000e+00> : vector<16xf32>
    %83 = vector.multi_reduction <add>, %82, %cst_46 [1] : vector<16x32xf32> to vector<16xf32>
    %84 = vector.shape_cast %83 : vector<16xf32> to vector<16x1xf32>
    %cst_47 = arith.constant 3.200000e+01 : f32
    %85 = vector.broadcast %cst_47 : f32 to vector<16x1xf32>
    %86 = arith.divf %84, %85 : vector<16x1xf32>
    %87 = vector.broadcast %79 : vector<16x1xf32> to vector<16x32xf32>
    %88 = arith.subf %73, %87 : vector<16x32xf32>
    %cst_48 = arith.constant 9.99999974E-6 : f32
    %89 = vector.broadcast %cst_48 : f32 to vector<16x1xf32>
    %90 = arith.addf %86, %89 : vector<16x1xf32>
    %91 = math.rsqrt %90 : vector<16x1xf32>
    %92 = vector.broadcast %91 : vector<16x1xf32> to vector<16x32xf32>
    %93 = arith.mulf %88, %92 : vector<16x32xf32>
    %94 = vector.broadcast %74 : vector<1x32xf32> to vector<16x32xf32>
    %95 = arith.mulf %93, %94 : vector<16x32xf32>
    %96 = vector.broadcast %75 : vector<1x32xf32> to vector<16x32xf32>
    %97 = arith.addf %95, %96 : vector<16x32xf32>
    %cst_49 = arith.constant dense<0.000000e+00> : vector<16x128xf32>
    %98 = tpu.matmul %97, %15, %cst_49 {dimension_numbers = #tpu.dot_dimension_numbers<[1], [0], [0], [1], [0, 0, 1, 1], [], []>} : vector<16x32xf32>, vector<32x128xf32>, vector<16x128xf32> -> vector<16x128xf32>
    %99 = vector.broadcast %17 : vector<1x128xf32> to vector<16x128xf32>
    %100 = arith.addf %98, %99 : vector<16x128xf32>
    %cst_50 = arith.constant 0.000000e+00 : f32
    %101 = vector.broadcast %cst_50 : f32 to vector<16x128xf32>
    %102 = arith.maximumf %100, %101 : vector<16x128xf32>
    %cst_51 = arith.constant dense<0.000000e+00> : vector<16x32xf32>
    %103 = tpu.matmul %102, %19, %cst_51 {dimension_numbers = #tpu.dot_dimension_numbers<[1], [0], [0], [1], [0, 0, 1, 1], [], []>} : vector<16x128xf32>, vector<128x32xf32>, vector<16x32xf32> -> vector<16x32xf32>
    %104 = vector.broadcast %21 : vector<1x32xf32> to vector<16x32xf32>
    %105 = arith.addf %103, %104 : vector<16x32xf32>
    %106 = arith.addf %97, %105 : vector<16x32xf32>
    %107 = vector.extract_strided_slice %23 {offsets = [2, 0], sizes = [1, 32], strides = [1, 1]} : vector<4x32xf32> to vector<1x32xf32>
    %108 = vector.extract_strided_slice %23 {offsets = [3, 0], sizes = [1, 32], strides = [1, 1]} : vector<4x32xf32> to vector<1x32xf32>
    %cst_52 = arith.constant dense<0.000000e+00> : vector<16xf32>
    %109 = vector.multi_reduction <add>, %106, %cst_52 [1] : vector<16x32xf32> to vector<16xf32>
    %110 = vector.shape_cast %109 : vector<16xf32> to vector<16x1xf32>
    %cst_53 = arith.constant 3.200000e+01 : f32
    %111 = vector.broadcast %cst_53 : f32 to vector<16x1xf32>
    %112 = arith.divf %110, %111 : vector<16x1xf32>
    %113 = vector.broadcast %112 : vector<16x1xf32> to vector<16x32xf32>
    %114 = arith.subf %106, %113 : vector<16x32xf32>
    %115 = arith.mulf %114, %114 : vector<16x32xf32>
    %cst_54 = arith.constant dense<0.000000e+00> : vector<16xf32>
    %116 = vector.multi_reduction <add>, %115, %cst_54 [1] : vector<16x32xf32> to vector<16xf32>
    %117 = vector.shape_cast %116 : vector<16xf32> to vector<16x1xf32>
    %cst_55 = arith.constant 3.200000e+01 : f32
    %118 = vector.broadcast %cst_55 : f32 to vector<16x1xf32>
    %119 = arith.divf %117, %118 : vector<16x1xf32>
    %120 = vector.broadcast %112 : vector<16x1xf32> to vector<16x32xf32>
    %121 = arith.subf %106, %120 : vector<16x32xf32>
    %cst_56 = arith.constant 9.99999974E-6 : f32
    %122 = vector.broadcast %cst_56 : f32 to vector<16x1xf32>
    %123 = arith.addf %119, %122 : vector<16x1xf32>
    %124 = math.rsqrt %123 : vector<16x1xf32>
    %125 = vector.broadcast %124 : vector<16x1xf32> to vector<16x32xf32>
    %126 = arith.mulf %121, %125 : vector<16x32xf32>
    %127 = vector.broadcast %107 : vector<1x32xf32> to vector<16x32xf32>
    %128 = arith.mulf %126, %127 : vector<16x32xf32>
    %129 = vector.broadcast %108 : vector<1x32xf32> to vector<16x32xf32>
    %130 = arith.addf %128, %129 : vector<16x32xf32>
    %131 = vector.shape_cast %130 : vector<16x32xf32> to vector<2x8x32xf32>
    %132 = vector.shape_cast %131 : vector<2x8x32xf32> to vector<1x16x32xf32>
    %133 = vector.shape_cast %2 : vector<4x16xf32> to vector<1x4x16xf32>
    "tpu.trace_start"() <{level = 10 : i32, message = "bps,bsd->bpd"}> : () -> ()
    %cst_57 = arith.constant dense<0.000000e+00> : vector<1x4x32xf32>
    %134 = tpu.matmul %133, %132, %cst_57 {dimension_numbers = #tpu.dot_dimension_numbers<[2], [1], [1], [2], [0, 0, 0, 1, 1, 2], [0], [0]>} : vector<1x4x16xf32>, vector<1x16x32xf32>, vector<1x4x32xf32> -> vector<1x4x32xf32>
    "tpu.trace_stop"() : () -> ()
    %c0_58 = arith.constant 0 : index
    %c0_59 = arith.constant 0 : index
    %c0_60 = arith.constant 0 : index
    %135 = vector.load %arg13[%c0_58, %c0_59, %c0_60] : memref<1x32x96xf32, #tpu.memory_space<vmem>>, vector<1x32x96xf32>
    %136 = vector.shape_cast %135 : vector<1x32x96xf32> to vector<32x96xf32>
    %c0_61 = arith.constant 0 : index
    %c0_62 = arith.constant 0 : index
    %c0_63 = arith.constant 0 : index
    %137 = vector.load %arg14[%c0_61, %c0_62, %c0_63] : memref<1x1x96xf32, #tpu.memory_space<vmem>>, vector<1x1x96xf32>
    %138 = vector.shape_cast %137 : vector<1x1x96xf32> to vector<1x96xf32>
    %c0_64 = arith.constant 0 : index
    %c0_65 = arith.constant 0 : index
    %c0_66 = arith.constant 0 : index
    %139 = vector.load %arg15[%c0_64, %c0_65, %c0_66] : memref<1x32x32xf32, #tpu.memory_space<vmem>>, vector<1x32x32xf32>
    %140 = vector.shape_cast %139 : vector<1x32x32xf32> to vector<32x32xf32>
    %c0_67 = arith.constant 0 : index
    %c0_68 = arith.constant 0 : index
    %c0_69 = arith.constant 0 : index
    %141 = vector.load %arg16[%c0_67, %c0_68, %c0_69] : memref<1x1x32xf32, #tpu.memory_space<vmem>>, vector<1x1x32xf32>
    %142 = vector.shape_cast %141 : vector<1x1x32xf32> to vector<1x32xf32>
    %c0_70 = arith.constant 0 : index
    %c0_71 = arith.constant 0 : index
    %c0_72 = arith.constant 0 : index
    %143 = vector.load %arg17[%c0_70, %c0_71, %c0_72] : memref<1x32x128xf32, #tpu.memory_space<vmem>>, vector<1x32x128xf32>
    %144 = vector.shape_cast %143 : vector<1x32x128xf32> to vector<32x128xf32>
    %c0_73 = arith.constant 0 : index
    %c0_74 = arith.constant 0 : index
    %c0_75 = arith.constant 0 : index
    %145 = vector.load %arg18[%c0_73, %c0_74, %c0_75] : memref<1x1x128xf32, #tpu.memory_space<vmem>>, vector<1x1x128xf32>
    %146 = vector.shape_cast %145 : vector<1x1x128xf32> to vector<1x128xf32>
    %c0_76 = arith.constant 0 : index
    %c0_77 = arith.constant 0 : index
    %c0_78 = arith.constant 0 : index
    %147 = vector.load %arg19[%c0_76, %c0_77, %c0_78] : memref<1x128x32xf32, #tpu.memory_space<vmem>>, vector<1x128x32xf32>
    %148 = vector.shape_cast %147 : vector<1x128x32xf32> to vector<128x32xf32>
    %c0_79 = arith.constant 0 : index
    %c0_80 = arith.constant 0 : index
    %c0_81 = arith.constant 0 : index
    %149 = vector.load %arg20[%c0_79, %c0_80, %c0_81] : memref<1x1x32xf32, #tpu.memory_space<vmem>>, vector<1x1x32xf32>
    %150 = vector.shape_cast %149 : vector<1x1x32xf32> to vector<1x32xf32>
    %c0_82 = arith.constant 0 : index
    %c0_83 = arith.constant 0 : index
    %c0_84 = arith.constant 0 : index
    %151 = vector.load %arg21[%c0_82, %c0_83, %c0_84] : memref<1x4x32xf32, #tpu.memory_space<vmem>>, vector<1x4x32xf32>
    %152 = vector.shape_cast %151 : vector<1x4x32xf32> to vector<4x32xf32>
    %153 = vector.shape_cast %136 : vector<32x96xf32> to vector<1x32x96xf32>
    "tpu.trace_start"() <{level = 10 : i32, message = "nld,nde->nle"}> : () -> ()
    %cst_85 = arith.constant dense<0.000000e+00> : vector<1x4x96xf32>
    %154 = tpu.matmul %134, %153, %cst_85 {dimension_numbers = #tpu.dot_dimension_numbers<[2], [1], [1], [2], [0, 0, 0, 1, 1, 2], [0], [0]>} : vector<1x4x32xf32>, vector<1x32x96xf32>, vector<1x4x96xf32> -> vector<1x4x96xf32>
    "tpu.trace_stop"() : () -> ()
    %155 = vector.shape_cast %138 : vector<1x96xf32> to vector<1x1x96xf32>
    %156 = vector.broadcast %155 : vector<1x1x96xf32> to vector<1x4x96xf32>
    %157 = arith.addf %154, %156 : vector<1x4x96xf32>
    %158 = vector.extract_strided_slice %157 {offsets = [0, 0, 0], sizes = [1, 4, 16], strides = [1, 1, 1]} : vector<1x4x96xf32> to vector<1x4x16xf32>
    %159 = vector.extract_strided_slice %157 {offsets = [0, 0, 32], sizes = [1, 4, 16], strides = [1, 1, 1]} : vector<1x4x96xf32> to vector<1x4x16xf32>
    %160 = vector.extract_strided_slice %157 {offsets = [0, 0, 64], sizes = [1, 4, 16], strides = [1, 1, 1]} : vector<1x4x96xf32> to vector<1x4x16xf32>
    "tpu.trace_start"() <{level = 10 : i32, message = "nid,njd->nij"}> : () -> ()
    %cst_86 = arith.constant dense<0.000000e+00> : vector<1x4x4xf32>
    %161 = tpu.matmul %158, %159, %cst_86 {dimension_numbers = #tpu.dot_dimension_numbers<[2], [2], [1], [1], [0, 0, 0, 1, 1, 1], [0], [0]>} : vector<1x4x16xf32>, vector<1x4x16xf32>, vector<1x4x4xf32> -> vector<1x4x4xf32>
    "tpu.trace_stop"() : () -> ()
    %cst_87 = arith.constant dense<0xFF800000> : vector<1x4xf32>
    %162 = vector.multi_reduction <maximumf>, %161, %cst_87 [2] : vector<1x4x4xf32> to vector<1x4xf32>
    %163 = vector.shape_cast %162 : vector<1x4xf32> to vector<1x4x1xf32>
    %164 = vector.broadcast %163 : vector<1x4x1xf32> to vector<1x4x4xf32>
    %165 = arith.subf %161, %164 : vector<1x4x4xf32>
    %166 = math.exp %165 : vector<1x4x4xf32>
    %cst_88 = arith.constant dense<0.000000e+00> : vector<1x4xf32>
    %167 = vector.multi_reduction <add>, %166, %cst_88 [2] : vector<1x4x4xf32> to vector<1x4xf32>
    %168 = vector.shape_cast %167 : vector<1x4xf32> to vector<1x4x1xf32>
    %169 = tpu.reciprocal %168 {approx = true} : vector<1x4x1xf32> -> vector<1x4x1xf32>
    %170 = vector.broadcast %169 : vector<1x4x1xf32> to vector<1x4x4xf32>
    %171 = arith.mulf %166, %170 : vector<1x4x4xf32>
    "tpu.trace_start"() <{level = 10 : i32, message = "nij,njd->nid"}> : () -> ()
    %cst_89 = arith.constant dense<0.000000e+00> : vector<1x4x16xf32>
    %172 = tpu.matmul %171, %160, %cst_89 {dimension_numbers = #tpu.dot_dimension_numbers<[2], [1], [1], [2], [0, 0, 0, 1, 1, 2], [0], [0]>} : vector<1x4x4xf32>, vector<1x4x16xf32>, vector<1x4x16xf32> -> vector<1x4x16xf32>
    "tpu.trace_stop"() : () -> ()
    %173 = vector.extract_strided_slice %140 {offsets = [0, 0], sizes = [16, 32], strides = [1, 1]} : vector<32x32xf32> to vector<16x32xf32>
    %174 = vector.shape_cast %173 : vector<16x32xf32> to vector<1x16x32xf32>
    "tpu.trace_start"() <{level = 10 : i32, message = "nld,nde->nle"}> : () -> ()
    %cst_90 = arith.constant dense<0.000000e+00> : vector<1x4x32xf32>
    %175 = tpu.matmul %172, %174, %cst_90 {dimension_numbers = #tpu.dot_dimension_numbers<[2], [1], [1], [2], [0, 0, 0, 1, 1, 2], [0], [0]>} : vector<1x4x16xf32>, vector<1x16x32xf32>, vector<1x4x32xf32> -> vector<1x4x32xf32>
    "tpu.trace_stop"() : () -> ()
    %176 = vector.extract_strided_slice %157 {offsets = [0, 0, 16], sizes = [1, 4, 16], strides = [1, 1, 1]} : vector<1x4x96xf32> to vector<1x4x16xf32>
    %177 = vector.extract_strided_slice %157 {offsets = [0, 0, 48], sizes = [1, 4, 16], strides = [1, 1, 1]} : vector<1x4x96xf32> to vector<1x4x16xf32>
    %178 = vector.extract_strided_slice %157 {offsets = [0, 0, 80], sizes = [1, 4, 16], strides = [1, 1, 1]} : vector<1x4x96xf32> to vector<1x4x16xf32>
    "tpu.trace_start"() <{level = 10 : i32, message = "nid,njd->nij"}> : () -> ()
    %cst_91 = arith.constant dense<0.000000e+00> : vector<1x4x4xf32>
    %179 = tpu.matmul %176, %177, %cst_91 {dimension_numbers = #tpu.dot_dimension_numbers<[2], [2], [1], [1], [0, 0, 0, 1, 1, 1], [0], [0]>} : vector<1x4x16xf32>, vector<1x4x16xf32>, vector<1x4x4xf32> -> vector<1x4x4xf32>
    "tpu.trace_stop"() : () -> ()
    %cst_92 = arith.constant dense<0xFF800000> : vector<1x4xf32>
    %180 = vector.multi_reduction <maximumf>, %179, %cst_92 [2] : vector<1x4x4xf32> to vector<1x4xf32>
    %181 = vector.shape_cast %180 : vector<1x4xf32> to vector<1x4x1xf32>
    %182 = vector.broadcast %181 : vector<1x4x1xf32> to vector<1x4x4xf32>
    %183 = arith.subf %179, %182 : vector<1x4x4xf32>
    %184 = math.exp %183 : vector<1x4x4xf32>
    %cst_93 = arith.constant dense<0.000000e+00> : vector<1x4xf32>
    %185 = vector.multi_reduction <add>, %184, %cst_93 [2] : vector<1x4x4xf32> to vector<1x4xf32>
    %186 = vector.shape_cast %185 : vector<1x4xf32> to vector<1x4x1xf32>
    %187 = tpu.reciprocal %186 {approx = true} : vector<1x4x1xf32> -> vector<1x4x1xf32>
    %188 = vector.broadcast %187 : vector<1x4x1xf32> to vector<1x4x4xf32>
    %189 = arith.mulf %184, %188 : vector<1x4x4xf32>
    "tpu.trace_start"() <{level = 10 : i32, message = "nij,njd->nid"}> : () -> ()
    %cst_94 = arith.constant dense<0.000000e+00> : vector<1x4x16xf32>
    %190 = tpu.matmul %189, %178, %cst_94 {dimension_numbers = #tpu.dot_dimension_numbers<[2], [1], [1], [2], [0, 0, 0, 1, 1, 2], [0], [0]>} : vector<1x4x4xf32>, vector<1x4x16xf32>, vector<1x4x16xf32> -> vector<1x4x16xf32>
    "tpu.trace_stop"() : () -> ()
    %191 = vector.extract_strided_slice %140 {offsets = [16, 0], sizes = [16, 32], strides = [1, 1]} : vector<32x32xf32> to vector<16x32xf32>
    %192 = vector.shape_cast %191 : vector<16x32xf32> to vector<1x16x32xf32>
    "tpu.trace_start"() <{level = 10 : i32, message = "nld,nde->nle"}> : () -> ()
    %cst_95 = arith.constant dense<0.000000e+00> : vector<1x4x32xf32>
    %193 = tpu.matmul %190, %192, %cst_95 {dimension_numbers = #tpu.dot_dimension_numbers<[2], [1], [1], [2], [0, 0, 0, 1, 1, 2], [0], [0]>} : vector<1x4x16xf32>, vector<1x16x32xf32>, vector<1x4x32xf32> -> vector<1x4x32xf32>
    "tpu.trace_stop"() : () -> ()
    %194 = arith.addf %175, %193 : vector<1x4x32xf32>
    %195 = vector.shape_cast %142 : vector<1x32xf32> to vector<1x1x32xf32>
    %196 = vector.broadcast %195 : vector<1x1x32xf32> to vector<1x4x32xf32>
    %197 = arith.addf %194, %196 : vector<1x4x32xf32>
    %198 = arith.addf %134, %197 : vector<1x4x32xf32>
    %199 = vector.extract_strided_slice %152 {offsets = [0, 0], sizes = [1, 32], strides = [1, 1]} : vector<4x32xf32> to vector<1x32xf32>
    %200 = vector.extract_strided_slice %152 {offsets = [1, 0], sizes = [1, 32], strides = [1, 1]} : vector<4x32xf32> to vector<1x32xf32>
    %cst_96 = arith.constant dense<0.000000e+00> : vector<1x4xf32>
    %201 = vector.multi_reduction <add>, %198, %cst_96 [2] : vector<1x4x32xf32> to vector<1x4xf32>
    %202 = vector.shape_cast %201 : vector<1x4xf32> to vector<1x4x1xf32>
    %cst_97 = arith.constant 3.200000e+01 : f32
    %203 = vector.broadcast %cst_97 : f32 to vector<1x4x1xf32>
    %204 = arith.divf %202, %203 : vector<1x4x1xf32>
    %205 = vector.broadcast %204 : vector<1x4x1xf32> to vector<1x4x32xf32>
    %206 = arith.subf %198, %205 : vector<1x4x32xf32>
    %207 = arith.mulf %206, %206 : vector<1x4x32xf32>
    %cst_98 = arith.constant dense<0.000000e+00> : vector<1x4xf32>
    %208 = vector.multi_reduction <add>, %207, %cst_98 [2] : vector<1x4x32xf32> to vector<1x4xf32>
    %209 = vector.shape_cast %208 : vector<1x4xf32> to vector<1x4x1xf32>
    %cst_99 = arith.constant 3.200000e+01 : f32
    %210 = vector.broadcast %cst_99 : f32 to vector<1x4x1xf32>
    %211 = arith.divf %209, %210 : vector<1x4x1xf32>
    %212 = vector.broadcast %204 : vector<1x4x1xf32> to vector<1x4x32xf32>
    %213 = arith.subf %198, %212 : vector<1x4x32xf32>
    %cst_100 = arith.constant 9.99999974E-6 : f32
    %214 = vector.broadcast %cst_100 : f32 to vector<1x4x1xf32>
    %215 = arith.addf %211, %214 : vector<1x4x1xf32>
    %216 = math.rsqrt %215 : vector<1x4x1xf32>
    %217 = vector.broadcast %216 : vector<1x4x1xf32> to vector<1x4x32xf32>
    %218 = arith.mulf %213, %217 : vector<1x4x32xf32>
    %219 = vector.shape_cast %199 : vector<1x32xf32> to vector<1x1x32xf32>
    %220 = vector.broadcast %219 : vector<1x1x32xf32> to vector<1x4x32xf32>
    %221 = arith.mulf %218, %220 : vector<1x4x32xf32>
    %222 = vector.shape_cast %200 : vector<1x32xf32> to vector<1x1x32xf32>
    %223 = vector.broadcast %222 : vector<1x1x32xf32> to vector<1x4x32xf32>
    %224 = arith.addf %221, %223 : vector<1x4x32xf32>
    %225 = vector.shape_cast %144 : vector<32x128xf32> to vector<1x32x128xf32>
    "tpu.trace_start"() <{level = 10 : i32, message = "nld,nde->nle"}> : () -> ()
    %cst_101 = arith.constant dense<0.000000e+00> : vector<1x4x128xf32>
    %226 = tpu.matmul %224, %225, %cst_101 {dimension_numbers = #tpu.dot_dimension_numbers<[2], [1], [1], [2], [0, 0, 0, 1, 1, 2], [0], [0]>} : vector<1x4x32xf32>, vector<1x32x128xf32>, vector<1x4x128xf32> -> vector<1x4x128xf32>
    "tpu.trace_stop"() : () -> ()
    %227 = vector.shape_cast %146 : vector<1x128xf32> to vector<1x1x128xf32>
    %228 = vector.broadcast %227 : vector<1x1x128xf32> to vector<1x4x128xf32>
    %229 = arith.addf %226, %228 : vector<1x4x128xf32>
    %cst_102 = arith.constant 0.000000e+00 : f32
    %230 = vector.broadcast %cst_102 : f32 to vector<1x4x128xf32>
    %231 = arith.maximumf %229, %230 : vector<1x4x128xf32>
    %232 = vector.shape_cast %148 : vector<128x32xf32> to vector<1x128x32xf32>
    "tpu.trace_start"() <{level = 10 : i32, message = "nld,nde->nle"}> : () -> ()
    %cst_103 = arith.constant dense<0.000000e+00> : vector<1x4x32xf32>
    %233 = tpu.matmul %231, %232, %cst_103 {dimension_numbers = #tpu.dot_dimension_numbers<[2], [1], [1], [2], [0, 0, 0, 1, 1, 2], [0], [0]>} : vector<1x4x128xf32>, vector<1x128x32xf32>, vector<1x4x32xf32> -> vector<1x4x32xf32>
    "tpu.trace_stop"() : () -> ()
    %234 = vector.shape_cast %150 : vector<1x32xf32> to vector<1x1x32xf32>
    %235 = vector.broadcast %234 : vector<1x1x32xf32> to vector<1x4x32xf32>
    %236 = arith.addf %233, %235 : vector<1x4x32xf32>
    %237 = arith.addf %224, %236 : vector<1x4x32xf32>
    %238 = vector.extract_strided_slice %152 {offsets = [2, 0], sizes = [1, 32], strides = [1, 1]} : vector<4x32xf32> to vector<1x32xf32>
    %239 = vector.extract_strided_slice %152 {offsets = [3, 0], sizes = [1, 32], strides = [1, 1]} : vector<4x32xf32> to vector<1x32xf32>
    %cst_104 = arith.constant dense<0.000000e+00> : vector<1x4xf32>
    %240 = vector.multi_reduction <add>, %237, %cst_104 [2] : vector<1x4x32xf32> to vector<1x4xf32>
    %241 = vector.shape_cast %240 : vector<1x4xf32> to vector<1x4x1xf32>
    %cst_105 = arith.constant 3.200000e+01 : f32
    %242 = vector.broadcast %cst_105 : f32 to vector<1x4x1xf32>
    %243 = arith.divf %241, %242 : vector<1x4x1xf32>
    %244 = vector.broadcast %243 : vector<1x4x1xf32> to vector<1x4x32xf32>
    %245 = arith.subf %237, %244 : vector<1x4x32xf32>
    %246 = arith.mulf %245, %245 : vector<1x4x32xf32>
    %cst_106 = arith.constant dense<0.000000e+00> : vector<1x4xf32>
    %247 = vector.multi_reduction <add>, %246, %cst_106 [2] : vector<1x4x32xf32> to vector<1x4xf32>
    %248 = vector.shape_cast %247 : vector<1x4xf32> to vector<1x4x1xf32>
    %cst_107 = arith.constant 3.200000e+01 : f32
    %249 = vector.broadcast %cst_107 : f32 to vector<1x4x1xf32>
    %250 = arith.divf %248, %249 : vector<1x4x1xf32>
    %251 = vector.broadcast %243 : vector<1x4x1xf32> to vector<1x4x32xf32>
    %252 = arith.subf %237, %251 : vector<1x4x32xf32>
    %cst_108 = arith.constant 9.99999974E-6 : f32
    %253 = vector.broadcast %cst_108 : f32 to vector<1x4x1xf32>
    %254 = arith.addf %250, %253 : vector<1x4x1xf32>
    %255 = math.rsqrt %254 : vector<1x4x1xf32>
    %256 = vector.broadcast %255 : vector<1x4x1xf32> to vector<1x4x32xf32>
    %257 = arith.mulf %252, %256 : vector<1x4x32xf32>
    %258 = vector.shape_cast %238 : vector<1x32xf32> to vector<1x1x32xf32>
    %259 = vector.broadcast %258 : vector<1x1x32xf32> to vector<1x4x32xf32>
    %260 = arith.mulf %257, %259 : vector<1x4x32xf32>
    %261 = vector.shape_cast %239 : vector<1x32xf32> to vector<1x1x32xf32>
    %262 = vector.broadcast %261 : vector<1x1x32xf32> to vector<1x4x32xf32>
    %263 = arith.addf %260, %262 : vector<1x4x32xf32>
    %c0_109 = arith.constant 0 : index
    %c0_110 = arith.constant 0 : index
    %c0_111 = arith.constant 0 : index
    %264 = vector.load %arg22[%c0_109, %c0_110, %c0_111] : memref<1x4x32xf32, #tpu.memory_space<vmem>>, vector<1x4x32xf32>
    tpu.vector_store %arg22[%c0_109, %c0_110, %c0_111], %263 {strides = array<i32>} : memref<1x4x32xf32, #tpu.memory_space<vmem>>, vector<1x4x32xf32>,
    return
  }
  func.func @transform_0(%arg0: i32) -> (i32, i32, i32) {
    %c0_i32 = arith.constant 0 : i32
    %c0_i32_0 = arith.constant 0 : i32
    %c0_i32_1 = arith.constant 0 : i32
    return %arg0, %c0_i32, %c0_i32_0 : i32, i32, i32
  }
  func.func @transform_1(%arg0: i32) -> (i32, i32) {
    %c0_i32 = arith.constant 0 : i32
    %c0_i32_0 = arith.constant 0 : i32
    %c0_i32_1 = arith.constant 0 : i32
    return %c0_i32, %c0_i32_0 : i32, i32
  }
  func.func @transform_2(%arg0: i32) -> (i32, i32) {
    %c0_i32 = arith.constant 0 : i32
    %c0_i32_0 = arith.constant 0 : i32
    %c0_i32_1 = arith.constant 0 : i32
    return %c0_i32, %c0_i32_0 : i32, i32
  }
  func.func @transform_3(%arg0: i32) -> (i32, i32, i32) {
    %c0_i32 = arith.constant 0 : i32
    %c0_i32_0 = arith.constant 0 : i32
    %c0_i32_1 = arith.constant 0 : i32
    %c0_i32_2 = arith.constant 0 : i32
    return %c0_i32, %c0_i32_0, %c0_i32_1 : i32, i32, i32
  }
  func.func @transform_4(%arg0: i32) -> (i32, i32, i32) {
    %c0_i32 = arith.constant 0 : i32
    %c0_i32_0 = arith.constant 0 : i32
    %c0_i32_1 = arith.constant 0 : i32
    %c0_i32_2 = arith.constant 0 : i32
    return %c0_i32, %c0_i32_0, %c0_i32_1 : i32, i32, i32
  }
  func.func @transform_5(%arg0: i32) -> (i32, i32, i32) {
    %c0_i32 = arith.constant 0 : i32
    %c0_i32_0 = arith.constant 0 : i32
    %c0_i32_1 = arith.constant 0 : i32
    %c0_i32_2 = arith.constant 0 : i32
    return %c0_i32, %c0_i32_0, %c0_i32_1 : i32, i32, i32
  }
  func.func @transform_6(%arg0: i32) -> (i32, i32, i32) {
    %c0_i32 = arith.constant 0 : i32
    %c0_i32_0 = arith.constant 0 : i32
    %c0_i32_1 = arith.constant 0 : i32
    %c0_i32_2 = arith.constant 0 : i32
    return %c0_i32, %c0_i32_0, %c0_i32_1 : i32, i32, i32
  }
  func.func @transform_7(%arg0: i32) -> (i32, i32, i32) {
    %c0_i32 = arith.constant 0 : i32
    %c0_i32_0 = arith.constant 0 : i32
    %c0_i32_1 = arith.constant 0 : i32
    %c0_i32_2 = arith.constant 0 : i32
    return %c0_i32, %c0_i32_0, %c0_i32_1 : i32, i32, i32
  }
  func.func @transform_8(%arg0: i32) -> (i32, i32, i32) {
    %c0_i32 = arith.constant 0 : i32
    %c0_i32_0 = arith.constant 0 : i32
    %c0_i32_1 = arith.constant 0 : i32
    %c0_i32_2 = arith.constant 0 : i32
    return %c0_i32, %c0_i32_0, %c0_i32_1 : i32, i32, i32
  }
  func.func @transform_9(%arg0: i32) -> (i32, i32, i32) {
    %c0_i32 = arith.constant 0 : i32
    %c0_i32_0 = arith.constant 0 : i32
    %c0_i32_1 = arith.constant 0 : i32
    %c0_i32_2 = arith.constant 0 : i32
    return %c0_i32, %c0_i32_0, %c0_i32_1 : i32, i32, i32
  }
  func.func @transform_10(%arg0: i32) -> (i32, i32, i32) {
    %c0_i32 = arith.constant 0 : i32
    %c0_i32_0 = arith.constant 0 : i32
    %c0_i32_1 = arith.constant 0 : i32
    %c0_i32_2 = arith.constant 0 : i32
    return %c0_i32, %c0_i32_0, %c0_i32_1 : i32, i32, i32
  }
  func.func @transform_11(%arg0: i32) -> (i32, i32, i32) {
    %c0_i32 = arith.constant 0 : i32
    %c0_i32_0 = arith.constant 0 : i32
    %c0_i32_1 = arith.constant 0 : i32
    %c0_i32_2 = arith.constant 0 : i32
    return %c0_i32, %c0_i32_0, %c0_i32_1 : i32, i32, i32
  }
  func.func @transform_12(%arg0: i32) -> (i32, i32, i32) {
    %c0_i32 = arith.constant 0 : i32
    %c0_i32_0 = arith.constant 0 : i32
    %c0_i32_1 = arith.constant 0 : i32
    %c0_i32_2 = arith.constant 0 : i32
    return %c0_i32, %c0_i32_0, %c0_i32_1 : i32, i32, i32
  }
  func.func @transform_13(%arg0: i32) -> (i32, i32, i32) {
    %c0_i32 = arith.constant 0 : i32
    %c0_i32_0 = arith.constant 0 : i32
    %c0_i32_1 = arith.constant 0 : i32
    %c0_i32_2 = arith.constant 0 : i32
    return %c0_i32, %c0_i32_0, %c0_i32_1 : i32, i32, i32
  }
  func.func @transform_14(%arg0: i32) -> (i32, i32, i32) {
    %c0_i32 = arith.constant 0 : i32
    %c0_i32_0 = arith.constant 0 : i32
    %c0_i32_1 = arith.constant 0 : i32
    %c0_i32_2 = arith.constant 0 : i32
    return %c0_i32, %c0_i32_0, %c0_i32_1 : i32, i32, i32
  }
  func.func @transform_15(%arg0: i32) -> (i32, i32, i32) {
    %c0_i32 = arith.constant 0 : i32
    %c0_i32_0 = arith.constant 0 : i32
    %c0_i32_1 = arith.constant 0 : i32
    %c0_i32_2 = arith.constant 0 : i32
    return %c0_i32, %c0_i32_0, %c0_i32_1 : i32, i32, i32
  }
  func.func @transform_16(%arg0: i32) -> (i32, i32, i32) {
    %c0_i32 = arith.constant 0 : i32
    %c0_i32_0 = arith.constant 0 : i32
    %c0_i32_1 = arith.constant 0 : i32
    %c0_i32_2 = arith.constant 0 : i32
    return %c0_i32, %c0_i32_0, %c0_i32_1 : i32, i32, i32
  }
  func.func @transform_17(%arg0: i32) -> (i32, i32, i32) {
    %c0_i32 = arith.constant 0 : i32
    %c0_i32_0 = arith.constant 0 : i32
    %c0_i32_1 = arith.constant 0 : i32
    %c0_i32_2 = arith.constant 0 : i32
    return %c0_i32, %c0_i32_0, %c0_i32_1 : i32, i32, i32
  }
  func.func @transform_18(%arg0: i32) -> (i32, i32, i32) {
    %c0_i32 = arith.constant 0 : i32
    %c0_i32_0 = arith.constant 0 : i32
    %c0_i32_1 = arith.constant 0 : i32
    %c0_i32_2 = arith.constant 0 : i32
    return %c0_i32, %c0_i32_0, %c0_i32_1 : i32, i32, i32
  }
  func.func @transform_19(%arg0: i32) -> (i32, i32, i32) {
    %c0_i32 = arith.constant 0 : i32
    %c0_i32_0 = arith.constant 0 : i32
    %c0_i32_1 = arith.constant 0 : i32
    %c0_i32_2 = arith.constant 0 : i32
    return %c0_i32, %c0_i32_0, %c0_i32_1 : i32, i32, i32
  }
  func.func @transform_20(%arg0: i32) -> (i32, i32, i32) {
    %c0_i32 = arith.constant 0 : i32
    %c0_i32_0 = arith.constant 0 : i32
    %c0_i32_1 = arith.constant 0 : i32
    %c0_i32_2 = arith.constant 0 : i32
    return %c0_i32, %c0_i32_0, %c0_i32_1 : i32, i32, i32
  }
  func.func @transform_21(%arg0: i32) -> (i32, i32, i32) {
    %c0_i32 = arith.constant 0 : i32
    %c0_i32_0 = arith.constant 0 : i32
    %c0_i32_1 = arith.constant 0 : i32
    return %arg0, %c0_i32, %c0_i32_0 : i32, i32, i32
  }
}

</mosaic_0001>

<llo_original>
// kernel: tpu_custom_call.1
$region0: #{tpu_custom_call.1}
  #allocation0 [shape = 'u32[]', space=smem, size = 0x4, offset = 0x4, fixed_abs, tag = 'smem constant byte address 0x4 - core index']
  #allocation1 [shape = 'u32[144,128]{1,0:T(1,128)}', space=vmem, size = 0x12000, scoped, tag = 'internal scratch']
  %s0 = inlined_call_operand.vmem [shape: f32[2,16,32], index: 0, kind: input, shape index: {}]
  %s1 = inlined_call_operand.vmem [shape: f32[16,16], index: 1, kind: input, shape index: {}]
  %s2 = inlined_call_operand.vmem [shape: f32[4,16], index: 2, kind: input, shape index: {}]
  %s3 = inlined_call_operand.vmem [shape: f32[1,32,96], index: 3, kind: input, shape index: {}]
  %s4 = inlined_call_operand.vmem [shape: f32[1,1,96], index: 4, kind: input, shape index: {}]
  %s5 = inlined_call_operand.vmem [shape: f32[1,32,32], index: 5, kind: input, shape index: {}]
  %s6 = inlined_call_operand.vmem [shape: f32[1,1,32], index: 6, kind: input, shape index: {}]
  %s7 = inlined_call_operand.vmem [shape: f32[1,32,128], index: 7, kind: input, shape index: {}]
  %s8 = inlined_call_operand.vmem [shape: f32[1,1,128], index: 8, kind: input, shape index: {}]
  %s9 = inlined_call_operand.vmem [shape: f32[1,128,32], index: 9, kind: input, shape index: {}]
  %s10 = inlined_call_operand.vmem [shape: f32[1,1,32], index: 10, kind: input, shape index: {}]
  %s11 = inlined_call_operand.vmem [shape: f32[1,4,32], index: 11, kind: input, shape index: {}]
  %s12 = inlined_call_operand.vmem [shape: f32[1,32,96], index: 12, kind: input, shape index: {}]
  %s13 = inlined_call_operand.vmem [shape: f32[1,1,96], index: 13, kind: input, shape index: {}]
  %s14 = inlined_call_operand.vmem [shape: f32[1,32,32], index: 14, kind: input, shape index: {}]
  %s15 = inlined_call_operand.vmem [shape: f32[1,1,32], index: 15, kind: input, shape index: {}]
  %s16 = inlined_call_operand.vmem [shape: f32[1,32,128], index: 16, kind: input, shape index: {}]
  %s17 = inlined_call_operand.vmem [shape: f32[1,1,128], index: 17, kind: input, shape index: {}]
  %s18 = inlined_call_operand.vmem [shape: f32[1,128,32], index: 18, kind: input, shape index: {}]
  %s19 = inlined_call_operand.vmem [shape: f32[1,1,32], index: 19, kind: input, shape index: {}]
  %s20 = inlined_call_operand.vmem [shape: f32[1,4,32], index: 20, kind: input, shape index: {}]
  %s21 = inlined_call_operand.hbm [shape: f32[2,4,32], index: 21, kind: output, shape index: {}]
  %s22 = sld [smem:[#allocation0]]
  $region117: #{tpu_custom_call.1} parent=0
    _
  %s24 = ssub.s32 1, %s22
  %s25 = scalar_select 0, %s24, %s22
  $region1: #{tpu_custom_call.1} parent=0
    #allocation2 [shape = 'u8[4096]{0}', space=vmem, size = 0x1000, scoped, tag = 'output window, operand 0']
    #allocation3 [shape = 's32[2]{0}', space=sflag, size = 0x8, scoped, tag = 'scoped memory for tpu_custom_call.1']
    %26 = vsyncpa [#allocation3], 0
    %s27 = scalar_lea.sflag [#allocation3], 1
    %28 = vsyncpa %s27, 0
    loop: start=0, step=1, limit=4
    $region2: #{tpu_custom_call.1} parent=1 // loop_pre_header
      _
    $region3: #{tpu_custom_call.1} parent=1 // loop_header
      %s30 = sphi 0, %s34
      %p31 = scmp.ge.s32.totalorder %s30, 4
      %s40 = sphi 0, %s42
      %s43 = sphi 0, %s40
      %s44 = sphi 0, %s43
      %s60 = sphi 0, %s44
      %s64 = sphi 0, %s64
      %s66 = sphi 0, %s64
      %s67 = sphi 0, %s66
      %s81 = sphi 0, %s67
      %s85 = sphi 0, %s85
      %s87 = sphi 0, %s85
      %s88 = sphi 0, %s87
      %s102 = sphi 0, %s88
      %s106 = sphi 0, %s106
      %s108 = sphi 0, %s106
      %s109 = sphi 0, %s108
      %s123 = sphi 0, %s109
      %s127 = sphi 0, %s127
      %s129 = sphi 0, %s127
      %s130 = sphi 0, %s129
      %s144 = sphi 0, %s130
      %s148 = sphi 0, %s148
      %s150 = sphi 0, %s148
      %s151 = sphi 0, %s150
      %s165 = sphi 0, %s151
      %s169 = sphi 0, %s169
      %s171 = sphi 0, %s169
      %s172 = sphi 0, %s171
      %s186 = sphi 0, %s172
      %s190 = sphi 0, %s190
      %s192 = sphi 0, %s190
      %s193 = sphi 0, %s192
      %s207 = sphi 0, %s193
      %s211 = sphi 0, %s211
      %s213 = sphi 0, %s211
      %s214 = sphi 0, %s213
      %s228 = sphi 0, %s214
      %s232 = sphi 0, %s232
      %s234 = sphi 0, %s232
      %s235 = sphi 0, %s234
      %s249 = sphi 0, %s235
      %s253 = sphi 0, %s253
      %s255 = sphi 0, %s253
      %s256 = sphi 0, %s255
      %s270 = sphi 0, %s256
      %s274 = sphi 0, %s274
      %s276 = sphi 0, %s274
      %s277 = sphi 0, %s276
      %s291 = sphi 0, %s277
      %s295 = sphi 0, %s295
      %s297 = sphi 0, %s295
      %s298 = sphi 0, %s297
      %s312 = sphi 0, %s298
      %s316 = sphi 0, %s316
      %s318 = sphi 0, %s316
      %s319 = sphi 0, %s318
      %s333 = sphi 0, %s319
      %s337 = sphi 0, %s337
      %s339 = sphi 0, %s337
      %s340 = sphi 0, %s339
      %s354 = sphi 0, %s340
      %s358 = sphi 0, %s358
      %s360 = sphi 0, %s358
      %s361 = sphi 0, %s360
      %s375 = sphi 0, %s361
      %s379 = sphi 0, %s379
      %s381 = sphi 0, %s379
      %s382 = sphi 0, %s381
      %s396 = sphi 0, %s382
      %s400 = sphi 0, %s400
      %s402 = sphi 0, %s400
      %s403 = sphi 0, %s402
      %s417 = sphi 0, %s403
      %s421 = sphi 0, %s421
      %s423 = sphi 0, %s421
      %s424 = sphi 0, %s423
      %s438 = sphi 0, %s424
      %s442 = sphi 0, %s442
      %s444 = sphi 0, %s442
      %s445 = sphi 0, %s444
      %s459 = sphi 0, %s445
      %s463 = sphi 0, %s463
      %s465 = sphi 0, %s463
      %s466 = sphi 0, %s465
      %s480 = sphi 0, %s466
      %s486 = sphi 0, %s488
      %s489 = sphi 0, %s486
      %s490 = sphi 0, %s489
      %s506 = sphi 0, %s490
    $region4: #{tpu_custom_call.1} parent=1 // loop_header_branch
      %33 = sbr.rel (%p31) target = $region8
    $region5: #{tpu_custom_call.1} parent=1 // loop_body
      %s35 = ssub.s32 %s30, 1
      %s36 = ssub.s32 %s30, 2
      %s37 = sadd.s32 %s30, 1
      %s38 = ssub.s32 %s30, %s37
      %p39 = scmp.eq.s32.totalorder %s38, 0
      %s41 = sadd.s32 %s40, 1
      %s42 = scalar_select %p39, %s40, %s41
      %p45 = pneg %p39
      %p46 = scmp.eq.s32.totalorder %s30, 1
      %p47 = por %p45, %p46
      %p48 = scmp.ne.s32.totalorder %s40, %s43
      %p49 = scmp.eq.s32.totalorder %s30, 0
      %p50 = por %p48, %p49
      %p51 = scmp.ne.s32.totalorder %s40, %s43
      %p52 = scmp.eq.s32.totalorder %s35, 1
      %p53 = por %p51, %p52
      %p54 = scmp.ne.s32.totalorder %s43, %s44
      %p55 = scmp.eq.s32.totalorder %s35, 0
      %p56 = por %p54, %p55
      %p57 = scmp.ne.s32.totalorder %s43, %s44
      %p58 = scmp.eq.s32.totalorder %s36, 1
      %p59 = por %p57, %p58
      %p61 = scmp.ne.s32.totalorder %s44, %s60
      %p62 = scmp.eq.s32.totalorder %s36, 0
      %p63 = por %p61, %p62
      %s65 = sadd.s32 %s64, 1
      %p68 = scmp.eq.s32.totalorder %s30, 1
      %p69 = scmp.ne.s32.totalorder %s64, %s66
      %p70 = scmp.eq.s32.totalorder %s30, 0
      %p71 = por %p69, %p70
      %p72 = scmp.ne.s32.totalorder %s64, %s66
      %p73 = scmp.eq.s32.totalorder %s35, 1
      %p74 = por %p72, %p73
      %p75 = scmp.ne.s32.totalorder %s66, %s67
      %p76 = scmp.eq.s32.totalorder %s35, 0
      %p77 = por %p75, %p76
      %p78 = scmp.ne.s32.totalorder %s66, %s67
      %p79 = scmp.eq.s32.totalorder %s36, 1
      %p80 = por %p78, %p79
      %p82 = scmp.ne.s32.totalorder %s67, %s81
      %p83 = scmp.eq.s32.totalorder %s36, 0
      %p84 = por %p82, %p83
      %s86 = sadd.s32 %s85, 1
      %p89 = scmp.eq.s32.totalorder %s30, 1
      %p90 = scmp.ne.s32.totalorder %s85, %s87
      %p91 = scmp.eq.s32.totalorder %s30, 0
      %p92 = por %p90, %p91
      %p93 = scmp.ne.s32.totalorder %s85, %s87
      %p94 = scmp.eq.s32.totalorder %s35, 1
      %p95 = por %p93, %p94
      %p96 = scmp.ne.s32.totalorder %s87, %s88
      %p97 = scmp.eq.s32.totalorder %s35, 0
      %p98 = por %p96, %p97
      %p99 = scmp.ne.s32.totalorder %s87, %s88
      %p100 = scmp.eq.s32.totalorder %s36, 1
      %p101 = por %p99, %p100
      %p103 = scmp.ne.s32.totalorder %s88, %s102
      %p104 = scmp.eq.s32.totalorder %s36, 0
      %p105 = por %p103, %p104
      %s107 = sadd.s32 %s106, 1
      %p110 = scmp.eq.s32.totalorder %s30, 1
      %p111 = scmp.ne.s32.totalorder %s106, %s108
      %p112 = scmp.eq.s32.totalorder %s30, 0
      %p113 = por %p111, %p112
      %p114 = scmp.ne.s32.totalorder %s106, %s108
      %p115 = scmp.eq.s32.totalorder %s35, 1
      %p116 = por %p114, %p115
      %p117 = scmp.ne.s32.totalorder %s108, %s109
      %p118 = scmp.eq.s32.totalorder %s35, 0
      %p119 = por %p117, %p118
      %p120 = scmp.ne.s32.totalorder %s108, %s109
      %p121 = scmp.eq.s32.totalorder %s36, 1
      %p122 = por %p120, %p121
      %p124 = scmp.ne.s32.totalorder %s109, %s123
      %p125 = scmp.eq.s32.totalorder %s36, 0
      %p126 = por %p124, %p125
      %s128 = sadd.s32 %s127, 1
      %p131 = scmp.eq.s32.totalorder %s30, 1
      %p132 = scmp.ne.s32.totalorder %s127, %s129
      %p133 = scmp.eq.s32.totalorder %s30, 0
      %p134 = por %p132, %p133
      %p135 = scmp.ne.s32.totalorder %s127, %s129
      %p136 = scmp.eq.s32.totalorder %s35, 1
      %p137 = por %p135, %p136
      %p138 = scmp.ne.s32.totalorder %s129, %s130
      %p139 = scmp.eq.s32.totalorder %s35, 0
      %p140 = por %p138, %p139
      %p141 = scmp.ne.s32.totalorder %s129, %s130
      %p142 = scmp.eq.s32.totalorder %s36, 1
      %p143 = por %p141, %p142
      %p145 = scmp.ne.s32.totalorder %s130, %s144
      %p146 = scmp.eq.s32.totalorder %s36, 0
      %p147 = por %p145, %p146
      %s149 = sadd.s32 %s148, 1
      %p152 = scmp.eq.s32.totalorder %s30, 1
      %p153 = scmp.ne.s32.totalorder %s148, %s150
      %p154 = scmp.eq.s32.totalorder %s30, 0
      %p155 = por %p153, %p154
      %p156 = scmp.ne.s32.totalorder %s148, %s150
      %p157 = scmp.eq.s32.totalorder %s35, 1
      %p158 = por %p156, %p157
      %p159 = scmp.ne.s32.totalorder %s150, %s151
      %p160 = scmp.eq.s32.totalorder %s35, 0
      %p161 = por %p159, %p160
      %p162 = scmp.ne.s32.totalorder %s150, %s151
      %p163 = scmp.eq.s32.totalorder %s36, 1
      %p164 = por %p162, %p163
      %p166 = scmp.ne.s32.totalorder %s151, %s165
      %p167 = scmp.eq.s32.totalorder %s36, 0
      %p168 = por %p166, %p167
      %s170 = sadd.s32 %s169, 1
      %p173 = scmp.eq.s32.totalorder %s30, 1
      %p174 = scmp.ne.s32.totalorder %s169, %s171
      %p175 = scmp.eq.s32.totalorder %s30, 0
      %p176 = por %p174, %p175
      %p177 = scmp.ne.s32.totalorder %s169, %s171
      %p178 = scmp.eq.s32.totalorder %s35, 1
      %p179 = por %p177, %p178
      %p180 = scmp.ne.s32.totalorder %s171, %s172
      %p181 = scmp.eq.s32.totalorder %s35, 0
      %p182 = por %p180, %p181
      %p183 = scmp.ne.s32.totalorder %s171, %s172
      %p184 = scmp.eq.s32.totalorder %s36, 1
      %p185 = por %p183, %p184
      %p187 = scmp.ne.s32.totalorder %s172, %s186
      %p188 = scmp.eq.s32.totalorder %s36, 0
      %p189 = por %p187, %p188
      %s191 = sadd.s32 %s190, 1
      %p194 = scmp.eq.s32.totalorder %s30, 1
      %p195 = scmp.ne.s32.totalorder %s190, %s192
      %p196 = scmp.eq.s32.totalorder %s30, 0
      %p197 = por %p195, %p196
      %p198 = scmp.ne.s32.totalorder %s190, %s192
      %p199 = scmp.eq.s32.totalorder %s35, 1
      %p200 = por %p198, %p199
      %p201 = scmp.ne.s32.totalorder %s192, %s193
      %p202 = scmp.eq.s32.totalorder %s35, 0
      %p203 = por %p201, %p202
      %p204 = scmp.ne.s32.totalorder %s192, %s193
      %p205 = scmp.eq.s32.totalorder %s36, 1
      %p206 = por %p204, %p205
      %p208 = scmp.ne.s32.totalorder %s193, %s207
      %p209 = scmp.eq.s32.totalorder %s36, 0
      %p210 = por %p208, %p209
      %s212 = sadd.s32 %s211, 1
      %p215 = scmp.eq.s32.totalorder %s30, 1
      %p216 = scmp.ne.s32.totalorder %s211, %s213
      %p217 = scmp.eq.s32.totalorder %s30, 0
      %p218 = por %p216, %p217
      %p219 = scmp.ne.s32.totalorder %s211, %s213
      %p220 = scmp.eq.s32.totalorder %s35, 1
      %p221 = por %p219, %p220
      %p222 = scmp.ne.s32.totalorder %s213, %s214
      %p223 = scmp.eq.s32.totalorder %s35, 0
      %p224 = por %p222, %p223
      %p225 = scmp.ne.s32.totalorder %s213, %s214
      %p226 = scmp.eq.s32.totalorder %s36, 1
      %p227 = por %p225, %p226
      %p229 = scmp.ne.s32.totalorder %s214, %s228
      %p230 = scmp.eq.s32.totalorder %s36, 0
      %p231 = por %p229, %p230
      %s233 = sadd.s32 %s232, 1
      %p236 = scmp.eq.s32.totalorder %s30, 1
      %p237 = scmp.ne.s32.totalorder %s232, %s234
      %p238 = scmp.eq.s32.totalorder %s30, 0
      %p239 = por %p237, %p238
      %p240 = scmp.ne.s32.totalorder %s232, %s234
      %p241 = scmp.eq.s32.totalorder %s35, 1
      %p242 = por %p240, %p241
      %p243 = scmp.ne.s32.totalorder %s234, %s235
      %p244 = scmp.eq.s32.totalorder %s35, 0
      %p245 = por %p243, %p244
      %p246 = scmp.ne.s32.totalorder %s234, %s235
      %p247 = scmp.eq.s32.totalorder %s36, 1
      %p248 = por %p246, %p247
      %p250 = scmp.ne.s32.totalorder %s235, %s249
      %p251 = scmp.eq.s32.totalorder %s36, 0
      %p252 = por %p250, %p251
      %s254 = sadd.s32 %s253, 1
      %p257 = scmp.eq.s32.totalorder %s30, 1
      %p258 = scmp.ne.s32.totalorder %s253, %s255
      %p259 = scmp.eq.s32.totalorder %s30, 0
      %p260 = por %p258, %p259
      %p261 = scmp.ne.s32.totalorder %s253, %s255
      %p262 = scmp.eq.s32.totalorder %s35, 1
      %p263 = por %p261, %p262
      %p264 = scmp.ne.s32.totalorder %s255, %s256
      %p265 = scmp.eq.s32.totalorder %s35, 0
      %p266 = por %p264, %p265
      %p267 = scmp.ne.s32.totalorder %s255, %s256
      %p268 = scmp.eq.s32.totalorder %s36, 1
      %p269 = por %p267, %p268
      %p271 = scmp.ne.s32.totalorder %s256, %s270
      %p272 = scmp.eq.s32.totalorder %s36, 0
      %p273 = por %p271, %p272
      %s275 = sadd.s32 %s274, 1
      %p278 = scmp.eq.s32.totalorder %s30, 1
      %p279 = scmp.ne.s32.totalorder %s274, %s276
      %p280 = scmp.eq.s32.totalorder %s30, 0
      %p281 = por %p279, %p280
      %p282 = scmp.ne.s32.totalorder %s274, %s276
      %p283 = scmp.eq.s32.totalorder %s35, 1
      %p284 = por %p282, %p283
      %p285 = scmp.ne.s32.totalorder %s276, %s277
      %p286 = scmp.eq.s32.totalorder %s35, 0
      %p287 = por %p285, %p286
      %p288 = scmp.ne.s32.totalorder %s276, %s277
      %p289 = scmp.eq.s32.totalorder %s36, 1
      %p290 = por %p288, %p289
      %p292 = scmp.ne.s32.totalorder %s277, %s291
      %p293 = scmp.eq.s32.totalorder %s36, 0
      %p294 = por %p292, %p293
      %s296 = sadd.s32 %s295, 1
      %p299 = scmp.eq.s32.totalorder %s30, 1
      %p300 = scmp.ne.s32.totalorder %s295, %s297
      %p301 = scmp.eq.s32.totalorder %s30, 0
      %p302 = por %p300, %p301
      %p303 = scmp.ne.s32.totalorder %s295, %s297
      %p304 = scmp.eq.s32.totalorder %s35, 1
      %p305 = por %p303, %p304
      %p306 = scmp.ne.s32.totalorder %s297, %s298
      %p307 = scmp.eq.s32.totalorder %s35, 0
      %p308 = por %p306, %p307
      %p309 = scmp.ne.s32.totalorder %s297, %s298
      %p310 = scmp.eq.s32.totalorder %s36, 1
      %p311 = por %p309, %p310
      %p313 = scmp.ne.s32.totalorder %s298, %s312
      %p314 = scmp.eq.s32.totalorder %s36, 0
      %p315 = por %p313, %p314
      %s317 = sadd.s32 %s316, 1
      %p320 = scmp.eq.s32.totalorder %s30, 1
      %p321 = scmp.ne.s32.totalorder %s316, %s318
      %p322 = scmp.eq.s32.totalorder %s30, 0
      %p323 = por %p321, %p322
      %p324 = scmp.ne.s32.totalorder %s316, %s318
      %p325 = scmp.eq.s32.totalorder %s35, 1
      %p326 = por %p324, %p325
      %p327 = scmp.ne.s32.totalorder %s318, %s319
      %p328 = scmp.eq.s32.totalorder %s35, 0
      %p329 = por %p327, %p328
      %p330 = scmp.ne.s32.totalorder %s318, %s319
      %p331 = scmp.eq.s32.totalorder %s36, 1
      %p332 = por %p330, %p331
      %p334 = scmp.ne.s32.totalorder %s319, %s333
      %p335 = scmp.eq.s32.totalorder %s36, 0
      %p336 = por %p334, %p335
      %s338 = sadd.s32 %s337, 1
      %p341 = scmp.eq.s32.totalorder %s30, 1
      %p342 = scmp.ne.s32.totalorder %s337, %s339
      %p343 = scmp.eq.s32.totalorder %s30, 0
      %p344 = por %p342, %p343
      %p345 = scmp.ne.s32.totalorder %s337, %s339
      %p346 = scmp.eq.s32.totalorder %s35, 1
      %p347 = por %p345, %p346
      %p348 = scmp.ne.s32.totalorder %s339, %s340
      %p349 = scmp.eq.s32.totalorder %s35, 0
      %p350 = por %p348, %p349
      %p351 = scmp.ne.s32.totalorder %s339, %s340
      %p352 = scmp.eq.s32.totalorder %s36, 1
      %p353 = por %p351, %p352
      %p355 = scmp.ne.s32.totalorder %s340, %s354
      %p356 = scmp.eq.s32.totalorder %s36, 0
      %p357 = por %p355, %p356
      %s359 = sadd.s32 %s358, 1
      %p362 = scmp.eq.s32.totalorder %s30, 1
      %p363 = scmp.ne.s32.totalorder %s358, %s360
      %p364 = scmp.eq.s32.totalorder %s30, 0
      %p365 = por %p363, %p364
      %p366 = scmp.ne.s32.totalorder %s358, %s360
      %p367 = scmp.eq.s32.totalorder %s35, 1
      %p368 = por %p366, %p367
      %p369 = scmp.ne.s32.totalorder %s360, %s361
      %p370 = scmp.eq.s32.totalorder %s35, 0
      %p371 = por %p369, %p370
      %p372 = scmp.ne.s32.totalorder %s360, %s361
      %p373 = scmp.eq.s32.totalorder %s36, 1
      %p374 = por %p372, %p373
      %p376 = scmp.ne.s32.totalorder %s361, %s375
      %p377 = scmp.eq.s32.totalorder %s36, 0
      %p378 = por %p376, %p377
      %s380 = sadd.s32 %s379, 1
      %p383 = scmp.eq.s32.totalorder %s30, 1
      %p384 = scmp.ne.s32.totalorder %s379, %s381
      %p385 = scmp.eq.s32.totalorder %s30, 0
      %p386 = por %p384, %p385
      %p387 = scmp.ne.s32.totalorder %s379, %s381
      %p388 = scmp.eq.s32.totalorder %s35, 1
      %p389 = por %p387, %p388
      %p390 = scmp.ne.s32.totalorder %s381, %s382
      %p391 = scmp.eq.s32.totalorder %s35, 0
      %p392 = por %p390, %p391
      %p393 = scmp.ne.s32.totalorder %s381, %s382
      %p394 = scmp.eq.s32.totalorder %s36, 1
      %p395 = por %p393, %p394
      %p397 = scmp.ne.s32.totalorder %s382, %s396
      %p398 = scmp.eq.s32.totalorder %s36, 0
      %p399 = por %p397, %p398
      %s401 = sadd.s32 %s400, 1
      %p404 = scmp.eq.s32.totalorder %s30, 1
      %p405 = scmp.ne.s32.totalorder %s400, %s402
      %p406 = scmp.eq.s32.totalorder %s30, 0
      %p407 = por %p405, %p406
      %p408 = scmp.ne.s32.totalorder %s400, %s402
      %p409 = scmp.eq.s32.totalorder %s35, 1
      %p410 = por %p408, %p409
      %p411 = scmp.ne.s32.totalorder %s402, %s403
      %p412 = scmp.eq.s32.totalorder %s35, 0
      %p413 = por %p411, %p412
      %p414 = scmp.ne.s32.totalorder %s402, %s403
      %p415 = scmp.eq.s32.totalorder %s36, 1
      %p416 = por %p414, %p415
      %p418 = scmp.ne.s32.totalorder %s403, %s417
      %p419 = scmp.eq.s32.totalorder %s36, 0
      %p420 = por %p418, %p419
      %s422 = sadd.s32 %s421, 1
      %p425 = scmp.eq.s32.totalorder %s30, 1
      %p426 = scmp.ne.s32.totalorder %s421, %s423
      %p427 = scmp.eq.s32.totalorder %s30, 0
      %p428 = por %p426, %p427
      %p429 = scmp.ne.s32.totalorder %s421, %s423
      %p430 = scmp.eq.s32.totalorder %s35, 1
      %p431 = por %p429, %p430
      %p432 = scmp.ne.s32.totalorder %s423, %s424
      %p433 = scmp.eq.s32.totalorder %s35, 0
      %p434 = por %p432, %p433
      %p435 = scmp.ne.s32.totalorder %s423, %s424
      %p436 = scmp.eq.s32.totalorder %s36, 1
      %p437 = por %p435, %p436
      %p439 = scmp.ne.s32.totalorder %s424, %s438
      %p440 = scmp.eq.s32.totalorder %s36, 0
      %p441 = por %p439, %p440
      %s443 = sadd.s32 %s442, 1
      %p446 = scmp.eq.s32.totalorder %s30, 1
      %p447 = scmp.ne.s32.totalorder %s442, %s444
      %p448 = scmp.eq.s32.totalorder %s30, 0
      %p449 = por %p447, %p448
      %p450 = scmp.ne.s32.totalorder %s442, %s444
      %p451 = scmp.eq.s32.totalorder %s35, 1
      %p452 = por %p450, %p451
      %p453 = scmp.ne.s32.totalorder %s444, %s445
      %p454 = scmp.eq.s32.totalorder %s35, 0
      %p455 = por %p453, %p454
      %p456 = scmp.ne.s32.totalorder %s444, %s445
      %p457 = scmp.eq.s32.totalorder %s36, 1
      %p458 = por %p456, %p457
      %p460 = scmp.ne.s32.totalorder %s445, %s459
      %p461 = scmp.eq.s32.totalorder %s36, 0
      %p462 = por %p460, %p461
      %s464 = sadd.s32 %s463, 1
      %p467 = scmp.eq.s32.totalorder %s30, 1
      %p468 = scmp.ne.s32.totalorder %s463, %s465
      %p469 = scmp.eq.s32.totalorder %s30, 0
      %p470 = por %p468, %p469
      %p471 = scmp.ne.s32.totalorder %s463, %s465
      %p472 = scmp.eq.s32.totalorder %s35, 1
      %p473 = por %p471, %p472
      %p474 = scmp.ne.s32.totalorder %s465, %s466
      %p475 = scmp.eq.s32.totalorder %s35, 0
      %p476 = por %p474, %p475
      %p477 = scmp.ne.s32.totalorder %s465, %s466
      %p478 = scmp.eq.s32.totalorder %s36, 1
      %p479 = por %p477, %p478
      %p481 = scmp.ne.s32.totalorder %s466, %s480
      %p482 = scmp.eq.s32.totalorder %s36, 0
      %p483 = por %p481, %p482
      %s484 = ssub.s32 %s30, %s37
      %p485 = scmp.eq.s32.totalorder %s484, 0
      %s487 = sadd.s32 %s486, 1
      %s488 = scalar_select %p485, %s486, %s487
      %p491 = pneg %p485
      %p492 = scmp.eq.s32.totalorder %s30, 1
      %p493 = por %p491, %p492
      %p494 = scmp.ne.s32.totalorder %s486, %s489
      %p495 = scmp.eq.s32.totalorder %s30, 0
      %p496 = por %p494, %p495
      %p497 = scmp.ne.s32.totalorder %s486, %s489
      %p498 = scmp.eq.s32.totalorder %s35, 1
      %p499 = por %p497, %p498
      %p500 = scmp.ne.s32.totalorder %s489, %s490
      %p501 = scmp.eq.s32.totalorder %s35, 0
      %p502 = por %p500, %p501
      %p503 = scmp.ne.s32.totalorder %s489, %s490
      %p504 = scmp.eq.s32.totalorder %s36, 1
      %p505 = por %p503, %p504
      %p507 = scmp.ne.s32.totalorder %s490, %s506
      %p508 = scmp.eq.s32.totalorder %s36, 0
      %p509 = por %p507, %p508
      %p510 = scmp.le.s32.totalorder 1, %s30
      %p511 = scmp.lt.s32.totalorder %s30, 3
      %p512 = pnand %p510, %p511
      %p513 = pneg %p512
      // Predicated region
      $region9: #{tpu_custom_call.1} parent=5 // pred_check
        _
      $region10: #{tpu_custom_call.1} parent=5 // pred_check_branch
        %515 = sbr.rel (%p512) target = $region12
      $region11: #{tpu_custom_call.1} parent=5 // pred_region
        %s516 = ssub.s32 %s30, 1
        // Predicated region
        $region13: #{tpu_custom_call.1} parent=11 // pred_check
          %p517 = pneg %p77
        $region14: #{tpu_custom_call.1} parent=11 // pred_check_branch
          %519 = sbr.rel (%p517) target = $region16
        $region15: #{tpu_custom_call.1} parent=11 // pred_region
          _
        $region16: #{tpu_custom_call.1} parent=11 // pred_fallthru
          _
        // Predicated region
        $region17: #{tpu_custom_call.1} parent=11 // pred_check
          %p520 = pneg %p98
        $region18: #{tpu_custom_call.1} parent=11 // pred_check_branch
          %522 = sbr.rel (%p520) target = $region20
        $region19: #{tpu_custom_call.1} parent=11 // pred_region
          _
        $region20: #{tpu_custom_call.1} parent=11 // pred_fallthru
          _
        // Predicated region
        $region21: #{tpu_custom_call.1} parent=11 // pred_check
          %p523 = pneg %p119
        $region22: #{tpu_custom_call.1} parent=11 // pred_check_branch
          %525 = sbr.rel (%p523) target = $region24
        $region23: #{tpu_custom_call.1} parent=11 // pred_region
          _
        $region24: #{tpu_custom_call.1} parent=11 // pred_fallthru
          _
        // Predicated region
        $region25: #{tpu_custom_call.1} parent=11 // pred_check
          %p526 = pneg %p140
        $region26: #{tpu_custom_call.1} parent=11 // pred_check_branch
          %528 = sbr.rel (%p526) target = $region28
        $region27: #{tpu_custom_call.1} parent=11 // pred_region
          _
        $region28: #{tpu_custom_call.1} parent=11 // pred_fallthru
          _
        // Predicated region
        $region29: #{tpu_custom_call.1} parent=11 // pred_check
          %p529 = pneg %p161
        $region30: #{tpu_custom_call.1} parent=11 // pred_check_branch
          %531 = sbr.rel (%p529) target = $region32
        $region31: #{tpu_custom_call.1} parent=11 // pred_region
          _
        $region32: #{tpu_custom_call.1} parent=11 // pred_fallthru
          _
        // Predicated region
        $region33: #{tpu_custom_call.1} parent=11 // pred_check
          %p532 = pneg %p182
        $region34: #{tpu_custom_call.1} parent=11 // pred_check_branch
          %534 = sbr.rel (%p532) target = $region36
        $region35: #{tpu_custom_call.1} parent=11 // pred_region
          _
        $region36: #{tpu_custom_call.1} parent=11 // pred_fallthru
          _
        // Predicated region
        $region37: #{tpu_custom_call.1} parent=11 // pred_check
          %p535 = pneg %p203
        $region38: #{tpu_custom_call.1} parent=11 // pred_check_branch
          %537 = sbr.rel (%p535) target = $region40
        $region39: #{tpu_custom_call.1} parent=11 // pred_region
          _
        $region40: #{tpu_custom_call.1} parent=11 // pred_fallthru
          _
        // Predicated region
        $region41: #{tpu_custom_call.1} parent=11 // pred_check
          %p538 = pneg %p224
        $region42: #{tpu_custom_call.1} parent=11 // pred_check_branch
          %540 = sbr.rel (%p538) target = $region44
        $region43: #{tpu_custom_call.1} parent=11 // pred_region
          _
        $region44: #{tpu_custom_call.1} parent=11 // pred_fallthru
          _
        // Predicated region
        $region45: #{tpu_custom_call.1} parent=11 // pred_check
          %p541 = pneg %p245
        $region46: #{tpu_custom_call.1} parent=11 // pred_check_branch
          %543 = sbr.rel (%p541) target = $region48
        $region47: #{tpu_custom_call.1} parent=11 // pred_region
          _
        $region48: #{tpu_custom_call.1} parent=11 // pred_fallthru
          _
        // Predicated region
        $region49: #{tpu_custom_call.1} parent=11 // pred_check
          %p544 = pneg %p266
        $region50: #{tpu_custom_call.1} parent=11 // pred_check_branch
          %546 = sbr.rel (%p544) target = $region52
        $region51: #{tpu_custom_call.1} parent=11 // pred_region
          _
        $region52: #{tpu_custom_call.1} parent=11 // pred_fallthru
          _
        // Predicated region
        $region53: #{tpu_custom_call.1} parent=11 // pred_check
          %p547 = pneg %p287
        $region54: #{tpu_custom_call.1} parent=11 // pred_check_branch
          %549 = sbr.rel (%p547) target = $region56
        $region55: #{tpu_custom_call.1} parent=11 // pred_region
          _
        $region56: #{tpu_custom_call.1} parent=11 // pred_fallthru
          _
        // Predicated region
        $region57: #{tpu_custom_call.1} parent=11 // pred_check
          %p550 = pneg %p308
        $region58: #{tpu_custom_call.1} parent=11 // pred_check_branch
          %552 = sbr.rel (%p550) target = $region60
        $region59: #{tpu_custom_call.1} parent=11 // pred_region
          _
        $region60: #{tpu_custom_call.1} parent=11 // pred_fallthru
          _
        // Predicated region
        $region61: #{tpu_custom_call.1} parent=11 // pred_check
          %p553 = pneg %p329
        $region62: #{tpu_custom_call.1} parent=11 // pred_check_branch
          %555 = sbr.rel (%p553) target = $region64
        $region63: #{tpu_custom_call.1} parent=11 // pred_region
          _
        $region64: #{tpu_custom_call.1} parent=11 // pred_fallthru
          _
        // Predicated region
        $region65: #{tpu_custom_call.1} parent=11 // pred_check
          %p556 = pneg %p350
        $region66: #{tpu_custom_call.1} parent=11 // pred_check_branch
          %558 = sbr.rel (%p556) target = $region68
        $region67: #{tpu_custom_call.1} parent=11 // pred_region
          _
        $region68: #{tpu_custom_call.1} parent=11 // pred_fallthru
          _
        // Predicated region
        $region69: #{tpu_custom_call.1} parent=11 // pred_check
          %p559 = pneg %p371
        $region70: #{tpu_custom_call.1} parent=11 // pred_check_branch
          %561 = sbr.rel (%p559) target = $region72
        $region71: #{tpu_custom_call.1} parent=11 // pred_region
          _
        $region72: #{tpu_custom_call.1} parent=11 // pred_fallthru
          _
        // Predicated region
        $region73: #{tpu_custom_call.1} parent=11 // pred_check
          %p562 = pneg %p392
        $region74: #{tpu_custom_call.1} parent=11 // pred_check_branch
          %564 = sbr.rel (%p562) target = $region76
        $region75: #{tpu_custom_call.1} parent=11 // pred_region
          _
        $region76: #{tpu_custom_call.1} parent=11 // pred_fallthru
          _
        // Predicated region
        $region77: #{tpu_custom_call.1} parent=11 // pred_check
          %p565 = pneg %p413
        $region78: #{tpu_custom_call.1} parent=11 // pred_check_branch
          %567 = sbr.rel (%p565) target = $region80
        $region79: #{tpu_custom_call.1} parent=11 // pred_region
          _
        $region80: #{tpu_custom_call.1} parent=11 // pred_fallthru
          _
        // Predicated region
        $region81: #{tpu_custom_call.1} parent=11 // pred_check
          %p568 = pneg %p434
        $region82: #{tpu_custom_call.1} parent=11 // pred_check_branch
          %570 = sbr.rel (%p568) target = $region84
        $region83: #{tpu_custom_call.1} parent=11 // pred_region
          _
        $region84: #{tpu_custom_call.1} parent=11 // pred_fallthru
          _
        // Predicated region
        $region85: #{tpu_custom_call.1} parent=11 // pred_check
          %p571 = pneg %p455
        $region86: #{tpu_custom_call.1} parent=11 // pred_check_branch
          %573 = sbr.rel (%p571) target = $region88
        $region87: #{tpu_custom_call.1} parent=11 // pred_region
          _
        $region88: #{tpu_custom_call.1} parent=11 // pred_fallthru
          _
        // Predicated region
        $region89: #{tpu_custom_call.1} parent=11 // pred_check
          %p574 = pneg %p476
        $region90: #{tpu_custom_call.1} parent=11 // pred_check_branch
          %576 = sbr.rel (%p574) target = $region92
        $region91: #{tpu_custom_call.1} parent=11 // pred_region
          _
        $region92: #{tpu_custom_call.1} parent=11 // pred_fallthru
          _
      $region12: #{tpu_custom_call.1} parent=5 // pred_fallthru
        _
      %p577 = scmp.lt.s32.totalorder %s30, 2
      // Predicated region
      $region93: #{tpu_custom_call.1} parent=5 // pred_check
        %p578 = pneg %p577
      $region94: #{tpu_custom_call.1} parent=5 // pred_check_branch
        %580 = sbr.rel (%p578) target = $region96
      $region95: #{tpu_custom_call.1} parent=5 // pred_region
        // Predicated region
        $region97: #{tpu_custom_call.1} parent=95 // pred_check
          %p581 = pneg %p50
        $region98: #{tpu_custom_call.1} parent=95 // pred_check_branch
          %583 = sbr.rel (%p581) target = $region100
        $region99: #{tpu_custom_call.1} parent=95 // pred_region
          %p584 = scmp.lt.s32.totalorder %s30, 1
          %s585 = scalar_select %p584, %s30, 1
          %s586 = smul.addr %s585, 2
          %s587 = smul.addr %s586, 8
          %s588 = scalar_lea.vmem %s0, %s587
        $region100: #{tpu_custom_call.1} parent=95 // pred_fallthru
          _
      $region96: #{tpu_custom_call.1} parent=5 // pred_fallthru
        _
      %p589 = scmp.le.s32.totalorder 1, %s30
      %p590 = scmp.lt.s32.totalorder %s30, 3
      %p591 = pnand %p589, %p590
      %p592 = pneg %p591
      // Predicated region
      $region101: #{tpu_custom_call.1} parent=5 // pred_check
        _
      $region102: #{tpu_custom_call.1} parent=5 // pred_check_branch
        %594 = sbr.rel (%p591) target = $region104
      $region103: #{tpu_custom_call.1} parent=5 // pred_region
        %s595 = ssub.s32 %s30, 1
        %p596 = scmp.lt.s32.totalorder %s35, 1
        %s597 = scalar_select %p596, %s35, 1
        %s598 = smul.addr %s597, 2
        %s599 = smul.addr %s598, 8
        %s600 = scalar_lea.vmem %s0, %s599
        %p601 = pneg %p56
        %p602 = pneg %p53
        %p603 = pneg %p77
        %p604 = pneg %p74
        %p605 = pneg %p98
        %p606 = pneg %p95
        %p607 = pneg %p119
        %p608 = pneg %p116
        %p609 = pneg %p140
        %p610 = pneg %p137
        %p611 = pneg %p161
        %p612 = pneg %p158
        %p613 = pneg %p182
        %p614 = pneg %p179
        %p615 = pneg %p203
        %p616 = pneg %p200
        %p617 = pneg %p224
        %p618 = pneg %p221
        %p619 = pneg %p245
        %p620 = pneg %p242
        %p621 = pneg %p266
        %p622 = pneg %p263
        %p623 = pneg %p287
        %p624 = pneg %p284
        %p625 = pneg %p308
        %p626 = pneg %p305
        %p627 = pneg %p329
        %p628 = pneg %p326
        %p629 = pneg %p350
        %p630 = pneg %p347
        %p631 = pneg %p371
        %p632 = pneg %p368
        %p633 = pneg %p392
        %p634 = pneg %p389
        %p635 = pneg %p413
        %p636 = pneg %p410
        %p637 = pneg %p434
        %p638 = pneg %p431
        %p639 = pneg %p455
        %p640 = pneg %p452
        %p641 = pneg %p476
        %p642 = pneg %p473
        %p643 = pneg %p502
        %p644 = pneg %p499
        %s645 = sand.u32 %s489, 1
        %s646 = scalar_lea.sflag [#allocation3], %s645
        %s647 = sand.u32 %s489, 1
        %s648 = smul.addr %s647, 4
        %s649 = scalar_lea.vmem [#allocation2], %s648
        %p650 = scmp.lt.s32.totalorder %s35, 1
        %s651 = scalar_select %p650, %s35, 1
        %s652 = smul.addr %s651, 2
        %s653 = smul.addr %s652, 8
        %s654 = scalar_lea.vmem %s0, %s653
        %v655 = vld [vmem:[%s654] sm:$0xff]
        %v656 = vld [vmem:[%s654 + $0x8] sm:$0xff]
        %v657 = vld [vmem:[%s1] sm:$0xff]
        %v658 = vld [vmem:[%s1 + $0x8] sm:$0xff]
        %v659 = vld [vmem:[%s2] sm:$0xf]
        %vm660 = vcmask 130048
        %v662 = vsel %vm660, %v657, 0
        %v665 = vsel %vm660, %v658, 0
        %667 = vmatprep.subr.mxu0 0.0
        %668 = vmatpush1.msra.mxu0 %v655
        %669 = vmatprep.subr.mxu0 0.0
        %670 = vmatpush1.msra.mxu0 %v656
        %671 = vmatprep.subr.mxu0 0.0
        %672 = vmatpush1.msra.mxu0 0.0
        %673 = vmatprep.subr.mxu0 0.0
        %674 = vmatpush1.msra.mxu0 0.0
        %675 = vmatprep.subr.mxu0 0.0
        %676 = vmatpush1.msra.mxu0 0.0
        %677 = vmatprep.subr.mxu0 0.0
        %678 = vmatpush1.msra.mxu0 0.0
        %679 = vmatprep.subr.mxu0 0.0
        %680 = vmatpush1.msra.mxu0 0.0
        %681 = vmatprep.subr.mxu0 0.0
        %682 = vmatpush1.msra.mxu0 0.0
        %683 = vmatprep.subr.mxu0 0.0
        %684 = vmatpush1.msra.mxu0 0.0
        %685 = vmatprep.subr.mxu0 0.0
        %686 = vmatpush1.msra.mxu0 0.0
        %687 = vmatprep.subr.mxu0 0.0
        %688 = vmatpush1.msra.mxu0 0.0
        %689 = vmatprep.subr.mxu0 0.0
        %690 = vmatpush1.msra.mxu0 0.0
        %691 = vmatprep.subr.mxu0 0.0
        %692 = vmatpush1.msra.mxu0 0.0
        %693 = vmatprep.subr.mxu0 0.0
        %694 = vmatpush1.msra.mxu0 0.0
        %695 = vmatprep.subr.mxu0 0.0
        %696 = vmatpush1.msra.mxu0 0.0
        %697 = vmatprep.subr.mxu0 0.0
        %698 = vmatpush1.msra.mxu0 0.0
        %699 = vmatprep.subr.mxu0 0.0
        %700 = vmatpush1.msra.mxu0 0.0
        %701 = vmatprep.subr.mxu0 0.0
        %702 = vmatpush1.msra.mxu0 0.0
        %703 = vmatprep.subr.mxu0 0.0
        %704 = vmatpush1.msra.mxu0 0.0
        %705 = vmatprep.subr.mxu0 0.0
        %706 = vmatpush1.msra.mxu0 0.0
        %707 = vmatprep.subr.mxu0 0.0
        %708 = vmatpush1.msra.mxu0 0.0
        %709 = vmatprep.subr.mxu0 0.0
        %710 = vmatpush1.msra.mxu0 0.0
        %711 = vmatprep.subr.mxu0 0.0
        %712 = vmatpush1.msra.mxu0 0.0
        %713 = vmatprep.subr.mxu0 0.0
        %714 = vmatpush1.msra.mxu0 0.0
        %715 = vmatprep.subr.mxu0 0.0
        %716 = vmatpush1.msra.mxu0 0.0
        %717 = vmatprep.subr.mxu0 0.0
        %718 = vmatpush1.msra.mxu0 0.0
        %719 = vmatprep.subr.mxu0 0.0
        %720 = vmatpush1.msra.mxu0 0.0
        %721 = vmatprep.subr.mxu0 0.0
        %722 = vmatpush1.msra.mxu0 0.0
        %723 = vmatprep.subr.mxu0 0.0
        %724 = vmatpush1.msra.mxu0 0.0
        %725 = vmatprep.subr.mxu0 0.0
        %726 = vmatpush1.msra.mxu0 0.0
        %727 = vmatprep.subr.mxu0 0.0
        %728 = vmatpush1.msra.mxu0 0.0
        %729 = vmatprep.subr.mxu0 0.0
        %730 = vmatpush1.msra.mxu0 0.0
        %731 = vmatprep.mubr.f32.mxu0 0.0
        %732 = vmatmul.mubr.f32.gmra.mrb[0].mxu0 %v662
        %v733 = vpop.f32.mrb[0].mxu0
        %v734 = vadd.f32 0.0, %v733
        %v735 = vpop.f32.mrb[0].mxu0
        %736 = vmatprep.mubr.f32.mxu0 0.0
        %737 = vmatmul.mubr.f32.gmra.mrb[0].mxu0 %v665
        %v738 = vpop.f32.mrb[0].mxu0
        %v739 = vadd.f32 0.0, %v738
        %v740 = vpop.f32.mrb[0].mxu0
        %741 = vdwg.mxu0
        %v742 = vld [vmem:[%s3] sm:$0xff]
        %v743 = vld [vmem:[%s3 + $0x8] sm:$0xff]
        %v744 = vld [vmem:[%s3 + $0x10] sm:$0xff]
        %v745 = vld [vmem:[%s3 + $0x18] sm:$0xff]
        %v746 = vld [vmem:[%s4] sm:$0x1]
        %v747 = vld [vmem:[%s5] sm:$0xff]
        %v748 = vld [vmem:[%s5 + $0x8] sm:$0xff]
        %v749 = vld [vmem:[%s5 + $0x10] sm:$0xff]
        %v750 = vld [vmem:[%s5 + $0x18] sm:$0xff]
        %v751 = vld [vmem:[%s6] sm:$0x1]
        %v752 = vld [vmem:[%s7] sm:$0xff]
        %v753 = vld [vmem:[%s7 + $0x8] sm:$0xff]
        %v754 = vld [vmem:[%s7 + $0x10] sm:$0xff]
        %v755 = vld [vmem:[%s7 + $0x18] sm:$0xff]
        %v756 = vld [vmem:[%s8] sm:$0x1]
        %v757 = vld [vmem:[%s9] sm:$0xff]
        %v758 = vld [vmem:[%s9 + $0x8] sm:$0xff]
        %v759 = vld [vmem:[%s9 + $0x10] sm:$0xff]
        %v760 = vld [vmem:[%s9 + $0x18] sm:$0xff]
        %v761 = vld [vmem:[%s9 + $0x20] sm:$0xff]
        %v762 = vld [vmem:[%s9 + $0x28] sm:$0xff]
        %v763 = vld [vmem:[%s9 + $0x30] sm:$0xff]
        %v764 = vld [vmem:[%s9 + $0x38] sm:$0xff]
        %v765 = vld [vmem:[%s9 + $0x40] sm:$0xff]
        %v766 = vld [vmem:[%s9 + $0x48] sm:$0xff]
        %v767 = vld [vmem:[%s9 + $0x50] sm:$0xff]
        %v768 = vld [vmem:[%s9 + $0x58] sm:$0xff]
        %v769 = vld [vmem:[%s9 + $0x60] sm:$0xff]
        %v770 = vld [vmem:[%s9 + $0x68] sm:$0xff]
        %v771 = vld [vmem:[%s9 + $0x70] sm:$0xff]
        %v772 = vld [vmem:[%s9 + $0x78] sm:$0xff]
        %v773 = vld [vmem:[%s10] sm:$0x1]
        %v774 = vld [vmem:[%s11] sm:$0xf]
        %v776 = vlaneseq
        %v777 = vshrl.u32 %v776, 7
        %v778 = vsub.s32 0, %v777
        %v779 = vrot.slane %v746, %v778
        %vm781 = vcmask 261120
        %v783 = vsel %vm781, %v734, 0
        %v786 = vsel %vm781, %v739, 0
        %788 = vmatprep.subr.mxu0 0.0
        %789 = vmatpush1.msra.mxu0 %v742
        %790 = vmatprep.subr.mxu0 0.0
        %791 = vmatpush1.msra.mxu0 %v743
        %792 = vmatprep.subr.mxu0 0.0
        %793 = vmatpush1.msra.mxu0 %v744
        %794 = vmatprep.subr.mxu0 0.0
        %795 = vmatpush1.msra.mxu0 %v745
        %796 = vmatprep.subr.mxu0 0.0
        %797 = vmatpush1.msra.mxu0 0.0
        %798 = vmatprep.subr.mxu0 0.0
        %799 = vmatpush1.msra.mxu0 0.0
        %800 = vmatprep.subr.mxu0 0.0
        %801 = vmatpush1.msra.mxu0 0.0
        %802 = vmatprep.subr.mxu0 0.0
        %803 = vmatpush1.msra.mxu0 0.0
        %804 = vmatprep.subr.mxu0 0.0
        %805 = vmatpush1.msra.mxu0 0.0
        %806 = vmatprep.subr.mxu0 0.0
        %807 = vmatpush1.msra.mxu0 0.0
        %808 = vmatprep.subr.mxu0 0.0
        %809 = vmatpush1.msra.mxu0 0.0
        %810 = vmatprep.subr.mxu0 0.0
        %811 = vmatpush1.msra.mxu0 0.0
        %812 = vmatprep.subr.mxu0 0.0
        %813 = vmatpush1.msra.mxu0 0.0
        %814 = vmatprep.subr.mxu0 0.0
        %815 = vmatpush1.msra.mxu0 0.0
        %816 = vmatprep.subr.mxu0 0.0
        %817 = vmatpush1.msra.mxu0 0.0
        %818 = vmatprep.subr.mxu0 0.0
        %819 = vmatpush1.msra.mxu0 0.0
        %820 = vmatprep.subr.mxu0 0.0
        %821 = vmatpush1.msra.mxu0 0.0
        %822 = vmatprep.subr.mxu0 0.0
        %823 = vmatpush1.msra.mxu0 0.0
        %824 = vmatprep.subr.mxu0 0.0
        %825 = vmatpush1.msra.mxu0 0.0
        %826 = vmatprep.subr.mxu0 0.0
        %827 = vmatpush1.msra.mxu0 0.0
        %828 = vmatprep.subr.mxu0 0.0
        %829 = vmatpush1.msra.mxu0 0.0
        %830 = vmatprep.subr.mxu0 0.0
        %831 = vmatpush1.msra.mxu0 0.0
        %832 = vmatprep.subr.mxu0 0.0
        %833 = vmatpush1.msra.mxu0 0.0
        %834 = vmatprep.subr.mxu0 0.0
        %835 = vmatpush1.msra.mxu0 0.0
        %836 = vmatprep.subr.mxu0 0.0
        %837 = vmatpush1.msra.mxu0 0.0
        %838 = vmatprep.subr.mxu0 0.0
        %839 = vmatpush1.msra.mxu0 0.0
        %840 = vmatprep.subr.mxu0 0.0
        %841 = vmatpush1.msra.mxu0 0.0
        %842 = vmatprep.subr.mxu0 0.0
        %843 = vmatpush1.msra.mxu0 0.0
        %844 = vmatprep.subr.mxu0 0.0
        %845 = vmatpush1.msra.mxu0 0.0
        %846 = vmatprep.subr.mxu0 0.0
        %847 = vmatpush1.msra.mxu0 0.0
        %848 = vmatprep.subr.mxu0 0.0
        %849 = vmatpush1.msra.mxu0 0.0
        %850 = vmatprep.subr.mxu0 0.0
        %851 = vmatpush1.msra.mxu0 0.0
        %852 = vmatprep.mubr.f32.mxu0 0.0
        %853 = vmatmul.mubr.f32.gmra.mrb[0].mxu0 %v783
        %v854 = vpop.f32.mrb[0].mxu0
        %v855 = vadd.f32 %v779, %v854
        %v856 = vpop.f32.mrb[0].mxu0
        %857 = vmatprep.mubr.f32.mxu0 0.0
        %858 = vmatmul.mubr.f32.gmra.mrb[0].mxu0 %v786
        %v859 = vpop.f32.mrb[0].mxu0
        %v860 = vadd.f32 %v779, %v859
        %v861 = vpop.f32.mrb[0].mxu0
        %862 = vdwg.mxu0
        %864 = vrot.lane.b32.xlu0 %v855, 96
        %v865 = vpop.permute.xlu0 %864
        %v866 = vsel %vm660, %v855, 0
        %v868 = vsel %vm660, %v865, 0
        %870 = vmatprep.subr.mxu0 0.0
        %871 = vmatpush1.xpose.msra.mxu0 %v868
        %872 = vmatprep.subr.mxu0 0.0
        %873 = vmatpush1.xpose.msra.mxu0 0.0
        %874 = vmatprep.subr.mxu0 0.0
        %875 = vmatpush1.xpose.msra.mxu0 0.0
        %876 = vmatprep.subr.mxu0 0.0
        %877 = vmatpush1.xpose.msra.mxu0 0.0
        %878 = vmatprep.subr.mxu0 0.0
        %879 = vmatpush1.xpose.msra.mxu0 0.0
        %880 = vmatprep.subr.mxu0 0.0
        %881 = vmatpush1.xpose.msra.mxu0 0.0
        %882 = vmatprep.subr.mxu0 0.0
        %883 = vmatpush1.xpose.msra.mxu0 0.0
        %884 = vmatprep.subr.mxu0 0.0
        %885 = vmatpush1.xpose.msra.mxu0 0.0
        %886 = vmatprep.subr.mxu0 0.0
        %887 = vmatpush1.xpose.msra.mxu0 0.0
        %888 = vmatprep.subr.mxu0 0.0
        %889 = vmatpush1.xpose.msra.mxu0 0.0
        %890 = vmatprep.subr.mxu0 0.0
        %891 = vmatpush1.xpose.msra.mxu0 0.0
        %892 = vmatprep.subr.mxu0 0.0
        %893 = vmatpush1.xpose.msra.mxu0 0.0
        %894 = vmatprep.subr.mxu0 0.0
        %895 = vmatpush1.xpose.msra.mxu0 0.0
        %896 = vmatprep.subr.mxu0 0.0
        %897 = vmatpush1.xpose.msra.mxu0 0.0
        %898 = vmatprep.subr.mxu0 0.0
        %899 = vmatpush1.xpose.msra.mxu0 0.0
        %900 = vmatprep.subr.mxu0 0.0
        %901 = vmatpush1.xpose.msra.mxu0 0.0
        %902 = vmatprep.subr.mxu0 0.0
        %903 = vmatpush1.xpose.msra.mxu0 0.0
        %904 = vmatprep.subr.mxu0 0.0
        %905 = vmatpush1.xpose.msra.mxu0 0.0
        %906 = vmatprep.subr.mxu0 0.0
        %907 = vmatpush1.xpose.msra.mxu0 0.0
        %908 = vmatprep.subr.mxu0 0.0
        %909 = vmatpush1.xpose.msra.mxu0 0.0
        %910 = vmatprep.subr.mxu0 0.0
        %911 = vmatpush1.xpose.msra.mxu0 0.0
        %912 = vmatprep.subr.mxu0 0.0
        %913 = vmatpush1.xpose.msra.mxu0 0.0
        %914 = vmatprep.subr.mxu0 0.0
        %915 = vmatpush1.xpose.msra.mxu0 0.0
        %916 = vmatprep.subr.mxu0 0.0
        %917 = vmatpush1.xpose.msra.mxu0 0.0
        %918 = vmatprep.subr.mxu0 0.0
        %919 = vmatpush1.xpose.msra.mxu0 0.0
        %920 = vmatprep.subr.mxu0 0.0
        %921 = vmatpush1.xpose.msra.mxu0 0.0
        %922 = vmatprep.subr.mxu0 0.0
        %923 = vmatpush1.xpose.msra.mxu0 0.0
        %924 = vmatprep.subr.mxu0 0.0
        %925 = vmatpush1.xpose.msra.mxu0 0.0
        %926 = vmatprep.subr.mxu0 0.0
        %927 = vmatpush1.xpose.msra.mxu0 0.0
        %928 = vmatprep.subr.mxu0 0.0
        %929 = vmatpush1.xpose.msra.mxu0 0.0
        %930 = vmatprep.subr.mxu0 0.0
        %931 = vmatpush1.xpose.msra.mxu0 0.0
        %932 = vmatprep.subr.mxu0 0.0
        %933 = vmatpush1.xpose.msra.mxu0 0.0
        %934 = vmatprep.mubr.f32.mxu0 0.0
        %935 = vmatmul.mubr.f32.gmra.mrb[0].mxu0 %v866
        %v936 = vpop.f32.mrb[0].mxu0
        %v937 = vadd.f32 0.0, %v936
        %v938 = vpop.f32.mrb[0].mxu0
        %939 = vdwg.mxu0
        %941 = vrot.lane.b32.xlu0 %v860, 96
        %v942 = vpop.permute.xlu0 %941
        %v943 = vsel %vm660, %v860, 0
        %v945 = vsel %vm660, %v942, 0
        %947 = vmatprep.subr.mxu0 0.0
        %948 = vmatpush1.xpose.msra.mxu0 %v945
        %949 = vmatprep.subr.mxu0 0.0
        %950 = vmatpush1.xpose.msra.mxu0 0.0
        %951 = vmatprep.subr.mxu0 0.0
        %952 = vmatpush1.xpose.msra.mxu0 0.0
        %953 = vmatprep.subr.mxu0 0.0
        %954 = vmatpush1.xpose.msra.mxu0 0.0
        %955 = vmatprep.subr.mxu0 0.0
        %956 = vmatpush1.xpose.msra.mxu0 0.0
        %957 = vmatprep.subr.mxu0 0.0
        %958 = vmatpush1.xpose.msra.mxu0 0.0
        %959 = vmatprep.subr.mxu0 0.0
        %960 = vmatpush1.xpose.msra.mxu0 0.0
        %961 = vmatprep.subr.mxu0 0.0
        %962 = vmatpush1.xpose.msra.mxu0 0.0
        %963 = vmatprep.subr.mxu0 0.0
        %964 = vmatpush1.xpose.msra.mxu0 0.0
        %965 = vmatprep.subr.mxu0 0.0
        %966 = vmatpush1.xpose.msra.mxu0 0.0
        %967 = vmatprep.subr.mxu0 0.0
        %968 = vmatpush1.xpose.msra.mxu0 0.0
        %969 = vmatprep.subr.mxu0 0.0
        %970 = vmatpush1.xpose.msra.mxu0 0.0
        %971 = vmatprep.subr.mxu0 0.0
        %972 = vmatpush1.xpose.msra.mxu0 0.0
        %973 = vmatprep.subr.mxu0 0.0
        %974 = vmatpush1.xpose.msra.mxu0 0.0
        %975 = vmatprep.subr.mxu0 0.0
        %976 = vmatpush1.xpose.msra.mxu0 0.0
        %977 = vmatprep.subr.mxu0 0.0
        %978 = vmatpush1.xpose.msra.mxu0 0.0
        %979 = vmatprep.subr.mxu0 0.0
        %980 = vmatpush1.xpose.msra.mxu0 0.0
        %981 = vmatprep.subr.mxu0 0.0
        %982 = vmatpush1.xpose.msra.mxu0 0.0
        %983 = vmatprep.subr.mxu0 0.0
        %984 = vmatpush1.xpose.msra.mxu0 0.0
        %985 = vmatprep.subr.mxu0 0.0
        %986 = vmatpush1.xpose.msra.mxu0 0.0
        %987 = vmatprep.subr.mxu0 0.0
        %988 = vmatpush1.xpose.msra.mxu0 0.0
        %989 = vmatprep.subr.mxu0 0.0
        %990 = vmatpush1.xpose.msra.mxu0 0.0
        %991 = vmatprep.subr.mxu0 0.0
        %992 = vmatpush1.xpose.msra.mxu0 0.0
        %993 = vmatprep.subr.mxu0 0.0
        %994 = vmatpush1.xpose.msra.mxu0 0.0
        %995 = vmatprep.subr.mxu0 0.0
        %996 = vmatpush1.xpose.msra.mxu0 0.0
        %997 = vmatprep.subr.mxu0 0.0
        %998 = vmatpush1.xpose.msra.mxu0 0.0
        %999 = vmatprep.subr.mxu0 0.0
        %1000 = vmatpush1.xpose.msra.mxu0 0.0
        %1001 = vmatprep.subr.mxu0 0.0
        %1002 = vmatpush1.xpose.msra.mxu0 0.0
        %1003 = vmatprep.subr.mxu0 0.0
        %1004 = vmatpush1.xpose.msra.mxu0 0.0
        %1005 = vmatprep.subr.mxu0 0.0
        %1006 = vmatpush1.xpose.msra.mxu0 0.0
        %1007 = vmatprep.subr.mxu0 0.0
        %1008 = vmatpush1.xpose.msra.mxu0 0.0
        %1009 = vmatprep.subr.mxu0 0.0
        %1010 = vmatpush1.xpose.msra.mxu0 0.0
        %1011 = vmatprep.mubr.f32.mxu0 0.0
        %1012 = vmatmul.mubr.f32.gmra.mrb[0].mxu0 %v943
        %v1013 = vpop.f32.mrb[0].mxu0
        %v1014 = vadd.f32 0.0, %v1013
        %v1015 = vpop.f32.mrb[0].mxu0
        %1016 = vdwg.mxu0
        %vm1017 = vcmask 64512
        %v1018 = vsel %vm1017, %v937, -inf
        %1019 = vmax.xlane.f32.xlu0 %v1018
        %v1020 = vpop.xlane.xlu0 %1019
        %v1021 = vsel %vm1017, %v1014, -inf
        %1022 = vmax.xlane.f32.xlu0 %v1021
        %v1023 = vpop.xlane.xlu0 %1022
        %v1024 = vsub.f32 %v937, %v1020
        %v1025 = vsub.f32 %v1014, %v1023
        %v1026 = vmul.f32 %v1024, 1.442695
        %v1027 = vpow.pop %v1026
        %v1028 = vmul.f32 %v1025, 1.442695
        %v1029 = vpow.pop %v1028
        %v1030 = vsel %vm1017, %v1027, 0.0
        %1031 = vadd.xlane.f32.xlu0 %v1030
        %v1032 = vpop.xlane.xlu0 %1031
        %v1033 = vsel %vm1017, %v1029, 0.0
        %1034 = vadd.xlane.f32.xlu0 %v1033
        %v1035 = vpop.xlane.xlu0 %1034
        %v1036 = vrcp.pop %v1032
        %v1037 = vrcp.pop %v1035
        %v1038 = vmul.f32 %v1027, %v1036
        %v1039 = vmul.f32 %v1029, %v1037
        %1040 = vrot.lane.b32.xlu0 %v855, 64
        %v1041 = vpop.permute.xlu0 %1040
        %v1044 = vsel %vm1017, %v1038, 0
        %1046 = vmatprep.subr.mxu0 0.0
        %1047 = vmatpush1.msra.mxu0 %v1041
        %1048 = vmatprep.subr.mxu0 0.0
        %1049 = vmatpush1.msra.mxu0 0.0
        %1050 = vmatprep.subr.mxu0 0.0
        %1051 = vmatpush1.msra.mxu0 0.0
        %1052 = vmatprep.subr.mxu0 0.0
        %1053 = vmatpush1.msra.mxu0 0.0
        %1054 = vmatprep.subr.mxu0 0.0
        %1055 = vmatpush1.msra.mxu0 0.0
        %1056 = vmatprep.subr.mxu0 0.0
        %1057 = vmatpush1.msra.mxu0 0.0
        %1058 = vmatprep.subr.mxu0 0.0
        %1059 = vmatpush1.msra.mxu0 0.0
        %1060 = vmatprep.subr.mxu0 0.0
        %1061 = vmatpush1.msra.mxu0 0.0
        %1062 = vmatprep.subr.mxu0 0.0
        %1063 = vmatpush1.msra.mxu0 0.0
        %1064 = vmatprep.subr.mxu0 0.0
        %1065 = vmatpush1.msra.mxu0 0.0
        %1066 = vmatprep.subr.mxu0 0.0
        %1067 = vmatpush1.msra.mxu0 0.0
        %1068 = vmatprep.subr.mxu0 0.0
        %1069 = vmatpush1.msra.mxu0 0.0
        %1070 = vmatprep.subr.mxu0 0.0
        %1071 = vmatpush1.msra.mxu0 0.0
        %1072 = vmatprep.subr.mxu0 0.0
        %1073 = vmatpush1.msra.mxu0 0.0
        %1074 = vmatprep.subr.mxu0 0.0
        %1075 = vmatpush1.msra.mxu0 0.0
        %1076 = vmatprep.subr.mxu0 0.0
        %1077 = vmatpush1.msra.mxu0 0.0
        %1078 = vmatprep.subr.mxu0 0.0
        %1079 = vmatpush1.msra.mxu0 0.0
        %1080 = vmatprep.subr.mxu0 0.0
        %1081 = vmatpush1.msra.mxu0 0.0
        %1082 = vmatprep.subr.mxu0 0.0
        %1083 = vmatpush1.msra.mxu0 0.0
        %1084 = vmatprep.subr.mxu0 0.0
        %1085 = vmatpush1.msra.mxu0 0.0
        %1086 = vmatprep.subr.mxu0 0.0
        %1087 = vmatpush1.msra.mxu0 0.0
        %1088 = vmatprep.subr.mxu0 0.0
        %1089 = vmatpush1.msra.mxu0 0.0
        %1090 = vmatprep.subr.mxu0 0.0
        %1091 = vmatpush1.msra.mxu0 0.0
        %1092 = vmatprep.subr.mxu0 0.0
        %1093 = vmatpush1.msra.mxu0 0.0
        %1094 = vmatprep.subr.mxu0 0.0
        %1095 = vmatpush1.msra.mxu0 0.0
        %1096 = vmatprep.subr.mxu0 0.0
        %1097 = vmatpush1.msra.mxu0 0.0
        %1098 = vmatprep.subr.mxu0 0.0
        %1099 = vmatpush1.msra.mxu0 0.0
        %1100 = vmatprep.subr.mxu0 0.0
        %1101 = vmatpush1.msra.mxu0 0.0
        %1102 = vmatprep.subr.mxu0 0.0
        %1103 = vmatpush1.msra.mxu0 0.0
        %1104 = vmatprep.subr.mxu0 0.0
        %1105 = vmatpush1.msra.mxu0 0.0
        %1106 = vmatprep.subr.mxu0 0.0
        %1107 = vmatpush1.msra.mxu0 0.0
        %1108 = vmatprep.subr.mxu0 0.0
        %1109 = vmatpush1.msra.mxu0 0.0
        %1110 = vmatprep.mubr.f32.mxu0 0.0
        %1111 = vmatmul.mubr.f32.gmra.mrb[0].mxu0 %v1044
        %v1112 = vpop.f32.mrb[0].mxu0
        %v1113 = vadd.f32 0.0, %v1112
        %v1114 = vpop.f32.mrb[0].mxu0
        %1115 = vdwg.mxu0
        %1116 = vrot.lane.b32.xlu0 %v860, 64
        %v1117 = vpop.permute.xlu0 %1116
        %v1120 = vsel %vm1017, %v1039, 0
        %1122 = vmatprep.subr.mxu0 0.0
        %1123 = vmatpush1.msra.mxu0 %v1117
        %1124 = vmatprep.subr.mxu0 0.0
        %1125 = vmatpush1.msra.mxu0 0.0
        %1126 = vmatprep.subr.mxu0 0.0
        %1127 = vmatpush1.msra.mxu0 0.0
        %1128 = vmatprep.subr.mxu0 0.0
        %1129 = vmatpush1.msra.mxu0 0.0
        %1130 = vmatprep.subr.mxu0 0.0
        %1131 = vmatpush1.msra.mxu0 0.0
        %1132 = vmatprep.subr.mxu0 0.0
        %1133 = vmatpush1.msra.mxu0 0.0
        %1134 = vmatprep.subr.mxu0 0.0
        %1135 = vmatpush1.msra.mxu0 0.0
        %1136 = vmatprep.subr.mxu0 0.0
        %1137 = vmatpush1.msra.mxu0 0.0
        %1138 = vmatprep.subr.mxu0 0.0
        %1139 = vmatpush1.msra.mxu0 0.0
        %1140 = vmatprep.subr.mxu0 0.0
        %1141 = vmatpush1.msra.mxu0 0.0
        %1142 = vmatprep.subr.mxu0 0.0
        %1143 = vmatpush1.msra.mxu0 0.0
        %1144 = vmatprep.subr.mxu0 0.0
        %1145 = vmatpush1.msra.mxu0 0.0
        %1146 = vmatprep.subr.mxu0 0.0
        %1147 = vmatpush1.msra.mxu0 0.0
        %1148 = vmatprep.subr.mxu0 0.0
        %1149 = vmatpush1.msra.mxu0 0.0
        %1150 = vmatprep.subr.mxu0 0.0
        %1151 = vmatpush1.msra.mxu0 0.0
        %1152 = vmatprep.subr.mxu0 0.0
        %1153 = vmatpush1.msra.mxu0 0.0
        %1154 = vmatprep.subr.mxu0 0.0
        %1155 = vmatpush1.msra.mxu0 0.0
        %1156 = vmatprep.subr.mxu0 0.0
        %1157 = vmatpush1.msra.mxu0 0.0
        %1158 = vmatprep.subr.mxu0 0.0
        %1159 = vmatpush1.msra.mxu0 0.0
        %1160 = vmatprep.subr.mxu0 0.0
        %1161 = vmatpush1.msra.mxu0 0.0
        %1162 = vmatprep.subr.mxu0 0.0
        %1163 = vmatpush1.msra.mxu0 0.0
        %1164 = vmatprep.subr.mxu0 0.0
        %1165 = vmatpush1.msra.mxu0 0.0
        %1166 = vmatprep.subr.mxu0 0.0
        %1167 = vmatpush1.msra.mxu0 0.0
        %1168 = vmatprep.subr.mxu0 0.0
        %1169 = vmatpush1.msra.mxu0 0.0
        %1170 = vmatprep.subr.mxu0 0.0
        %1171 = vmatpush1.msra.mxu0 0.0
        %1172 = vmatprep.subr.mxu0 0.0
        %1173 = vmatpush1.msra.mxu0 0.0
        %1174 = vmatprep.subr.mxu0 0.0
        %1175 = vmatpush1.msra.mxu0 0.0
        %1176 = vmatprep.subr.mxu0 0.0
        %1177 = vmatpush1.msra.mxu0 0.0
        %1178 = vmatprep.subr.mxu0 0.0
        %1179 = vmatpush1.msra.mxu0 0.0
        %1180 = vmatprep.subr.mxu0 0.0
        %1181 = vmatpush1.msra.mxu0 0.0
        %1182 = vmatprep.subr.mxu0 0.0
        %1183 = vmatpush1.msra.mxu0 0.0
        %1184 = vmatprep.subr.mxu0 0.0
        %1185 = vmatpush1.msra.mxu0 0.0
        %1186 = vmatprep.mubr.f32.mxu0 0.0
        %1187 = vmatmul.mubr.f32.gmra.mrb[0].mxu0 %v1120
        %v1188 = vpop.f32.mrb[0].mxu0
        %v1189 = vadd.f32 0.0, %v1188
        %v1190 = vpop.f32.mrb[0].mxu0
        %1191 = vdwg.mxu0
        %1192 = vrot.lane.b32.xlu0 %v855, 112
        %v1193 = vpop.permute.xlu0 %1192
        %1194 = vrot.lane.b32.xlu0 %v855, 80
        %v1195 = vpop.permute.xlu0 %1194
        %v1196 = vsel %vm660, %v1193, 0
        %v1198 = vsel %vm660, %v1195, 0
        %1200 = vmatprep.subr.mxu0 0.0
        %1201 = vmatpush1.xpose.msra.mxu0 %v1198
        %1202 = vmatprep.subr.mxu0 0.0
        %1203 = vmatpush1.xpose.msra.mxu0 0.0
        %1204 = vmatprep.subr.mxu0 0.0
        %1205 = vmatpush1.xpose.msra.mxu0 0.0
        %1206 = vmatprep.subr.mxu0 0.0
        %1207 = vmatpush1.xpose.msra.mxu0 0.0
        %1208 = vmatprep.subr.mxu0 0.0
        %1209 = vmatpush1.xpose.msra.mxu0 0.0
        %1210 = vmatprep.subr.mxu0 0.0
        %1211 = vmatpush1.xpose.msra.mxu0 0.0
        %1212 = vmatprep.subr.mxu0 0.0
        %1213 = vmatpush1.xpose.msra.mxu0 0.0
        %1214 = vmatprep.subr.mxu0 0.0
        %1215 = vmatpush1.xpose.msra.mxu0 0.0
        %1216 = vmatprep.subr.mxu0 0.0
        %1217 = vmatpush1.xpose.msra.mxu0 0.0
        %1218 = vmatprep.subr.mxu0 0.0
        %1219 = vmatpush1.xpose.msra.mxu0 0.0
        %1220 = vmatprep.subr.mxu0 0.0
        %1221 = vmatpush1.xpose.msra.mxu0 0.0
        %1222 = vmatprep.subr.mxu0 0.0
        %1223 = vmatpush1.xpose.msra.mxu0 0.0
        %1224 = vmatprep.subr.mxu0 0.0
        %1225 = vmatpush1.xpose.msra.mxu0 0.0
        %1226 = vmatprep.subr.mxu0 0.0
        %1227 = vmatpush1.xpose.msra.mxu0 0.0
        %1228 = vmatprep.subr.mxu0 0.0
        %1229 = vmatpush1.xpose.msra.mxu0 0.0
        %1230 = vmatprep.subr.mxu0 0.0
        %1231 = vmatpush1.xpose.msra.mxu0 0.0
        %1232 = vmatprep.subr.mxu0 0.0
        %1233 = vmatpush1.xpose.msra.mxu0 0.0
        %1234 = vmatprep.subr.mxu0 0.0
        %1235 = vmatpush1.xpose.msra.mxu0 0.0
        %1236 = vmatprep.subr.mxu0 0.0
        %1237 = vmatpush1.xpose.msra.mxu0 0.0
        %1238 = vmatprep.subr.mxu0 0.0
        %1239 = vmatpush1.xpose.msra.mxu0 0.0
        %1240 = vmatprep.subr.mxu0 0.0
        %1241 = vmatpush1.xpose.msra.mxu0 0.0
        %1242 = vmatprep.subr.mxu0 0.0
        %1243 = vmatpush1.xpose.msra.mxu0 0.0
        %1244 = vmatprep.subr.mxu0 0.0
        %1245 = vmatpush1.xpose.msra.mxu0 0.0
        %1246 = vmatprep.subr.mxu0 0.0
        %1247 = vmatpush1.xpose.msra.mxu0 0.0
        %1248 = vmatprep.subr.mxu0 0.0
        %1249 = vmatpush1.xpose.msra.mxu0 0.0
        %1250 = vmatprep.subr.mxu0 0.0
        %1251 = vmatpush1.xpose.msra.mxu0 0.0
        %1252 = vmatprep.subr.mxu0 0.0
        %1253 = vmatpush1.xpose.msra.mxu0 0.0
        %1254 = vmatprep.subr.mxu0 0.0
        %1255 = vmatpush1.xpose.msra.mxu0 0.0
        %1256 = vmatprep.subr.mxu0 0.0
        %1257 = vmatpush1.xpose.msra.mxu0 0.0
        %1258 = vmatprep.subr.mxu0 0.0
        %1259 = vmatpush1.xpose.msra.mxu0 0.0
        %1260 = vmatprep.subr.mxu0 0.0
        %1261 = vmatpush1.xpose.msra.mxu0 0.0
        %1262 = vmatprep.subr.mxu0 0.0
        %1263 = vmatpush1.xpose.msra.mxu0 0.0
        %1264 = vmatprep.mubr.f32.mxu0 0.0
        %1265 = vmatmul.mubr.f32.gmra.mrb[0].mxu0 %v1196
        %v1266 = vpop.f32.mrb[0].mxu0
        %v1267 = vadd.f32 0.0, %v1266
        %v1268 = vpop.f32.mrb[0].mxu0
        %1269 = vdwg.mxu0
        %1270 = vrot.lane.b32.xlu0 %v860, 112
        %v1271 = vpop.permute.xlu0 %1270
        %1272 = vrot.lane.b32.xlu0 %v860, 80
        %v1273 = vpop.permute.xlu0 %1272
        %v1274 = vsel %vm660, %v1271, 0
        %v1276 = vsel %vm660, %v1273, 0
        %1278 = vmatprep.subr.mxu0 0.0
        %1279 = vmatpush1.xpose.msra.mxu0 %v1276
        %1280 = vmatprep.subr.mxu0 0.0
        %1281 = vmatpush1.xpose.msra.mxu0 0.0
        %1282 = vmatprep.subr.mxu0 0.0
        %1283 = vmatpush1.xpose.msra.mxu0 0.0
        %1284 = vmatprep.subr.mxu0 0.0
        %1285 = vmatpush1.xpose.msra.mxu0 0.0
        %1286 = vmatprep.subr.mxu0 0.0
        %1287 = vmatpush1.xpose.msra.mxu0 0.0
        %1288 = vmatprep.subr.mxu0 0.0
        %1289 = vmatpush1.xpose.msra.mxu0 0.0
        %1290 = vmatprep.subr.mxu0 0.0
        %1291 = vmatpush1.xpose.msra.mxu0 0.0
        %1292 = vmatprep.subr.mxu0 0.0
        %1293 = vmatpush1.xpose.msra.mxu0 0.0
        %1294 = vmatprep.subr.mxu0 0.0
        %1295 = vmatpush1.xpose.msra.mxu0 0.0
        %1296 = vmatprep.subr.mxu0 0.0
        %1297 = vmatpush1.xpose.msra.mxu0 0.0
        %1298 = vmatprep.subr.mxu0 0.0
        %1299 = vmatpush1.xpose.msra.mxu0 0.0
        %1300 = vmatprep.subr.mxu0 0.0
        %1301 = vmatpush1.xpose.msra.mxu0 0.0
        %1302 = vmatprep.subr.mxu0 0.0
        %1303 = vmatpush1.xpose.msra.mxu0 0.0
        %1304 = vmatprep.subr.mxu0 0.0
        %1305 = vmatpush1.xpose.msra.mxu0 0.0
        %1306 = vmatprep.subr.mxu0 0.0
        %1307 = vmatpush1.xpose.msra.mxu0 0.0
        %1308 = vmatprep.subr.mxu0 0.0
        %1309 = vmatpush1.xpose.msra.mxu0 0.0
        %1310 = vmatprep.subr.mxu0 0.0
        %1311 = vmatpush1.xpose.msra.mxu0 0.0
        %1312 = vmatprep.subr.mxu0 0.0
        %1313 = vmatpush1.xpose.msra.mxu0 0.0
        %1314 = vmatprep.subr.mxu0 0.0
        %1315 = vmatpush1.xpose.msra.mxu0 0.0
        %1316 = vmatprep.subr.mxu0 0.0
        %1317 = vmatpush1.xpose.msra.mxu0 0.0
        %1318 = vmatprep.subr.mxu0 0.0
        %1319 = vmatpush1.xpose.msra.mxu0 0.0
        %1320 = vmatprep.subr.mxu0 0.0
        %1321 = vmatpush1.xpose.msra.mxu0 0.0
        %1322 = vmatprep.subr.mxu0 0.0
        %1323 = vmatpush1.xpose.msra.mxu0 0.0
        %1324 = vmatprep.subr.mxu0 0.0
        %1325 = vmatpush1.xpose.msra.mxu0 0.0
        %1326 = vmatprep.subr.mxu0 0.0
        %1327 = vmatpush1.xpose.msra.mxu0 0.0
        %1328 = vmatprep.subr.mxu0 0.0
        %1329 = vmatpush1.xpose.msra.mxu0 0.0
        %1330 = vmatprep.subr.mxu0 0.0
        %1331 = vmatpush1.xpose.msra.mxu0 0.0
        %1332 = vmatprep.subr.mxu0 0.0
        %1333 = vmatpush1.xpose.msra.mxu0 0.0
        %1334 = vmatprep.subr.mxu0 0.0
        %1335 = vmatpush1.xpose.msra.mxu0 0.0
        %1336 = vmatprep.subr.mxu0 0.0
        %1337 = vmatpush1.xpose.msra.mxu0 0.0
        %1338 = vmatprep.subr.mxu0 0.0
        %1339 = vmatpush1.xpose.msra.mxu0 0.0
        %1340 = vmatprep.subr.mxu0 0.0
        %1341 = vmatpush1.xpose.msra.mxu0 0.0
        %1342 = vmatprep.mubr.f32.mxu0 0.0
        %1343 = vmatmul.mubr.f32.gmra.mrb[0].mxu0 %v1274
        %v1344 = vpop.f32.mrb[0].mxu0
        %v1345 = vadd.f32 0.0, %v1344
        %v1346 = vpop.f32.mrb[0].mxu0
        %1347 = vdwg.mxu0
        %v1348 = vsel %vm1017, %v1267, -inf
        %1349 = vmax.xlane.f32.xlu0 %v1348
        %v1350 = vpop.xlane.xlu0 %1349
        %v1351 = vsel %vm1017, %v1345, -inf
        %1352 = vmax.xlane.f32.xlu0 %v1351
        %v1353 = vpop.xlane.xlu0 %1352
        %v1354 = vsub.f32 %v1267, %v1350
        %v1355 = vsub.f32 %v1345, %v1353
        %v1356 = vmul.f32 %v1354, 1.442695
        %v1357 = vpow.pop %v1356
        %v1358 = vmul.f32 %v1355, 1.442695
        %v1359 = vpow.pop %v1358
        %v1360 = vsel %vm1017, %v1357, 0.0
        %1361 = vadd.xlane.f32.xlu0 %v1360
        %v1362 = vpop.xlane.xlu0 %1361
        %v1363 = vsel %vm1017, %v1359, 0.0
        %1364 = vadd.xlane.f32.xlu0 %v1363
        %v1365 = vpop.xlane.xlu0 %1364
        %v1366 = vrcp.pop %v1362
        %v1367 = vrcp.pop %v1365
        %v1368 = vmul.f32 %v1357, %v1366
        %v1369 = vmul.f32 %v1359, %v1367
        %1370 = vrot.lane.b32.xlu0 %v855, 48
        %v1371 = vpop.permute.xlu0 %1370
        %v1374 = vsel %vm1017, %v1368, 0
        %1376 = vmatprep.subr.mxu0 0.0
        %1377 = vmatpush1.msra.mxu0 %v1371
        %1378 = vmatprep.subr.mxu0 0.0
        %1379 = vmatpush1.msra.mxu0 0.0
        %1380 = vmatprep.subr.mxu0 0.0
        %1381 = vmatpush1.msra.mxu0 0.0
        %1382 = vmatprep.subr.mxu0 0.0
        %1383 = vmatpush1.msra.mxu0 0.0
        %1384 = vmatprep.subr.mxu0 0.0
        %1385 = vmatpush1.msra.mxu0 0.0
        %1386 = vmatprep.subr.mxu0 0.0
        %1387 = vmatpush1.msra.mxu0 0.0
        %1388 = vmatprep.subr.mxu0 0.0
        %1389 = vmatpush1.msra.mxu0 0.0
        %1390 = vmatprep.subr.mxu0 0.0
        %1391 = vmatpush1.msra.mxu0 0.0
        %1392 = vmatprep.subr.mxu0 0.0
        %1393 = vmatpush1.msra.mxu0 0.0
        %1394 = vmatprep.subr.mxu0 0.0
        %1395 = vmatpush1.msra.mxu0 0.0
        %1396 = vmatprep.subr.mxu0 0.0
        %1397 = vmatpush1.msra.mxu0 0.0
        %1398 = vmatprep.subr.mxu0 0.0
        %1399 = vmatpush1.msra.mxu0 0.0
        %1400 = vmatprep.subr.mxu0 0.0
        %1401 = vmatpush1.msra.mxu0 0.0
        %1402 = vmatprep.subr.mxu0 0.0
        %1403 = vmatpush1.msra.mxu0 0.0
        %1404 = vmatprep.subr.mxu0 0.0
        %1405 = vmatpush1.msra.mxu0 0.0
        %1406 = vmatprep.subr.mxu0 0.0
        %1407 = vmatpush1.msra.mxu0 0.0
        %1408 = vmatprep.subr.mxu0 0.0
        %1409 = vmatpush1.msra.mxu0 0.0
        %1410 = vmatprep.subr.mxu0 0.0
        %1411 = vmatpush1.msra.mxu0 0.0
        %1412 = vmatprep.subr.mxu0 0.0
        %1413 = vmatpush1.msra.mxu0 0.0
        %1414 = vmatprep.subr.mxu0 0.0
        %1415 = vmatpush1.msra.mxu0 0.0
        %1416 = vmatprep.subr.mxu0 0.0
        %1417 = vmatpush1.msra.mxu0 0.0
        %1418 = vmatprep.subr.mxu0 0.0
        %1419 = vmatpush1.msra.mxu0 0.0
        %1420 = vmatprep.subr.mxu0 0.0
        %1421 = vmatpush1.msra.mxu0 0.0
        %1422 = vmatprep.subr.mxu0 0.0
        %1423 = vmatpush1.msra.mxu0 0.0
        %1424 = vmatprep.subr.mxu0 0.0
        %1425 = vmatpush1.msra.mxu0 0.0
        %1426 = vmatprep.subr.mxu0 0.0
        %1427 = vmatpush1.msra.mxu0 0.0
        %1428 = vmatprep.subr.mxu0 0.0
        %1429 = vmatpush1.msra.mxu0 0.0
        %1430 = vmatprep.subr.mxu0 0.0
        %1431 = vmatpush1.msra.mxu0 0.0
        %1432 = vmatprep.subr.mxu0 0.0
        %1433 = vmatpush1.msra.mxu0 0.0
        %1434 = vmatprep.subr.mxu0 0.0
        %1435 = vmatpush1.msra.mxu0 0.0
        %1436 = vmatprep.subr.mxu0 0.0
        %1437 = vmatpush1.msra.mxu0 0.0
        %1438 = vmatprep.subr.mxu0 0.0
        %1439 = vmatpush1.msra.mxu0 0.0
        %1440 = vmatprep.mubr.f32.mxu0 0.0
        %1441 = vmatmul.mubr.f32.gmra.mrb[0].mxu0 %v1374
        %v1442 = vpop.f32.mrb[0].mxu0
        %v1443 = vadd.f32 0.0, %v1442
        %v1444 = vpop.f32.mrb[0].mxu0
        %1445 = vdwg.mxu0
        %1446 = vrot.lane.b32.xlu0 %v860, 48
        %v1447 = vpop.permute.xlu0 %1446
        %v1450 = vsel %vm1017, %v1369, 0
        %1452 = vmatprep.subr.mxu0 0.0
        %1453 = vmatpush1.msra.mxu0 %v1447
        %1454 = vmatprep.subr.mxu0 0.0
        %1455 = vmatpush1.msra.mxu0 0.0
        %1456 = vmatprep.subr.mxu0 0.0
        %1457 = vmatpush1.msra.mxu0 0.0
        %1458 = vmatprep.subr.mxu0 0.0
        %1459 = vmatpush1.msra.mxu0 0.0
        %1460 = vmatprep.subr.mxu0 0.0
        %1461 = vmatpush1.msra.mxu0 0.0
        %1462 = vmatprep.subr.mxu0 0.0
        %1463 = vmatpush1.msra.mxu0 0.0
        %1464 = vmatprep.subr.mxu0 0.0
        %1465 = vmatpush1.msra.mxu0 0.0
        %1466 = vmatprep.subr.mxu0 0.0
        %1467 = vmatpush1.msra.mxu0 0.0
        %1468 = vmatprep.subr.mxu0 0.0
        %1469 = vmatpush1.msra.mxu0 0.0
        %1470 = vmatprep.subr.mxu0 0.0
        %1471 = vmatpush1.msra.mxu0 0.0
        %1472 = vmatprep.subr.mxu0 0.0
        %1473 = vmatpush1.msra.mxu0 0.0
        %1474 = vmatprep.subr.mxu0 0.0
        %1475 = vmatpush1.msra.mxu0 0.0
        %1476 = vmatprep.subr.mxu0 0.0
        %1477 = vmatpush1.msra.mxu0 0.0
        %1478 = vmatprep.subr.mxu0 0.0
        %1479 = vmatpush1.msra.mxu0 0.0
        %1480 = vmatprep.subr.mxu0 0.0
        %1481 = vmatpush1.msra.mxu0 0.0
        %1482 = vmatprep.subr.mxu0 0.0
        %1483 = vmatpush1.msra.mxu0 0.0
        %1484 = vmatprep.subr.mxu0 0.0
        %1485 = vmatpush1.msra.mxu0 0.0
        %1486 = vmatprep.subr.mxu0 0.0
        %1487 = vmatpush1.msra.mxu0 0.0
        %1488 = vmatprep.subr.mxu0 0.0
        %1489 = vmatpush1.msra.mxu0 0.0
        %1490 = vmatprep.subr.mxu0 0.0
        %1491 = vmatpush1.msra.mxu0 0.0
        %1492 = vmatprep.subr.mxu0 0.0
        %1493 = vmatpush1.msra.mxu0 0.0
        %1494 = vmatprep.subr.mxu0 0.0
        %1495 = vmatpush1.msra.mxu0 0.0
        %1496 = vmatprep.subr.mxu0 0.0
        %1497 = vmatpush1.msra.mxu0 0.0
        %1498 = vmatprep.subr.mxu0 0.0
        %1499 = vmatpush1.msra.mxu0 0.0
        %1500 = vmatprep.subr.mxu0 0.0
        %1501 = vmatpush1.msra.mxu0 0.0
        %1502 = vmatprep.subr.mxu0 0.0
        %1503 = vmatpush1.msra.mxu0 0.0
        %1504 = vmatprep.subr.mxu0 0.0
        %1505 = vmatpush1.msra.mxu0 0.0
        %1506 = vmatprep.subr.mxu0 0.0
        %1507 = vmatpush1.msra.mxu0 0.0
        %1508 = vmatprep.subr.mxu0 0.0
        %1509 = vmatpush1.msra.mxu0 0.0
        %1510 = vmatprep.subr.mxu0 0.0
        %1511 = vmatpush1.msra.mxu0 0.0
        %1512 = vmatprep.subr.mxu0 0.0
        %1513 = vmatpush1.msra.mxu0 0.0
        %1514 = vmatprep.subr.mxu0 0.0
        %1515 = vmatpush1.msra.mxu0 0.0
        %1516 = vmatprep.mubr.f32.mxu0 0.0
        %1517 = vmatmul.mubr.f32.gmra.mrb[0].mxu0 %v1450
        %v1518 = vpop.f32.mrb[0].mxu0
        %v1519 = vadd.f32 0.0, %v1518
        %v1520 = vpop.f32.mrb[0].mxu0
        %1521 = vdwg.mxu0
        %v1523 = vsel %vm660, %v1443, 0
        %v1526 = vsel %vm660, %v1519, 0
        %1528 = vmatprep.subr.mxu0 0.0
        %1529 = vmatpush1.msra.mxu0 %v749
        %1530 = vmatprep.subr.mxu0 0.0
        %1531 = vmatpush1.msra.mxu0 %v750
        %1532 = vmatprep.subr.mxu0 0.0
        %1533 = vmatpush1.msra.mxu0 0.0
        %1534 = vmatprep.subr.mxu0 0.0
        %1535 = vmatpush1.msra.mxu0 0.0
        %1536 = vmatprep.subr.mxu0 0.0
        %1537 = vmatpush1.msra.mxu0 0.0
        %1538 = vmatprep.subr.mxu0 0.0
        %1539 = vmatpush1.msra.mxu0 0.0
        %1540 = vmatprep.subr.mxu0 0.0
        %1541 = vmatpush1.msra.mxu0 0.0
        %1542 = vmatprep.subr.mxu0 0.0
        %1543 = vmatpush1.msra.mxu0 0.0
        %1544 = vmatprep.subr.mxu0 0.0
        %1545 = vmatpush1.msra.mxu0 0.0
        %1546 = vmatprep.subr.mxu0 0.0
        %1547 = vmatpush1.msra.mxu0 0.0
        %1548 = vmatprep.subr.mxu0 0.0
        %1549 = vmatpush1.msra.mxu0 0.0
        %1550 = vmatprep.subr.mxu0 0.0
        %1551 = vmatpush1.msra.mxu0 0.0
        %1552 = vmatprep.subr.mxu0 0.0
        %1553 = vmatpush1.msra.mxu0 0.0
        %1554 = vmatprep.subr.mxu0 0.0
        %1555 = vmatpush1.msra.mxu0 0.0
        %1556 = vmatprep.subr.mxu0 0.0
        %1557 = vmatpush1.msra.mxu0 0.0
        %1558 = vmatprep.subr.mxu0 0.0
        %1559 = vmatpush1.msra.mxu0 0.0
        %1560 = vmatprep.subr.mxu0 0.0
        %1561 = vmatpush1.msra.mxu0 0.0
        %1562 = vmatprep.subr.mxu0 0.0
        %1563 = vmatpush1.msra.mxu0 0.0
        %1564 = vmatprep.subr.mxu0 0.0
        %1565 = vmatpush1.msra.mxu0 0.0
        %1566 = vmatprep.subr.mxu0 0.0
        %1567 = vmatpush1.msra.mxu0 0.0
        %1568 = vmatprep.subr.mxu0 0.0
        %1569 = vmatpush1.msra.mxu0 0.0
        %1570 = vmatprep.subr.mxu0 0.0
        %1571 = vmatpush1.msra.mxu0 0.0
        %1572 = vmatprep.subr.mxu0 0.0
        %1573 = vmatpush1.msra.mxu0 0.0
        %1574 = vmatprep.subr.mxu0 0.0
        %1575 = vmatpush1.msra.mxu0 0.0
        %1576 = vmatprep.subr.mxu0 0.0
        %1577 = vmatpush1.msra.mxu0 0.0
        %1578 = vmatprep.subr.mxu0 0.0
        %1579 = vmatpush1.msra.mxu0 0.0
        %1580 = vmatprep.subr.mxu0 0.0
        %1581 = vmatpush1.msra.mxu0 0.0
        %1582 = vmatprep.subr.mxu0 0.0
        %1583 = vmatpush1.msra.mxu0 0.0
        %1584 = vmatprep.subr.mxu0 0.0
        %1585 = vmatpush1.msra.mxu0 0.0
        %1586 = vmatprep.subr.mxu0 0.0
        %1587 = vmatpush1.msra.mxu0 0.0
        %1588 = vmatprep.subr.mxu0 0.0
        %1589 = vmatpush1.msra.mxu0 0.0
        %1590 = vmatprep.subr.mxu0 0.0
        %1591 = vmatpush1.msra.mxu0 0.0
        %1592 = vmatprep.mubr.f32.mxu0 0.0
        %1593 = vmatmul.mubr.f32.gmra.mrb[0].mxu0 %v1523
        %v1594 = vpop.f32.mrb[0].mxu0
        %v1595 = vadd.f32 0.0, %v1594
        %v1596 = vpop.f32.mrb[0].mxu0
        %1597 = vmatprep.mubr.f32.mxu0 0.0
        %1598 = vmatmul.mubr.f32.gmra.mrb[0].mxu0 %v1526
        %v1599 = vpop.f32.mrb[0].mxu0
        %v1600 = vadd.f32 0.0, %v1599
        %v1601 = vpop.f32.mrb[0].mxu0
        %1602 = vdwg.mxu0
        %v1604 = vsel %vm660, %v1113, 0
        %v1607 = vsel %vm660, %v1189, 0
        %1609 = vmatprep.subr.mxu0 0.0
        %1610 = vmatpush1.msra.mxu0 %v747
        %1611 = vmatprep.subr.mxu0 0.0
        %1612 = vmatpush1.msra.mxu0 %v748
        %1613 = vmatprep.subr.mxu0 0.0
        %1614 = vmatpush1.msra.mxu0 0.0
        %1615 = vmatprep.subr.mxu0 0.0
        %1616 = vmatpush1.msra.mxu0 0.0
        %1617 = vmatprep.subr.mxu0 0.0
        %1618 = vmatpush1.msra.mxu0 0.0
        %1619 = vmatprep.subr.mxu0 0.0
        %1620 = vmatpush1.msra.mxu0 0.0
        %1621 = vmatprep.subr.mxu0 0.0
        %1622 = vmatpush1.msra.mxu0 0.0
        %1623 = vmatprep.subr.mxu0 0.0
        %1624 = vmatpush1.msra.mxu0 0.0
        %1625 = vmatprep.subr.mxu0 0.0
        %1626 = vmatpush1.msra.mxu0 0.0
        %1627 = vmatprep.subr.mxu0 0.0
        %1628 = vmatpush1.msra.mxu0 0.0
        %1629 = vmatprep.subr.mxu0 0.0
        %1630 = vmatpush1.msra.mxu0 0.0
        %1631 = vmatprep.subr.mxu0 0.0
        %1632 = vmatpush1.msra.mxu0 0.0
        %1633 = vmatprep.subr.mxu0 0.0
        %1634 = vmatpush1.msra.mxu0 0.0
        %1635 = vmatprep.subr.mxu0 0.0
        %1636 = vmatpush1.msra.mxu0 0.0
        %1637 = vmatprep.subr.mxu0 0.0
        %1638 = vmatpush1.msra.mxu0 0.0
        %1639 = vmatprep.subr.mxu0 0.0
        %1640 = vmatpush1.msra.mxu0 0.0
        %1641 = vmatprep.subr.mxu0 0.0
        %1642 = vmatpush1.msra.mxu0 0.0
        %1643 = vmatprep.subr.mxu0 0.0
        %1644 = vmatpush1.msra.mxu0 0.0
        %1645 = vmatprep.subr.mxu0 0.0
        %1646 = vmatpush1.msra.mxu0 0.0
        %1647 = vmatprep.subr.mxu0 0.0
        %1648 = vmatpush1.msra.mxu0 0.0
        %1649 = vmatprep.subr.mxu0 0.0
        %1650 = vmatpush1.msra.mxu0 0.0
        %1651 = vmatprep.subr.mxu0 0.0
        %1652 = vmatpush1.msra.mxu0 0.0
        %1653 = vmatprep.subr.mxu0 0.0
        %1654 = vmatpush1.msra.mxu0 0.0
        %1655 = vmatprep.subr.mxu0 0.0
        %1656 = vmatpush1.msra.mxu0 0.0
        %1657 = vmatprep.subr.mxu0 0.0
        %1658 = vmatpush1.msra.mxu0 0.0
        %1659 = vmatprep.subr.mxu0 0.0
        %1660 = vmatpush1.msra.mxu0 0.0
        %1661 = vmatprep.subr.mxu0 0.0
        %1662 = vmatpush1.msra.mxu0 0.0
        %1663 = vmatprep.subr.mxu0 0.0
        %1664 = vmatpush1.msra.mxu0 0.0
        %1665 = vmatprep.subr.mxu0 0.0
        %1666 = vmatpush1.msra.mxu0 0.0
        %1667 = vmatprep.subr.mxu0 0.0
        %1668 = vmatpush1.msra.mxu0 0.0
        %1669 = vmatprep.subr.mxu0 0.0
        %1670 = vmatpush1.msra.mxu0 0.0
        %1671 = vmatprep.subr.mxu0 0.0
        %1672 = vmatpush1.msra.mxu0 0.0
        %1673 = vmatprep.mubr.f32.mxu0 0.0
        %1674 = vmatmul.mubr.f32.gmra.mrb[0].mxu0 %v1604
        %v1675 = vpop.f32.mrb[0].mxu0
        %v1676 = vadd.f32 %v1595, %v1675
        %v1677 = vpop.f32.mrb[0].mxu0
        %1678 = vmatprep.mubr.f32.mxu0 0.0
        %1679 = vmatmul.mubr.f32.gmra.mrb[0].mxu0 %v1607
        %v1680 = vpop.f32.mrb[0].mxu0
        %v1681 = vadd.f32 %v1600, %v1680
        %v1682 = vpop.f32.mrb[0].mxu0
        %1683 = vdwg.mxu0
        %v1685 = vlaneseq
        %v1686 = vshrl.u32 %v1685, 7
        %v1687 = vsub.s32 0, %v1686
        %v1688 = vrot.slane %v751, %v1687
        %v1690 = vadd.f32 %v1676, %v1688
        %v1691 = vadd.f32 %v1681, %v1688
        %v1692 = vadd.f32 %v734, %v1690
        %v1693 = vadd.f32 %v739, %v1691
        %v1694 = vsel %vm781, %v1692, 0.0
        %1695 = vadd.xlane.f32.xlu0 %v1694
        %v1696 = vpop.xlane.xlu0 %1695
        %v1697 = vsel %vm781, %v1693, 0.0
        %1698 = vadd.xlane.f32.xlu0 %v1697
        %v1699 = vpop.xlane.xlu0 %1698
        %v1700 = vrcp.pop 32.0
        %v1701 = vmul.f32 %v1696, %v1700
        %v1702 = vmul.f32 %v1699, %v1700
        %v1703 = vsub.f32 %v1692, %v1701
        %v1704 = vsub.f32 %v1693, %v1702
        %v1705 = vmul.f32 %v1703, %v1703
        %v1706 = vmul.f32 %v1704, %v1704
        %v1707 = vsel %vm781, %v1705, 0.0
        %1708 = vadd.xlane.f32.xlu0 %v1707
        %v1709 = vpop.xlane.xlu0 %1708
        %v1710 = vsel %vm781, %v1706, 0.0
        %1711 = vadd.xlane.f32.xlu0 %v1710
        %v1712 = vpop.xlane.xlu0 %1711
        %v1713 = vmul.f32 %v1709, %v1700
        %v1714 = vmul.f32 %v1712, %v1700
        %v1715 = vadd.f32 %v1713, 1e-05
        %v1716 = vadd.f32 %v1714, 1e-05
        %v1717 = vrsqrt.pop %v1715
        %v1718 = vrsqrt.pop %v1716
        %v1719 = vmul.f32 %v1703, %v1717
        %v1720 = vmul.f32 %v1704, %v1718
        %v1721 = vlaneseq
        %v1722 = vshrl.u32 %v1721, 7
        %v1723 = vsub.s32 0, %v1722
        %v1724 = vrot.slane %v774, %v1723
        %v1725 = vmul.f32 %v1719, %v1724
        %v1726 = vmul.f32 %v1720, %v1724
        %v1727 = vlaneseq
        %v1728 = vshrl.u32 %v1727, 7
        %v1729 = vsub.s32 1, %v1728
        %v1730 = vrot.slane %v774, %v1729
        %v1731 = vadd.f32 %v1725, %v1730
        %v1732 = vadd.f32 %v1726, %v1730
        %v1734 = vlaneseq
        %v1735 = vshrl.u32 %v1734, 7
        %v1736 = vsub.s32 0, %v1735
        %v1737 = vrot.slane %v756, %v1736
        %v1740 = vsel %vm781, %v1731, 0
        %v1743 = vsel %vm781, %v1732, 0
        %1745 = vmatprep.subr.mxu0 0.0
        %1746 = vmatpush1.msra.mxu0 %v752
        %1747 = vmatprep.subr.mxu0 0.0
        %1748 = vmatpush1.msra.mxu0 %v753
        %1749 = vmatprep.subr.mxu0 0.0
        %1750 = vmatpush1.msra.mxu0 %v754
        %1751 = vmatprep.subr.mxu0 0.0
        %1752 = vmatpush1.msra.mxu0 %v755
        %1753 = vmatprep.subr.mxu0 0.0
        %1754 = vmatpush1.msra.mxu0 0.0
        %1755 = vmatprep.subr.mxu0 0.0
        %1756 = vmatpush1.msra.mxu0 0.0
        %1757 = vmatprep.subr.mxu0 0.0
        %1758 = vmatpush1.msra.mxu0 0.0
        %1759 = vmatprep.subr.mxu0 0.0
        %1760 = vmatpush1.msra.mxu0 0.0
        %1761 = vmatprep.subr.mxu0 0.0
        %1762 = vmatpush1.msra.mxu0 0.0
        %1763 = vmatprep.subr.mxu0 0.0
        %1764 = vmatpush1.msra.mxu0 0.0
        %1765 = vmatprep.subr.mxu0 0.0
        %1766 = vmatpush1.msra.mxu0 0.0
        %1767 = vmatprep.subr.mxu0 0.0
        %1768 = vmatpush1.msra.mxu0 0.0
        %1769 = vmatprep.subr.mxu0 0.0
        %1770 = vmatpush1.msra.mxu0 0.0
        %1771 = vmatprep.subr.mxu0 0.0
        %1772 = vmatpush1.msra.mxu0 0.0
        %1773 = vmatprep.subr.mxu0 0.0
        %1774 = vmatpush1.msra.mxu0 0.0
        %1775 = vmatprep.subr.mxu0 0.0
        %1776 = vmatpush1.msra.mxu0 0.0
        %1777 = vmatprep.subr.mxu0 0.0
        %1778 = vmatpush1.msra.mxu0 0.0
        %1779 = vmatprep.subr.mxu0 0.0
        %1780 = vmatpush1.msra.mxu0 0.0
        %1781 = vmatprep.subr.mxu0 0.0
        %1782 = vmatpush1.msra.mxu0 0.0
        %1783 = vmatprep.subr.mxu0 0.0
        %1784 = vmatpush1.msra.mxu0 0.0
        %1785 = vmatprep.subr.mxu0 0.0
        %1786 = vmatpush1.msra.mxu0 0.0
        %1787 = vmatprep.subr.mxu0 0.0
        %1788 = vmatpush1.msra.mxu0 0.0
        %1789 = vmatprep.subr.mxu0 0.0
        %1790 = vmatpush1.msra.mxu0 0.0
        %1791 = vmatprep.subr.mxu0 0.0
        %1792 = vmatpush1.msra.mxu0 0.0
        %1793 = vmatprep.subr.mxu0 0.0
        %1794 = vmatpush1.msra.mxu0 0.0
        %1795 = vmatprep.subr.mxu0 0.0
        %1796 = vmatpush1.msra.mxu0 0.0
        %1797 = vmatprep.subr.mxu0 0.0
        %1798 = vmatpush1.msra.mxu0 0.0
        %1799 = vmatprep.subr.mxu0 0.0
        %1800 = vmatpush1.msra.mxu0 0.0
        %1801 = vmatprep.subr.mxu0 0.0
        %1802 = vmatpush1.msra.mxu0 0.0
        %1803 = vmatprep.subr.mxu0 0.0
        %1804 = vmatpush1.msra.mxu0 0.0
        %1805 = vmatprep.subr.mxu0 0.0
        %1806 = vmatpush1.msra.mxu0 0.0
        %1807 = vmatprep.subr.mxu0 0.0
        %1808 = vmatpush1.msra.mxu0 0.0
        %1809 = vmatprep.mubr.f32.mxu0 0.0
        %1810 = vmatmul.mubr.f32.gmra.mrb[0].mxu0 %v1740
        %v1811 = vpop.f32.mrb[0].mxu0
        %v1812 = vadd.f32 %v1737, %v1811
        %v1813 = vpop.f32.mrb[0].mxu0
        %1814 = vmatprep.mubr.f32.mxu0 0.0
        %1815 = vmatmul.mubr.f32.gmra.mrb[0].mxu0 %v1743
        %v1816 = vpop.f32.mrb[0].mxu0
        %v1817 = vadd.f32 %v1737, %v1816
        %v1818 = vpop.f32.mrb[0].mxu0
        %1819 = vdwg.mxu0
        %v1820 = vmax.f32 %v1812, 0.0
        %v1821 = vmax.f32 %v1817, 0.0
        %v1823 = vlaneseq
        %v1824 = vshrl.u32 %v1823, 7
        %v1825 = vsub.s32 0, %v1824
        %v1826 = vrot.slane %v773, %v1825
        %1828 = vmatprep.subr.mxu0 0.0
        %1829 = vmatpush1.msra.mxu0 %v757
        %1830 = vmatprep.subr.mxu0 0.0
        %1831 = vmatpush1.msra.mxu0 %v758
        %1832 = vmatprep.subr.mxu0 0.0
        %1833 = vmatpush1.msra.mxu0 %v759
        %1834 = vmatprep.subr.mxu0 0.0
        %1835 = vmatpush1.msra.mxu0 %v760
        %1836 = vmatprep.subr.mxu0 0.0
        %1837 = vmatpush1.msra.mxu0 %v761
        %1838 = vmatprep.subr.mxu0 0.0
        %1839 = vmatpush1.msra.mxu0 %v762
        %1840 = vmatprep.subr.mxu0 0.0
        %1841 = vmatpush1.msra.mxu0 %v763
        %1842 = vmatprep.subr.mxu0 0.0
        %1843 = vmatpush1.msra.mxu0 %v764
        %1844 = vmatprep.subr.mxu0 0.0
        %1845 = vmatpush1.msra.mxu0 %v765
        %1846 = vmatprep.subr.mxu0 0.0
        %1847 = vmatpush1.msra.mxu0 %v766
        %1848 = vmatprep.subr.mxu0 0.0
        %1849 = vmatpush1.msra.mxu0 %v767
        %1850 = vmatprep.subr.mxu0 0.0
        %1851 = vmatpush1.msra.mxu0 %v768
        %1852 = vmatprep.subr.mxu0 0.0
        %1853 = vmatpush1.msra.mxu0 %v769
        %1854 = vmatprep.subr.mxu0 0.0
        %1855 = vmatpush1.msra.mxu0 %v770
        %1856 = vmatprep.subr.mxu0 0.0
        %1857 = vmatpush1.msra.mxu0 %v771
        %1858 = vmatprep.subr.mxu0 0.0
        %1859 = vmatpush1.msra.mxu0 %v772
        %1860 = vmatprep.subr.mxu0 0.0
        %1861 = vmatpush1.msra.mxu0 0.0
        %1862 = vmatprep.subr.mxu0 0.0
        %1863 = vmatpush1.msra.mxu0 0.0
        %1864 = vmatprep.subr.mxu0 0.0
        %1865 = vmatpush1.msra.mxu0 0.0
        %1866 = vmatprep.subr.mxu0 0.0
        %1867 = vmatpush1.msra.mxu0 0.0
        %1868 = vmatprep.subr.mxu0 0.0
        %1869 = vmatpush1.msra.mxu0 0.0
        %1870 = vmatprep.subr.mxu0 0.0
        %1871 = vmatpush1.msra.mxu0 0.0
        %1872 = vmatprep.subr.mxu0 0.0
        %1873 = vmatpush1.msra.mxu0 0.0
        %1874 = vmatprep.subr.mxu0 0.0
        %1875 = vmatpush1.msra.mxu0 0.0
        %1876 = vmatprep.subr.mxu0 0.0
        %1877 = vmatpush1.msra.mxu0 0.0
        %1878 = vmatprep.subr.mxu0 0.0
        %1879 = vmatpush1.msra.mxu0 0.0
        %1880 = vmatprep.subr.mxu0 0.0
        %1881 = vmatpush1.msra.mxu0 0.0
        %1882 = vmatprep.subr.mxu0 0.0
        %1883 = vmatpush1.msra.mxu0 0.0
        %1884 = vmatprep.subr.mxu0 0.0
        %1885 = vmatpush1.msra.mxu0 0.0
        %1886 = vmatprep.subr.mxu0 0.0
        %1887 = vmatpush1.msra.mxu0 0.0
        %1888 = vmatprep.subr.mxu0 0.0
        %1889 = vmatpush1.msra.mxu0 0.0
        %1890 = vmatprep.subr.mxu0 0.0
        %1891 = vmatpush1.msra.mxu0 0.0
        %1892 = vmatprep.mubr.f32.mxu0 0.0
        %1893 = vmatmul.mubr.f32.gmra.mrb[0].mxu0 %v1820
        %v1894 = vpop.f32.mrb[0].mxu0
        %v1895 = vadd.f32 %v1826, %v1894
        %v1896 = vpop.f32.mrb[0].mxu0
        %1897 = vmatprep.mubr.f32.mxu0 0.0
        %1898 = vmatmul.mubr.f32.gmra.mrb[0].mxu0 %v1821
        %v1899 = vpop.f32.mrb[0].mxu0
        %v1900 = vadd.f32 %v1826, %v1899
        %v1901 = vpop.f32.mrb[0].mxu0
        %1902 = vdwg.mxu0
        %v1903 = vadd.f32 %v1731, %v1895
        %v1904 = vadd.f32 %v1732, %v1900
        %v1905 = vsel %vm781, %v1903, 0.0
        %1906 = vadd.xlane.f32.xlu0 %v1905
        %v1907 = vpop.xlane.xlu0 %1906
        %v1908 = vsel %vm781, %v1904, 0.0
        %1909 = vadd.xlane.f32.xlu0 %v1908
        %v1910 = vpop.xlane.xlu0 %1909
        %v1911 = vmul.f32 %v1907, %v1700
        %v1912 = vmul.f32 %v1910, %v1700
        %v1913 = vsub.f32 %v1903, %v1911
        %v1914 = vsub.f32 %v1904, %v1912
        %v1915 = vmul.f32 %v1913, %v1913
        %v1916 = vmul.f32 %v1914, %v1914
        %v1917 = vsel %vm781, %v1915, 0.0
        %1918 = vadd.xlane.f32.xlu0 %v1917
        %v1919 = vpop.xlane.xlu0 %1918
        %v1920 = vsel %vm781, %v1916, 0.0
        %1921 = vadd.xlane.f32.xlu0 %v1920
        %v1922 = vpop.xlane.xlu0 %1921
        %v1923 = vmul.f32 %v1919, %v1700
        %v1924 = vmul.f32 %v1922, %v1700
        %v1925 = vadd.f32 %v1923, 1e-05
        %v1926 = vadd.f32 %v1924, 1e-05
        %v1927 = vrsqrt.pop %v1925
        %v1928 = vrsqrt.pop %v1926
        %v1929 = vmul.f32 %v1913, %v1927
        %v1930 = vmul.f32 %v1914, %v1928
        %v1931 = vlaneseq
        %v1932 = vshrl.u32 %v1931, 7
        %v1933 = vsub.s32 2, %v1932
        %v1934 = vrot.slane %v774, %v1933
        %v1935 = vmul.f32 %v1929, %v1934
        %v1936 = vmul.f32 %v1930, %v1934
        %v1937 = vlaneseq
        %v1938 = vshrl.u32 %v1937, 7
        %v1939 = vsub.s32 3, %v1938
        %v1940 = vrot.slane %v774, %v1939
        %v1941 = vadd.f32 %v1935, %v1940
        %v1942 = vadd.f32 %v1936, %v1940
        %v1944 = vsel %vm660, %v659, 0
        %1946 = vmatprep.subr.mxu0 0.0
        %1947 = vmatpush1.msra.mxu0 %v1941
        %1948 = vmatprep.subr.mxu0 0.0
        %1949 = vmatpush1.msra.mxu0 %v1942
        %1950 = vmatprep.subr.mxu0 0.0
        %1951 = vmatpush1.msra.mxu0 0.0
        %1952 = vmatprep.subr.mxu0 0.0
        %1953 = vmatpush1.msra.mxu0 0.0
        %1954 = vmatprep.subr.mxu0 0.0
        %1955 = vmatpush1.msra.mxu0 0.0
        %1956 = vmatprep.subr.mxu0 0.0
        %1957 = vmatpush1.msra.mxu0 0.0
        %1958 = vmatprep.subr.mxu0 0.0
        %1959 = vmatpush1.msra.mxu0 0.0
        %1960 = vmatprep.subr.mxu0 0.0
        %1961 = vmatpush1.msra.mxu0 0.0
        %1962 = vmatprep.subr.mxu0 0.0
        %1963 = vmatpush1.msra.mxu0 0.0
        %1964 = vmatprep.subr.mxu0 0.0
        %1965 = vmatpush1.msra.mxu0 0.0
        %1966 = vmatprep.subr.mxu0 0.0
        %1967 = vmatpush1.msra.mxu0 0.0
        %1968 = vmatprep.subr.mxu0 0.0
        %1969 = vmatpush1.msra.mxu0 0.0
        %1970 = vmatprep.subr.mxu0 0.0
        %1971 = vmatpush1.msra.mxu0 0.0
        %1972 = vmatprep.subr.mxu0 0.0
        %1973 = vmatpush1.msra.mxu0 0.0
        %1974 = vmatprep.subr.mxu0 0.0
        %1975 = vmatpush1.msra.mxu0 0.0
        %1976 = vmatprep.subr.mxu0 0.0
        %1977 = vmatpush1.msra.mxu0 0.0
        %1978 = vmatprep.subr.mxu0 0.0
        %1979 = vmatpush1.msra.mxu0 0.0
        %1980 = vmatprep.subr.mxu0 0.0
        %1981 = vmatpush1.msra.mxu0 0.0
        %1982 = vmatprep.subr.mxu0 0.0
        %1983 = vmatpush1.msra.mxu0 0.0
        %1984 = vmatprep.subr.mxu0 0.0
        %1985 = vmatpush1.msra.mxu0 0.0
        %1986 = vmatprep.subr.mxu0 0.0
        %1987 = vmatpush1.msra.mxu0 0.0
        %1988 = vmatprep.subr.mxu0 0.0
        %1989 = vmatpush1.msra.mxu0 0.0
        %1990 = vmatprep.subr.mxu0 0.0
        %1991 = vmatpush1.msra.mxu0 0.0
        %1992 = vmatprep.subr.mxu0 0.0
        %1993 = vmatpush1.msra.mxu0 0.0
        %1994 = vmatprep.subr.mxu0 0.0
        %1995 = vmatpush1.msra.mxu0 0.0
        %1996 = vmatprep.subr.mxu0 0.0
        %1997 = vmatpush1.msra.mxu0 0.0
        %1998 = vmatprep.subr.mxu0 0.0
        %1999 = vmatpush1.msra.mxu0 0.0
        %2000 = vmatprep.subr.mxu0 0.0
        %2001 = vmatpush1.msra.mxu0 0.0
        %2002 = vmatprep.subr.mxu0 0.0
        %2003 = vmatpush1.msra.mxu0 0.0
        %2004 = vmatprep.subr.mxu0 0.0
        %2005 = vmatpush1.msra.mxu0 0.0
        %2006 = vmatprep.subr.mxu0 0.0
        %2007 = vmatpush1.msra.mxu0 0.0
        %2008 = vmatprep.subr.mxu0 0.0
        %2009 = vmatpush1.msra.mxu0 0.0
        %2010 = vmatprep.mubr.f32.mxu0 0.0
        %2011 = vmatmul.mubr.f32.gmra.mrb[0].mxu0 %v1944
        %v2012 = vpop.f32.mrb[0].mxu0
        %v2013 = vadd.f32 0.0, %v2012
        %v2014 = vpop.f32.mrb[0].mxu0
        %2015 = vdwg.mxu0
        %v2016 = vld [vmem:[%s12] sm:$0xff]
        %v2017 = vld [vmem:[%s12 + $0x8] sm:$0xff]
        %v2018 = vld [vmem:[%s12 + $0x10] sm:$0xff]
        %v2019 = vld [vmem:[%s12 + $0x18] sm:$0xff]
        %v2020 = vld [vmem:[%s13] sm:$0x1]
        %v2021 = vld [vmem:[%s14] sm:$0xff]
        %v2022 = vld [vmem:[%s14 + $0x8] sm:$0xff]
        %v2023 = vld [vmem:[%s14 + $0x10] sm:$0xff]
        %v2024 = vld [vmem:[%s14 + $0x18] sm:$0xff]
        %v2025 = vld [vmem:[%s15] sm:$0x1]
        %v2026 = vld [vmem:[%s16] sm:$0xff]
        %v2027 = vld [vmem:[%s16 + $0x8] sm:$0xff]
        %v2028 = vld [vmem:[%s16 + $0x10] sm:$0xff]
        %v2029 = vld [vmem:[%s16 + $0x18] sm:$0xff]
        %v2030 = vld [vmem:[%s17] sm:$0x1]
        %v2031 = vld [vmem:[%s18] sm:$0xff]
        %v2032 = vld [vmem:[%s18 + $0x8] sm:$0xff]
        %v2033 = vld [vmem:[%s18 + $0x10] sm:$0xff]
        %v2034 = vld [vmem:[%s18 + $0x18] sm:$0xff]
        %v2035 = vld [vmem:[%s18 + $0x20] sm:$0xff]
        %v2036 = vld [vmem:[%s18 + $0x28] sm:$0xff]
        %v2037 = vld [vmem:[%s18 + $0x30] sm:$0xff]
        %v2038 = vld [vmem:[%s18 + $0x38] sm:$0xff]
        %v2039 = vld [vmem:[%s18 + $0x40] sm:$0xff]
        %v2040 = vld [vmem:[%s18 + $0x48] sm:$0xff]
        %v2041 = vld [vmem:[%s18 + $0x50] sm:$0xff]
        %v2042 = vld [vmem:[%s18 + $0x58] sm:$0xff]
        %v2043 = vld [vmem:[%s18 + $0x60] sm:$0xff]
        %v2044 = vld [vmem:[%s18 + $0x68] sm:$0xff]
        %v2045 = vld [vmem:[%s18 + $0x70] sm:$0xff]
        %v2046 = vld [vmem:[%s18 + $0x78] sm:$0xff]
        %v2047 = vld [vmem:[%s19] sm:$0x1]
        %v2048 = vld [vmem:[%s20] sm:$0xf]
        %v2050 = vlaneseq
        %v2051 = vshrl.u32 %v2050, 7
        %v2052 = vsub.s32 0, %v2051
        %v2053 = vrot.slane %v2020, %v2052
        %v2056 = vsel %vm781, %v2013, 0
        %2058 = vmatprep.subr.mxu0 0.0
        %2059 = vmatpush1.msra.mxu0 %v2016
        %2060 = vmatprep.subr.mxu0 0.0
        %2061 = vmatpush1.msra.mxu0 %v2017
        %2062 = vmatprep.subr.mxu0 0.0
        %2063 = vmatpush1.msra.mxu0 %v2018
        %2064 = vmatprep.subr.mxu0 0.0
        %2065 = vmatpush1.msra.mxu0 %v2019
        %2066 = vmatprep.subr.mxu0 0.0
        %2067 = vmatpush1.msra.mxu0 0.0
        %2068 = vmatprep.subr.mxu0 0.0
        %2069 = vmatpush1.msra.mxu0 0.0
        %2070 = vmatprep.subr.mxu0 0.0
        %2071 = vmatpush1.msra.mxu0 0.0
        %2072 = vmatprep.subr.mxu0 0.0
        %2073 = vmatpush1.msra.mxu0 0.0
        %2074 = vmatprep.subr.mxu0 0.0
        %2075 = vmatpush1.msra.mxu0 0.0
        %2076 = vmatprep.subr.mxu0 0.0
        %2077 = vmatpush1.msra.mxu0 0.0
        %2078 = vmatprep.subr.mxu0 0.0
        %2079 = vmatpush1.msra.mxu0 0.0
        %2080 = vmatprep.subr.mxu0 0.0
        %2081 = vmatpush1.msra.mxu0 0.0
        %2082 = vmatprep.subr.mxu0 0.0
        %2083 = vmatpush1.msra.mxu0 0.0
        %2084 = vmatprep.subr.mxu0 0.0
        %2085 = vmatpush1.msra.mxu0 0.0
        %2086 = vmatprep.subr.mxu0 0.0
        %2087 = vmatpush1.msra.mxu0 0.0
        %2088 = vmatprep.subr.mxu0 0.0
        %2089 = vmatpush1.msra.mxu0 0.0
        %2090 = vmatprep.subr.mxu0 0.0
        %2091 = vmatpush1.msra.mxu0 0.0
        %2092 = vmatprep.subr.mxu0 0.0
        %2093 = vmatpush1.msra.mxu0 0.0
        %2094 = vmatprep.subr.mxu0 0.0
        %2095 = vmatpush1.msra.mxu0 0.0
        %2096 = vmatprep.subr.mxu0 0.0
        %2097 = vmatpush1.msra.mxu0 0.0
        %2098 = vmatprep.subr.mxu0 0.0
        %2099 = vmatpush1.msra.mxu0 0.0
        %2100 = vmatprep.subr.mxu0 0.0
        %2101 = vmatpush1.msra.mxu0 0.0
        %2102 = vmatprep.subr.mxu0 0.0
        %2103 = vmatpush1.msra.mxu0 0.0
        %2104 = vmatprep.subr.mxu0 0.0
        %2105 = vmatpush1.msra.mxu0 0.0
        %2106 = vmatprep.subr.mxu0 0.0
        %2107 = vmatpush1.msra.mxu0 0.0
        %2108 = vmatprep.subr.mxu0 0.0
        %2109 = vmatpush1.msra.mxu0 0.0
        %2110 = vmatprep.subr.mxu0 0.0
        %2111 = vmatpush1.msra.mxu0 0.0
        %2112 = vmatprep.subr.mxu0 0.0
        %2113 = vmatpush1.msra.mxu0 0.0
        %2114 = vmatprep.subr.mxu0 0.0
        %2115 = vmatpush1.msra.mxu0 0.0
        %2116 = vmatprep.subr.mxu0 0.0
        %2117 = vmatpush1.msra.mxu0 0.0
        %2118 = vmatprep.subr.mxu0 0.0
        %2119 = vmatpush1.msra.mxu0 0.0
        %2120 = vmatprep.subr.mxu0 0.0
        %2121 = vmatpush1.msra.mxu0 0.0
        %2122 = vmatprep.mubr.f32.mxu0 0.0
        %2123 = vmatmul.mubr.f32.gmra.mrb[0].mxu0 %v2056
        %v2124 = vpop.f32.mrb[0].mxu0
        %v2125 = vadd.f32 %v2053, %v2124
        %v2126 = vpop.f32.mrb[0].mxu0
        %2127 = vdwg.mxu0
        %2129 = vrot.lane.b32.xlu0 %v2125, 96
        %v2130 = vpop.permute.xlu0 %2129
        %v2131 = vsel %vm660, %v2125, 0
        %v2133 = vsel %vm660, %v2130, 0
        %2135 = vmatprep.subr.mxu0 0.0
        %2136 = vmatpush1.xpose.msra.mxu0 %v2133
        %2137 = vmatprep.subr.mxu0 0.0
        %2138 = vmatpush1.xpose.msra.mxu0 0.0
        %2139 = vmatprep.subr.mxu0 0.0
        %2140 = vmatpush1.xpose.msra.mxu0 0.0
        %2141 = vmatprep.subr.mxu0 0.0
        %2142 = vmatpush1.xpose.msra.mxu0 0.0
        %2143 = vmatprep.subr.mxu0 0.0
        %2144 = vmatpush1.xpose.msra.mxu0 0.0
        %2145 = vmatprep.subr.mxu0 0.0
        %2146 = vmatpush1.xpose.msra.mxu0 0.0
        %2147 = vmatprep.subr.mxu0 0.0
        %2148 = vmatpush1.xpose.msra.mxu0 0.0
        %2149 = vmatprep.subr.mxu0 0.0
        %2150 = vmatpush1.xpose.msra.mxu0 0.0
        %2151 = vmatprep.subr.mxu0 0.0
        %2152 = vmatpush1.xpose.msra.mxu0 0.0
        %2153 = vmatprep.subr.mxu0 0.0
        %2154 = vmatpush1.xpose.msra.mxu0 0.0
        %2155 = vmatprep.subr.mxu0 0.0
        %2156 = vmatpush1.xpose.msra.mxu0 0.0
        %2157 = vmatprep.subr.mxu0 0.0
        %2158 = vmatpush1.xpose.msra.mxu0 0.0
        %2159 = vmatprep.subr.mxu0 0.0
        %2160 = vmatpush1.xpose.msra.mxu0 0.0
        %2161 = vmatprep.subr.mxu0 0.0
        %2162 = vmatpush1.xpose.msra.mxu0 0.0
        %2163 = vmatprep.subr.mxu0 0.0
        %2164 = vmatpush1.xpose.msra.mxu0 0.0
        %2165 = vmatprep.subr.mxu0 0.0
        %2166 = vmatpush1.xpose.msra.mxu0 0.0
        %2167 = vmatprep.subr.mxu0 0.0
        %2168 = vmatpush1.xpose.msra.mxu0 0.0
        %2169 = vmatprep.subr.mxu0 0.0
        %2170 = vmatpush1.xpose.msra.mxu0 0.0
        %2171 = vmatprep.subr.mxu0 0.0
        %2172 = vmatpush1.xpose.msra.mxu0 0.0
        %2173 = vmatprep.subr.mxu0 0.0
        %2174 = vmatpush1.xpose.msra.mxu0 0.0
        %2175 = vmatprep.subr.mxu0 0.0
        %2176 = vmatpush1.xpose.msra.mxu0 0.0
        %2177 = vmatprep.subr.mxu0 0.0
        %2178 = vmatpush1.xpose.msra.mxu0 0.0
        %2179 = vmatprep.subr.mxu0 0.0
        %2180 = vmatpush1.xpose.msra.mxu0 0.0
        %2181 = vmatprep.subr.mxu0 0.0
        %2182 = vmatpush1.xpose.msra.mxu0 0.0
        %2183 = vmatprep.subr.mxu0 0.0
        %2184 = vmatpush1.xpose.msra.mxu0 0.0
        %2185 = vmatprep.subr.mxu0 0.0
        %2186 = vmatpush1.xpose.msra.mxu0 0.0
        %2187 = vmatprep.subr.mxu0 0.0
        %2188 = vmatpush1.xpose.msra.mxu0 0.0
        %2189 = vmatprep.subr.mxu0 0.0
        %2190 = vmatpush1.xpose.msra.mxu0 0.0
        %2191 = vmatprep.subr.mxu0 0.0
        %2192 = vmatpush1.xpose.msra.mxu0 0.0
        %2193 = vmatprep.subr.mxu0 0.0
        %2194 = vmatpush1.xpose.msra.mxu0 0.0
        %2195 = vmatprep.subr.mxu0 0.0
        %2196 = vmatpush1.xpose.msra.mxu0 0.0
        %2197 = vmatprep.subr.mxu0 0.0
        %2198 = vmatpush1.xpose.msra.mxu0 0.0
        %2199 = vmatprep.mubr.f32.mxu0 0.0
        %2200 = vmatmul.mubr.f32.gmra.mrb[0].mxu0 %v2131
        %v2201 = vpop.f32.mrb[0].mxu0
        %v2202 = vadd.f32 0.0, %v2201
        %v2203 = vpop.f32.mrb[0].mxu0
        %2204 = vdwg.mxu0
        %vm2205 = vcmask 27648
        %v2206 = vsel %vm2205, %v2202, -inf
        %2207 = vmax.xlane.f32.xlu0 %v2206
        %v2208 = vpop.xlane.xlu0 %2207
        %v2209 = vsub.f32 %v2202, %v2208
        %v2210 = vmul.f32 %v2209, 1.442695
        %v2211 = vpow.pop %v2210
        %v2212 = vsel %vm2205, %v2211, 0.0
        %2213 = vadd.xlane.f32.xlu0 %v2212
        %v2214 = vpop.xlane.xlu0 %2213
        %v2215 = vrcp.pop %v2214
        %v2216 = vmul.f32 %v2211, %v2215
        %2217 = vrot.lane.b32.xlu0 %v2125, 64
        %v2218 = vpop.permute.xlu0 %2217
        %vm2219 = vcmask 31744
        %v2221 = vsel %vm2219, %v2216, 0
        %vm2223 = vcmask 1043456
        %v2224 = vsel %vm2223, %v2218, 0
        %2226 = vmatprep.subr.mxu0 0.0
        %2227 = vmatpush1.msra.mxu0 %v2224
        %2228 = vmatprep.subr.mxu0 0.0
        %2229 = vmatpush1.msra.mxu0 0.0
        %2230 = vmatprep.subr.mxu0 0.0
        %2231 = vmatpush1.msra.mxu0 0.0
        %2232 = vmatprep.subr.mxu0 0.0
        %2233 = vmatpush1.msra.mxu0 0.0
        %2234 = vmatprep.subr.mxu0 0.0
        %2235 = vmatpush1.msra.mxu0 0.0
        %2236 = vmatprep.subr.mxu0 0.0
        %2237 = vmatpush1.msra.mxu0 0.0
        %2238 = vmatprep.subr.mxu0 0.0
        %2239 = vmatpush1.msra.mxu0 0.0
        %2240 = vmatprep.subr.mxu0 0.0
        %2241 = vmatpush1.msra.mxu0 0.0
        %2242 = vmatprep.subr.mxu0 0.0
        %2243 = vmatpush1.msra.mxu0 0.0
        %2244 = vmatprep.subr.mxu0 0.0
        %2245 = vmatpush1.msra.mxu0 0.0
        %2246 = vmatprep.subr.mxu0 0.0
        %2247 = vmatpush1.msra.mxu0 0.0
        %2248 = vmatprep.subr.mxu0 0.0
        %2249 = vmatpush1.msra.mxu0 0.0
        %2250 = vmatprep.subr.mxu0 0.0
        %2251 = vmatpush1.msra.mxu0 0.0
        %2252 = vmatprep.subr.mxu0 0.0
        %2253 = vmatpush1.msra.mxu0 0.0
        %2254 = vmatprep.subr.mxu0 0.0
        %2255 = vmatpush1.msra.mxu0 0.0
        %2256 = vmatprep.subr.mxu0 0.0
        %2257 = vmatpush1.msra.mxu0 0.0
        %2258 = vmatprep.subr.mxu0 0.0
        %2259 = vmatpush1.msra.mxu0 0.0
        %2260 = vmatprep.subr.mxu0 0.0
        %2261 = vmatpush1.msra.mxu0 0.0
        %2262 = vmatprep.subr.mxu0 0.0
        %2263 = vmatpush1.msra.mxu0 0.0
        %2264 = vmatprep.subr.mxu0 0.0
        %2265 = vmatpush1.msra.mxu0 0.0
        %2266 = vmatprep.subr.mxu0 0.0
        %2267 = vmatpush1.msra.mxu0 0.0
        %2268 = vmatprep.subr.mxu0 0.0
        %2269 = vmatpush1.msra.mxu0 0.0
        %2270 = vmatprep.subr.mxu0 0.0
        %2271 = vmatpush1.msra.mxu0 0.0
        %2272 = vmatprep.subr.mxu0 0.0
        %2273 = vmatpush1.msra.mxu0 0.0
        %2274 = vmatprep.subr.mxu0 0.0
        %2275 = vmatpush1.msra.mxu0 0.0
        %2276 = vmatprep.subr.mxu0 0.0
        %2277 = vmatpush1.msra.mxu0 0.0
        %2278 = vmatprep.subr.mxu0 0.0
        %2279 = vmatpush1.msra.mxu0 0.0
        %2280 = vmatprep.subr.mxu0 0.0
        %2281 = vmatpush1.msra.mxu0 0.0
        %2282 = vmatprep.subr.mxu0 0.0
        %2283 = vmatpush1.msra.mxu0 0.0
        %2284 = vmatprep.subr.mxu0 0.0
        %2285 = vmatpush1.msra.mxu0 0.0
        %2286 = vmatprep.subr.mxu0 0.0
        %2287 = vmatpush1.msra.mxu0 0.0
        %2288 = vmatprep.subr.mxu0 0.0
        %2289 = vmatpush1.msra.mxu0 0.0
        %2290 = vmatprep.mubr.f32.mxu0 0.0
        %2291 = vmatmul.mubr.f32.gmra.mrb[0].mxu0 %v2221
        %v2292 = vpop.f32.mrb[0].mxu0
        %v2293 = vadd.f32 0.0, %v2292
        %v2294 = vpop.f32.mrb[0].mxu0
        %2295 = vdwg.mxu0
        %2296 = vrot.lane.b32.xlu0 %v2125, 112
        %v2297 = vpop.permute.xlu0 %2296
        %2298 = vrot.lane.b32.xlu0 %v2125, 80
        %v2299 = vpop.permute.xlu0 %2298
        %v2300 = vsel %vm660, %v2297, 0
        %v2302 = vsel %vm660, %v2299, 0
        %2304 = vmatprep.subr.mxu0 0.0
        %2305 = vmatpush1.xpose.msra.mxu0 %v2302
        %2306 = vmatprep.subr.mxu0 0.0
        %2307 = vmatpush1.xpose.msra.mxu0 0.0
        %2308 = vmatprep.subr.mxu0 0.0
        %2309 = vmatpush1.xpose.msra.mxu0 0.0
        %2310 = vmatprep.subr.mxu0 0.0
        %2311 = vmatpush1.xpose.msra.mxu0 0.0
        %2312 = vmatprep.subr.mxu0 0.0
        %2313 = vmatpush1.xpose.msra.mxu0 0.0
        %2314 = vmatprep.subr.mxu0 0.0
        %2315 = vmatpush1.xpose.msra.mxu0 0.0
        %2316 = vmatprep.subr.mxu0 0.0
        %2317 = vmatpush1.xpose.msra.mxu0 0.0
        %2318 = vmatprep.subr.mxu0 0.0
        %2319 = vmatpush1.xpose.msra.mxu0 0.0
        %2320 = vmatprep.subr.mxu0 0.0
        %2321 = vmatpush1.xpose.msra.mxu0 0.0
        %2322 = vmatprep.subr.mxu0 0.0
        %2323 = vmatpush1.xpose.msra.mxu0 0.0
        %2324 = vmatprep.subr.mxu0 0.0
        %2325 = vmatpush1.xpose.msra.mxu0 0.0
        %2326 = vmatprep.subr.mxu0 0.0
        %2327 = vmatpush1.xpose.msra.mxu0 0.0
        %2328 = vmatprep.subr.mxu0 0.0
        %2329 = vmatpush1.xpose.msra.mxu0 0.0
        %2330 = vmatprep.subr.mxu0 0.0
        %2331 = vmatpush1.xpose.msra.mxu0 0.0
        %2332 = vmatprep.subr.mxu0 0.0
        %2333 = vmatpush1.xpose.msra.mxu0 0.0
        %2334 = vmatprep.subr.mxu0 0.0
        %2335 = vmatpush1.xpose.msra.mxu0 0.0
        %2336 = vmatprep.subr.mxu0 0.0
        %2337 = vmatpush1.xpose.msra.mxu0 0.0
        %2338 = vmatprep.subr.mxu0 0.0
        %2339 = vmatpush1.xpose.msra.mxu0 0.0
        %2340 = vmatprep.subr.mxu0 0.0
        %2341 = vmatpush1.xpose.msra.mxu0 0.0
        %2342 = vmatprep.subr.mxu0 0.0
        %2343 = vmatpush1.xpose.msra.mxu0 0.0
        %2344 = vmatprep.subr.mxu0 0.0
        %2345 = vmatpush1.xpose.msra.mxu0 0.0
        %2346 = vmatprep.subr.mxu0 0.0
        %2347 = vmatpush1.xpose.msra.mxu0 0.0
        %2348 = vmatprep.subr.mxu0 0.0
        %2349 = vmatpush1.xpose.msra.mxu0 0.0
        %2350 = vmatprep.subr.mxu0 0.0
        %2351 = vmatpush1.xpose.msra.mxu0 0.0
        %2352 = vmatprep.subr.mxu0 0.0
        %2353 = vmatpush1.xpose.msra.mxu0 0.0
        %2354 = vmatprep.subr.mxu0 0.0
        %2355 = vmatpush1.xpose.msra.mxu0 0.0
        %2356 = vmatprep.subr.mxu0 0.0
        %2357 = vmatpush1.xpose.msra.mxu0 0.0
        %2358 = vmatprep.subr.mxu0 0.0
        %2359 = vmatpush1.xpose.msra.mxu0 0.0
        %2360 = vmatprep.subr.mxu0 0.0
        %2361 = vmatpush1.xpose.msra.mxu0 0.0
        %2362 = vmatprep.subr.mxu0 0.0
        %2363 = vmatpush1.xpose.msra.mxu0 0.0
        %2364 = vmatprep.subr.mxu0 0.0
        %2365 = vmatpush1.xpose.msra.mxu0 0.0
        %2366 = vmatprep.subr.mxu0 0.0
        %2367 = vmatpush1.xpose.msra.mxu0 0.0
        %2368 = vmatprep.mubr.f32.mxu0 0.0
        %2369 = vmatmul.mubr.f32.gmra.mrb[0].mxu0 %v2300
        %v2370 = vpop.f32.mrb[0].mxu0
        %v2371 = vadd.f32 0.0, %v2370
        %v2372 = vpop.f32.mrb[0].mxu0
        %2373 = vdwg.mxu0
        %v2374 = vsel %vm2205, %v2371, -inf
        %2375 = vmax.xlane.f32.xlu0 %v2374
        %v2376 = vpop.xlane.xlu0 %2375
        %v2377 = vsub.f32 %v2371, %v2376
        %v2378 = vmul.f32 %v2377, 1.442695
        %v2379 = vpow.pop %v2378
        %v2380 = vsel %vm2205, %v2379, 0.0
        %2381 = vadd.xlane.f32.xlu0 %v2380
        %v2382 = vpop.xlane.xlu0 %2381
        %v2383 = vrcp.pop %v2382
        %v2384 = vmul.f32 %v2379, %v2383
        %2385 = vrot.lane.b32.xlu0 %v2125, 48
        %v2386 = vpop.permute.xlu0 %2385
        %v2388 = vsel %vm2219, %v2384, 0
        %v2390 = vsel %vm2223, %v2386, 0
        %2392 = vmatprep.subr.mxu0 0.0
        %2393 = vmatpush1.msra.mxu0 %v2390
        %2394 = vmatprep.subr.mxu0 0.0
        %2395 = vmatpush1.msra.mxu0 0.0
        %2396 = vmatprep.subr.mxu0 0.0
        %2397 = vmatpush1.msra.mxu0 0.0
        %2398 = vmatprep.subr.mxu0 0.0
        %2399 = vmatpush1.msra.mxu0 0.0
        %2400 = vmatprep.subr.mxu0 0.0
        %2401 = vmatpush1.msra.mxu0 0.0
        %2402 = vmatprep.subr.mxu0 0.0
        %2403 = vmatpush1.msra.mxu0 0.0
        %2404 = vmatprep.subr.mxu0 0.0
        %2405 = vmatpush1.msra.mxu0 0.0
        %2406 = vmatprep.subr.mxu0 0.0
        %2407 = vmatpush1.msra.mxu0 0.0
        %2408 = vmatprep.subr.mxu0 0.0
        %2409 = vmatpush1.msra.mxu0 0.0
        %2410 = vmatprep.subr.mxu0 0.0
        %2411 = vmatpush1.msra.mxu0 0.0
        %2412 = vmatprep.subr.mxu0 0.0
        %2413 = vmatpush1.msra.mxu0 0.0
        %2414 = vmatprep.subr.mxu0 0.0
        %2415 = vmatpush1.msra.mxu0 0.0
        %2416 = vmatprep.subr.mxu0 0.0
        %2417 = vmatpush1.msra.mxu0 0.0
        %2418 = vmatprep.subr.mxu0 0.0
        %2419 = vmatpush1.msra.mxu0 0.0
        %2420 = vmatprep.subr.mxu0 0.0
        %2421 = vmatpush1.msra.mxu0 0.0
        %2422 = vmatprep.subr.mxu0 0.0
        %2423 = vmatpush1.msra.mxu0 0.0
        %2424 = vmatprep.subr.mxu0 0.0
        %2425 = vmatpush1.msra.mxu0 0.0
        %2426 = vmatprep.subr.mxu0 0.0
        %2427 = vmatpush1.msra.mxu0 0.0
        %2428 = vmatprep.subr.mxu0 0.0
        %2429 = vmatpush1.msra.mxu0 0.0
        %2430 = vmatprep.subr.mxu0 0.0
        %2431 = vmatpush1.msra.mxu0 0.0
        %2432 = vmatprep.subr.mxu0 0.0
        %2433 = vmatpush1.msra.mxu0 0.0
        %2434 = vmatprep.subr.mxu0 0.0
        %2435 = vmatpush1.msra.mxu0 0.0
        %2436 = vmatprep.subr.mxu0 0.0
        %2437 = vmatpush1.msra.mxu0 0.0
        %2438 = vmatprep.subr.mxu0 0.0
        %2439 = vmatpush1.msra.mxu0 0.0
        %2440 = vmatprep.subr.mxu0 0.0
        %2441 = vmatpush1.msra.mxu0 0.0
        %2442 = vmatprep.subr.mxu0 0.0
        %2443 = vmatpush1.msra.mxu0 0.0
        %2444 = vmatprep.subr.mxu0 0.0
        %2445 = vmatpush1.msra.mxu0 0.0
        %2446 = vmatprep.subr.mxu0 0.0
        %2447 = vmatpush1.msra.mxu0 0.0
        %2448 = vmatprep.subr.mxu0 0.0
        %2449 = vmatpush1.msra.mxu0 0.0
        %2450 = vmatprep.subr.mxu0 0.0
        %2451 = vmatpush1.msra.mxu0 0.0
        %2452 = vmatprep.subr.mxu0 0.0
        %2453 = vmatpush1.msra.mxu0 0.0
        %2454 = vmatprep.subr.mxu0 0.0
        %2455 = vmatpush1.msra.mxu0 0.0
        %2456 = vmatprep.mubr.f32.mxu0 0.0
        %2457 = vmatmul.mubr.f32.gmra.mrb[0].mxu0 %v2388
        %v2458 = vpop.f32.mrb[0].mxu0
        %v2459 = vadd.f32 0.0, %v2458
        %v2460 = vpop.f32.mrb[0].mxu0
        %2461 = vdwg.mxu0
        %v2463 = vsel %vm660, %v2459, 0
        %2465 = vmatprep.subr.mxu0 0.0
        %2466 = vmatpush1.msra.mxu0 %v2023
        %2467 = vmatprep.subr.mxu0 0.0
        %2468 = vmatpush1.msra.mxu0 %v2024
        %2469 = vmatprep.subr.mxu0 0.0
        %2470 = vmatpush1.msra.mxu0 0.0
        %2471 = vmatprep.subr.mxu0 0.0
        %2472 = vmatpush1.msra.mxu0 0.0
        %2473 = vmatprep.subr.mxu0 0.0
        %2474 = vmatpush1.msra.mxu0 0.0
        %2475 = vmatprep.subr.mxu0 0.0
        %2476 = vmatpush1.msra.mxu0 0.0
        %2477 = vmatprep.subr.mxu0 0.0
        %2478 = vmatpush1.msra.mxu0 0.0
        %2479 = vmatprep.subr.mxu0 0.0
        %2480 = vmatpush1.msra.mxu0 0.0
        %2481 = vmatprep.subr.mxu0 0.0
        %2482 = vmatpush1.msra.mxu0 0.0
        %2483 = vmatprep.subr.mxu0 0.0
        %2484 = vmatpush1.msra.mxu0 0.0
        %2485 = vmatprep.subr.mxu0 0.0
        %2486 = vmatpush1.msra.mxu0 0.0
        %2487 = vmatprep.subr.mxu0 0.0
        %2488 = vmatpush1.msra.mxu0 0.0
        %2489 = vmatprep.subr.mxu0 0.0
        %2490 = vmatpush1.msra.mxu0 0.0
        %2491 = vmatprep.subr.mxu0 0.0
        %2492 = vmatpush1.msra.mxu0 0.0
        %2493 = vmatprep.subr.mxu0 0.0
        %2494 = vmatpush1.msra.mxu0 0.0
        %2495 = vmatprep.subr.mxu0 0.0
        %2496 = vmatpush1.msra.mxu0 0.0
        %2497 = vmatprep.subr.mxu0 0.0
        %2498 = vmatpush1.msra.mxu0 0.0
        %2499 = vmatprep.subr.mxu0 0.0
        %2500 = vmatpush1.msra.mxu0 0.0
        %2501 = vmatprep.subr.mxu0 0.0
        %2502 = vmatpush1.msra.mxu0 0.0
        %2503 = vmatprep.subr.mxu0 0.0
        %2504 = vmatpush1.msra.mxu0 0.0
        %2505 = vmatprep.subr.mxu0 0.0
        %2506 = vmatpush1.msra.mxu0 0.0
        %2507 = vmatprep.subr.mxu0 0.0
        %2508 = vmatpush1.msra.mxu0 0.0
        %2509 = vmatprep.subr.mxu0 0.0
        %2510 = vmatpush1.msra.mxu0 0.0
        %2511 = vmatprep.subr.mxu0 0.0
        %2512 = vmatpush1.msra.mxu0 0.0
        %2513 = vmatprep.subr.mxu0 0.0
        %2514 = vmatpush1.msra.mxu0 0.0
        %2515 = vmatprep.subr.mxu0 0.0
        %2516 = vmatpush1.msra.mxu0 0.0
        %2517 = vmatprep.subr.mxu0 0.0
        %2518 = vmatpush1.msra.mxu0 0.0
        %2519 = vmatprep.subr.mxu0 0.0
        %2520 = vmatpush1.msra.mxu0 0.0
        %2521 = vmatprep.subr.mxu0 0.0
        %2522 = vmatpush1.msra.mxu0 0.0
        %2523 = vmatprep.subr.mxu0 0.0
        %2524 = vmatpush1.msra.mxu0 0.0
        %2525 = vmatprep.subr.mxu0 0.0
        %2526 = vmatpush1.msra.mxu0 0.0
        %2527 = vmatprep.subr.mxu0 0.0
        %2528 = vmatpush1.msra.mxu0 0.0
        %2529 = vmatprep.mubr.f32.mxu0 0.0
        %2530 = vmatmul.mubr.f32.gmra.mrb[0].mxu0 %v2463
        %v2531 = vpop.f32.mrb[0].mxu0
        %v2532 = vadd.f32 0.0, %v2531
        %v2533 = vpop.f32.mrb[0].mxu0
        %2534 = vdwg.mxu0
        %v2536 = vsel %vm660, %v2293, 0
        %2538 = vmatprep.subr.mxu0 0.0
        %2539 = vmatpush1.msra.mxu0 %v2021
        %2540 = vmatprep.subr.mxu0 0.0
        %2541 = vmatpush1.msra.mxu0 %v2022
        %2542 = vmatprep.subr.mxu0 0.0
        %2543 = vmatpush1.msra.mxu0 0.0
        %2544 = vmatprep.subr.mxu0 0.0
        %2545 = vmatpush1.msra.mxu0 0.0
        %2546 = vmatprep.subr.mxu0 0.0
        %2547 = vmatpush1.msra.mxu0 0.0
        %2548 = vmatprep.subr.mxu0 0.0
        %2549 = vmatpush1.msra.mxu0 0.0
        %2550 = vmatprep.subr.mxu0 0.0
        %2551 = vmatpush1.msra.mxu0 0.0
        %2552 = vmatprep.subr.mxu0 0.0
        %2553 = vmatpush1.msra.mxu0 0.0
        %2554 = vmatprep.subr.mxu0 0.0
        %2555 = vmatpush1.msra.mxu0 0.0
        %2556 = vmatprep.subr.mxu0 0.0
        %2557 = vmatpush1.msra.mxu0 0.0
        %2558 = vmatprep.subr.mxu0 0.0
        %2559 = vmatpush1.msra.mxu0 0.0
        %2560 = vmatprep.subr.mxu0 0.0
        %2561 = vmatpush1.msra.mxu0 0.0
        %2562 = vmatprep.subr.mxu0 0.0
        %2563 = vmatpush1.msra.mxu0 0.0
        %2564 = vmatprep.subr.mxu0 0.0
        %2565 = vmatpush1.msra.mxu0 0.0
        %2566 = vmatprep.subr.mxu0 0.0
        %2567 = vmatpush1.msra.mxu0 0.0
        %2568 = vmatprep.subr.mxu0 0.0
        %2569 = vmatpush1.msra.mxu0 0.0
        %2570 = vmatprep.subr.mxu0 0.0
        %2571 = vmatpush1.msra.mxu0 0.0
        %2572 = vmatprep.subr.mxu0 0.0
        %2573 = vmatpush1.msra.mxu0 0.0
        %2574 = vmatprep.subr.mxu0 0.0
        %2575 = vmatpush1.msra.mxu0 0.0
        %2576 = vmatprep.subr.mxu0 0.0
        %2577 = vmatpush1.msra.mxu0 0.0
        %2578 = vmatprep.subr.mxu0 0.0
        %2579 = vmatpush1.msra.mxu0 0.0
        %2580 = vmatprep.subr.mxu0 0.0
        %2581 = vmatpush1.msra.mxu0 0.0
        %2582 = vmatprep.subr.mxu0 0.0
        %2583 = vmatpush1.msra.mxu0 0.0
        %2584 = vmatprep.subr.mxu0 0.0
        %2585 = vmatpush1.msra.mxu0 0.0
        %2586 = vmatprep.subr.mxu0 0.0
        %2587 = vmatpush1.msra.mxu0 0.0
        %2588 = vmatprep.subr.mxu0 0.0
        %2589 = vmatpush1.msra.mxu0 0.0
        %2590 = vmatprep.subr.mxu0 0.0
        %2591 = vmatpush1.msra.mxu0 0.0
        %2592 = vmatprep.subr.mxu0 0.0
        %2593 = vmatpush1.msra.mxu0 0.0
        %2594 = vmatprep.subr.mxu0 0.0
        %2595 = vmatpush1.msra.mxu0 0.0
        %2596 = vmatprep.subr.mxu0 0.0
        %2597 = vmatpush1.msra.mxu0 0.0
        %2598 = vmatprep.subr.mxu0 0.0
        %2599 = vmatpush1.msra.mxu0 0.0
        %2600 = vmatprep.subr.mxu0 0.0
        %2601 = vmatpush1.msra.mxu0 0.0
        %2602 = vmatprep.mubr.f32.mxu0 0.0
        %2603 = vmatmul.mubr.f32.gmra.mrb[0].mxu0 %v2536
        %v2604 = vpop.f32.mrb[0].mxu0
        %v2605 = vadd.f32 %v2532, %v2604
        %v2606 = vpop.f32.mrb[0].mxu0
        %2607 = vdwg.mxu0
        %v2609 = vlaneseq
        %v2610 = vshrl.u32 %v2609, 7
        %v2611 = vsub.s32 0, %v2610
        %v2612 = vrot.slane %v2025, %v2611
        %v2614 = vadd.f32 %v2605, %v2612
        %v2615 = vadd.f32 %v2013, %v2614
        %vm2616 = vcmask 257024
        %v2617 = vsel %vm2616, %v2615, 0.0
        %2618 = vadd.xlane.f32.xlu0 %v2617
        %v2619 = vpop.xlane.xlu0 %2618
        %v2620 = vmul.f32 %v2619, %v1700
        %v2621 = vsub.f32 %v2615, %v2620
        %v2622 = vmul.f32 %v2621, %v2621
        %v2623 = vsel %vm2616, %v2622, 0.0
        %2624 = vadd.xlane.f32.xlu0 %v2623
        %v2625 = vpop.xlane.xlu0 %2624
        %v2626 = vmul.f32 %v2625, %v1700
        %v2627 = vadd.f32 %v2626, 1e-05
        %v2628 = vrsqrt.pop %v2627
        %v2629 = vmul.f32 %v2621, %v2628
        %v2630 = vlaneseq
        %v2631 = vshrl.u32 %v2630, 7
        %v2632 = vsub.s32 0, %v2631
        %v2633 = vrot.slane %v2048, %v2632
        %v2634 = vmul.f32 %v2629, %v2633
        %v2635 = vlaneseq
        %v2636 = vshrl.u32 %v2635, 7
        %v2637 = vsub.s32 1, %v2636
        %v2638 = vrot.slane %v2048, %v2637
        %v2639 = vadd.f32 %v2634, %v2638
        %v2641 = vlaneseq
        %v2642 = vshrl.u32 %v2641, 7
        %v2643 = vsub.s32 0, %v2642
        %v2644 = vrot.slane %v2030, %v2643
        %v2647 = vsel %vm781, %v2639, 0
        %2649 = vmatprep.subr.mxu0 0.0
        %2650 = vmatpush1.msra.mxu0 %v2026
        %2651 = vmatprep.subr.mxu0 0.0
        %2652 = vmatpush1.msra.mxu0 %v2027
        %2653 = vmatprep.subr.mxu0 0.0
        %2654 = vmatpush1.msra.mxu0 %v2028
        %2655 = vmatprep.subr.mxu0 0.0
        %2656 = vmatpush1.msra.mxu0 %v2029
        %2657 = vmatprep.subr.mxu0 0.0
        %2658 = vmatpush1.msra.mxu0 0.0
        %2659 = vmatprep.subr.mxu0 0.0
        %2660 = vmatpush1.msra.mxu0 0.0
        %2661 = vmatprep.subr.mxu0 0.0
        %2662 = vmatpush1.msra.mxu0 0.0
        %2663 = vmatprep.subr.mxu0 0.0
        %2664 = vmatpush1.msra.mxu0 0.0
        %2665 = vmatprep.subr.mxu0 0.0
        %2666 = vmatpush1.msra.mxu0 0.0
        %2667 = vmatprep.subr.mxu0 0.0
        %2668 = vmatpush1.msra.mxu0 0.0
        %2669 = vmatprep.subr.mxu0 0.0
        %2670 = vmatpush1.msra.mxu0 0.0
        %2671 = vmatprep.subr.mxu0 0.0
        %2672 = vmatpush1.msra.mxu0 0.0
        %2673 = vmatprep.subr.mxu0 0.0
        %2674 = vmatpush1.msra.mxu0 0.0
        %2675 = vmatprep.subr.mxu0 0.0
        %2676 = vmatpush1.msra.mxu0 0.0
        %2677 = vmatprep.subr.mxu0 0.0
        %2678 = vmatpush1.msra.mxu0 0.0
        %2679 = vmatprep.subr.mxu0 0.0
        %2680 = vmatpush1.msra.mxu0 0.0
        %2681 = vmatprep.subr.mxu0 0.0
        %2682 = vmatpush1.msra.mxu0 0.0
        %2683 = vmatprep.subr.mxu0 0.0
        %2684 = vmatpush1.msra.mxu0 0.0
        %2685 = vmatprep.subr.mxu0 0.0
        %2686 = vmatpush1.msra.mxu0 0.0
        %2687 = vmatprep.subr.mxu0 0.0
        %2688 = vmatpush1.msra.mxu0 0.0
        %2689 = vmatprep.subr.mxu0 0.0
        %2690 = vmatpush1.msra.mxu0 0.0
        %2691 = vmatprep.subr.mxu0 0.0
        %2692 = vmatpush1.msra.mxu0 0.0
        %2693 = vmatprep.subr.mxu0 0.0
        %2694 = vmatpush1.msra.mxu0 0.0
        %2695 = vmatprep.subr.mxu0 0.0
        %2696 = vmatpush1.msra.mxu0 0.0
        %2697 = vmatprep.subr.mxu0 0.0
        %2698 = vmatpush1.msra.mxu0 0.0
        %2699 = vmatprep.subr.mxu0 0.0
        %2700 = vmatpush1.msra.mxu0 0.0
        %2701 = vmatprep.subr.mxu0 0.0
        %2702 = vmatpush1.msra.mxu0 0.0
        %2703 = vmatprep.subr.mxu0 0.0
        %2704 = vmatpush1.msra.mxu0 0.0
        %2705 = vmatprep.subr.mxu0 0.0
        %2706 = vmatpush1.msra.mxu0 0.0
        %2707 = vmatprep.subr.mxu0 0.0
        %2708 = vmatpush1.msra.mxu0 0.0
        %2709 = vmatprep.subr.mxu0 0.0
        %2710 = vmatpush1.msra.mxu0 0.0
        %2711 = vmatprep.subr.mxu0 0.0
        %2712 = vmatpush1.msra.mxu0 0.0
        %2713 = vmatprep.mubr.f32.mxu0 0.0
        %2714 = vmatmul.mubr.f32.gmra.mrb[0].mxu0 %v2647
        %v2715 = vpop.f32.mrb[0].mxu0
        %v2716 = vadd.f32 %v2644, %v2715
        %v2717 = vpop.f32.mrb[0].mxu0
        %2718 = vdwg.mxu0
        %v2719 = vmax.f32 %v2716, 0.0
        %v2721 = vlaneseq
        %v2722 = vshrl.u32 %v2721, 7
        %v2723 = vsub.s32 0, %v2722
        %v2724 = vrot.slane %v2047, %v2723
        %2726 = vmatprep.subr.mxu0 0.0
        %2727 = vmatpush1.msra.mxu0 %v2031
        %2728 = vmatprep.subr.mxu0 0.0
        %2729 = vmatpush1.msra.mxu0 %v2032
        %2730 = vmatprep.subr.mxu0 0.0
        %2731 = vmatpush1.msra.mxu0 %v2033
        %2732 = vmatprep.subr.mxu0 0.0
        %2733 = vmatpush1.msra.mxu0 %v2034
        %2734 = vmatprep.subr.mxu0 0.0
        %2735 = vmatpush1.msra.mxu0 %v2035
        %2736 = vmatprep.subr.mxu0 0.0
        %2737 = vmatpush1.msra.mxu0 %v2036
        %2738 = vmatprep.subr.mxu0 0.0
        %2739 = vmatpush1.msra.mxu0 %v2037
        %2740 = vmatprep.subr.mxu0 0.0
        %2741 = vmatpush1.msra.mxu0 %v2038
        %2742 = vmatprep.subr.mxu0 0.0
        %2743 = vmatpush1.msra.mxu0 %v2039
        %2744 = vmatprep.subr.mxu0 0.0
        %2745 = vmatpush1.msra.mxu0 %v2040
        %2746 = vmatprep.subr.mxu0 0.0
        %2747 = vmatpush1.msra.mxu0 %v2041
        %2748 = vmatprep.subr.mxu0 0.0
        %2749 = vmatpush1.msra.mxu0 %v2042
        %2750 = vmatprep.subr.mxu0 0.0
        %2751 = vmatpush1.msra.mxu0 %v2043
        %2752 = vmatprep.subr.mxu0 0.0
        %2753 = vmatpush1.msra.mxu0 %v2044
        %2754 = vmatprep.subr.mxu0 0.0
        %2755 = vmatpush1.msra.mxu0 %v2045
        %2756 = vmatprep.subr.mxu0 0.0
        %2757 = vmatpush1.msra.mxu0 %v2046
        %2758 = vmatprep.subr.mxu0 0.0
        %2759 = vmatpush1.msra.mxu0 0.0
        %2760 = vmatprep.subr.mxu0 0.0
        %2761 = vmatpush1.msra.mxu0 0.0
        %2762 = vmatprep.subr.mxu0 0.0
        %2763 = vmatpush1.msra.mxu0 0.0
        %2764 = vmatprep.subr.mxu0 0.0
        %2765 = vmatpush1.msra.mxu0 0.0
        %2766 = vmatprep.subr.mxu0 0.0
        %2767 = vmatpush1.msra.mxu0 0.0
        %2768 = vmatprep.subr.mxu0 0.0
        %2769 = vmatpush1.msra.mxu0 0.0
        %2770 = vmatprep.subr.mxu0 0.0
        %2771 = vmatpush1.msra.mxu0 0.0
        %2772 = vmatprep.subr.mxu0 0.0
        %2773 = vmatpush1.msra.mxu0 0.0
        %2774 = vmatprep.subr.mxu0 0.0
        %2775 = vmatpush1.msra.mxu0 0.0
        %2776 = vmatprep.subr.mxu0 0.0
        %2777 = vmatpush1.msra.mxu0 0.0
        %2778 = vmatprep.subr.mxu0 0.0
        %2779 = vmatpush1.msra.mxu0 0.0
        %2780 = vmatprep.subr.mxu0 0.0
        %2781 = vmatpush1.msra.mxu0 0.0
        %2782 = vmatprep.subr.mxu0 0.0
        %2783 = vmatpush1.msra.mxu0 0.0
        %2784 = vmatprep.subr.mxu0 0.0
        %2785 = vmatpush1.msra.mxu0 0.0
        %2786 = vmatprep.subr.mxu0 0.0
        %2787 = vmatpush1.msra.mxu0 0.0
        %2788 = vmatprep.subr.mxu0 0.0
        %2789 = vmatpush1.msra.mxu0 0.0
        %2790 = vmatprep.mubr.f32.mxu0 0.0
        %2791 = vmatmul.mubr.f32.gmra.mrb[0].mxu0 %v2719
        %v2792 = vpop.f32.mrb[0].mxu0
        %v2793 = vadd.f32 %v2724, %v2792
        %v2794 = vpop.f32.mrb[0].mxu0
        %2795 = vdwg.mxu0
        %v2796 = vadd.f32 %v2639, %v2793
        %v2797 = vsel %vm2616, %v2796, 0.0
        %2798 = vadd.xlane.f32.xlu0 %v2797
        %v2799 = vpop.xlane.xlu0 %2798
        %v2800 = vmul.f32 %v2799, %v1700
        %v2801 = vsub.f32 %v2796, %v2800
        %v2802 = vmul.f32 %v2801, %v2801
        %v2803 = vsel %vm2616, %v2802, 0.0
        %2804 = vadd.xlane.f32.xlu0 %v2803
        %v2805 = vpop.xlane.xlu0 %2804
        %v2806 = vmul.f32 %v2805, %v1700
        %v2807 = vadd.f32 %v2806, 1e-05
        %v2808 = vrsqrt.pop %v2807
        %v2809 = vmul.f32 %v2801, %v2808
        %v2810 = vlaneseq
        %v2811 = vshrl.u32 %v2810, 7
        %v2812 = vsub.s32 2, %v2811
        %v2813 = vrot.slane %v2048, %v2812
        %v2814 = vmul.f32 %v2809, %v2813
        %v2815 = vlaneseq
        %v2816 = vshrl.u32 %v2815, 7
        %v2817 = vsub.s32 3, %v2816
        %v2818 = vrot.slane %v2048, %v2817
        %v2819 = vadd.f32 %v2814, %v2818
        %2820 = vst.msk [vmem:[%s649] sm:$0xf] %vm2616, %v2819
        %s2821 = sand.u32 %s489, 1
        %s2822 = scalar_lea.sflag [#allocation3], %s2821
        %s2823 = sand.u32 %s489, 1
        %s2824 = smul.addr %s2823, 4
        %s2825 = scalar_lea.vmem [#allocation2], %s2824
        // Predicated region
        $region105: #{tpu_custom_call.1} parent=103 // pred_check
          %p2826 = pneg %p499
        $region106: #{tpu_custom_call.1} parent=103 // pred_check_branch
          %2828 = sbr.rel (%p2826) target = $region108
        $region107: #{tpu_custom_call.1} parent=103 // pred_region
          %s2830 = ssub.s32 64, 64
          %2831 = vsyncadd %s2822, %s2830
          %s2832 = smul.addr %s35, 64
          %s2833 = scalar_lea.hbm %s21, %s2832
          %s2835 = sshll.u32 %s2825, 4
          %s2836 = int_to_ptr.vmem [resolvable:$true] %s2835
          %2838 = dma.vmem_to_hbm [thread:$0]  %s2836, 64, %s2833, %s2822
        $region108: #{tpu_custom_call.1} parent=103 // pred_fallthru
          _
      $region104: #{tpu_custom_call.1} parent=5 // pred_fallthru
        _
      %p2839 = scmp.le.s32.totalorder 2, %s30
      // Predicated region
      $region109: #{tpu_custom_call.1} parent=5 // pred_check
        %p2840 = pneg %p2839
      $region110: #{tpu_custom_call.1} parent=5 // pred_check_branch
        %2842 = sbr.rel (%p2840) target = $region112
      $region111: #{tpu_custom_call.1} parent=5 // pred_region
        %s2843 = ssub.s32 %s30, 2
        // Predicated region
        $region113: #{tpu_custom_call.1} parent=111 // pred_check
          %p2844 = pneg %p505
        $region114: #{tpu_custom_call.1} parent=111 // pred_check_branch
          %2846 = sbr.rel (%p2844) target = $region116
        $region115: #{tpu_custom_call.1} parent=111 // pred_region
          %s2847 = sand.u32 %s490, 1
          %s2848 = scalar_lea.sflag [#allocation3], %s2847
          %s2849 = sand.u32 %s490, 1
          %s2850 = smul.addr %s2849, 4
          %s2851 = scalar_lea.vmem [#allocation2], %s2850
          %2852 = dma.done %s2848, 64
        $region116: #{tpu_custom_call.1} parent=111 // pred_fallthru
          _
      $region112: #{tpu_custom_call.1} parent=5 // pred_fallthru
        _
    $region6: #{tpu_custom_call.1} parent=1 // loop_footer
      %s34 = sadd.s32 1, %s30
    $region7: #{tpu_custom_call.1} parent=1 // loop_footer_branch
      %29 = sbr.rel target = $region3
    $region8: #{tpu_custom_call.1} parent=1 // loop_exit
      _
    %2853 = vsyncpa [#allocation3], 1
    %s2854 = scalar_lea.sflag [#allocation3], 1
    %2855 = vsyncpa %s2854, 1

</llo_original>
